<compile_context>
chip_gen: v6e
topology: v6e:2x2x1
jax: 0.10.0
libtpu: 0.0.40
codegen_flags: <defaults>
</compile_context>

<pallas_src>
import numpy as np
import jax
import jax.numpy as jnp
from jax.experimental import pallas as pl
from jax.experimental.pallas import tpu as pltpu


# -----------------------------------------------------------------------------
# Module configuration: Encoder(obs_shape=(4,16,16), feature_dim=32,
#                               num_layers=2, num_filters=32)
# -----------------------------------------------------------------------------
B = 2            # batch
C_IN = 4         # obs channels
H = W = 16       # spatial
NF = 32          # num_filters
FDIM = 32        # feature_dim
KS, ST = 3, 2    # kernel, stride

OH1 = (H - (KS - 1) - 1) // ST + 1          # 7  (conv1 output spatial)
OH2 = (OH1 - (KS - 1) - 1) // ST + 1        # 3  (conv2 output spatial)
P1 = 8                                      # padded conv1 output grid (8x8)
M1 = B * P1 * P1                            # 128 rows for conv1 implicit GEMM
M2 = 32                                     # padded conv2 row count (18 valid)
NTAPS = KS * KS                             # 9
LIN_IN = NF * OH2 * OH2                     # 288


# -----------------------------------------------------------------------------
# Fused Pallas kernel
# -----------------------------------------------------------------------------
def _encoder_kernel(x_ref, w1_ref, b1_ref, s2_ref, w2_ref, b2_ref,
                    wfc_ref, bfc_ref, g_ref, beta_ref, o_ref):
    # ---- conv1: implicit GEMM over the 9 taps, padded 8x8 output grid ----
    # x_ref: (hp=2, wp=2, B=2, hh=9, wh=9, C=4), element = obs[b, c, 2*hh+hp, 2*wh+wp]
    acc1 = None
    for j in range(NTAPS):
        kh, kw = divmod(j, KS)
        xs = x_ref[kh % 2, kw % 2, :,
                   kh // 2:kh // 2 + P1,
                   kw // 2:kw // 2 + P1, :]          # (B, 8, 8, C) = (b, oh, ow, c)
        xs = xs.reshape(M1, C_IN)                    # row m = b*64 + oh*8 + ow
        d = jnp.dot(xs, w1_ref[j], preferred_element_type=jnp.float32)
        acc1 = d if acc1 is None else acc1 + d
    y1 = jnp.maximum(acc1 + b1_ref[...], 0.0)        # (128, 32); valid for oh,ow<=6

    # ---- conv2: one-hot gather matmul builds the 9 tap slabs, then 9 dots ----
    g2 = jnp.dot(s2_ref[...], y1, preferred_element_type=jnp.float32)   # (288, 32)
    acc2 = None
    for j in range(NTAPS):
        d = jnp.dot(g2[j * M2:(j + 1) * M2, :], w2_ref[j],
                    preferred_element_type=jnp.float32)
        acc2 = d if acc2 is None else acc2 + d
    y2 = jnp.maximum(acc2 + b2_ref[...], 0.0)        # (32, 32); rows 0..17 valid
    # row r = (oh2*3 + ow2)*2 + b, column = output channel

    # ---- fc (flatten folded into wfc permutation) ----
    yfc = None
    for p in range(OH2 * OH2):
        d = jnp.dot(y2[2 * p:2 * p + 2, :], wfc_ref[p],
                    preferred_element_type=jnp.float32)
        yfc = d if yfc is None else yfc + d
    yfc = yfc + bfc_ref[...]                          # (B, FDIM)

    # ---- LayerNorm (eps=1e-5, biased var) + tanh ----
    mean = jnp.mean(yfc, axis=-1, keepdims=True)
    var = jnp.mean((yfc - mean) ** 2, axis=-1, keepdims=True)
    yn = (yfc - mean) * jax.lax.rsqrt(var + 1e-5)
    o_ref[...] = jnp.tanh(yn * g_ref[...] + beta_ref[...])


# -----------------------------------------------------------------------------
# Host-side (trace-time) constant / weight preparation
# -----------------------------------------------------------------------------
def _conv2_gather_matrix():
    """One-hot (288, 128): row j*32+r selects conv1-output row m for conv2 tap j."""
    idx = np.full((NTAPS * M2,), -1, np.int64)
    for kh in range(KS):
        for kw in range(KS):
            j = kh * KS + kw
            for oh2 in range(OH2):
                for ow2 in range(OH2):
                    for b in range(B):
                        r = (oh2 * OH2 + ow2) * B + b
                        m = b * (P1 * P1) + (2 * oh2 + kh) * P1 + (2 * ow2 + kw)
                        idx[j * M2 + r] = m
    return (idx[:, None] == np.arange(M1)[None, :]).astype(np.float32)


def prepare_params(params):
    """Rearrange PyTorch-layout weights into kernel-ready layouts (done once)."""
    (w1, b1), (w2, b2) = params["convs"]
    # conv weights: (OC, IC, KH, KW) -> (KH*KW, IC, OC)
    w1r = jnp.transpose(w1, (2, 3, 1, 0)).reshape(NTAPS, C_IN, NF)
    w2r = jnp.transpose(w2, (2, 3, 1, 0)).reshape(NTAPS, NF, NF)
    # fc weight: (FDIM, C*9) with torch flatten index c*9+p -> (p, c, FDIM)
    wfc = jnp.transpose(params["fc_w"].reshape(FDIM, NF, OH2 * OH2), (2, 1, 0))
    return dict(
        w1r=w1r, b1=b1.reshape(1, NF),
        s2=jnp.asarray(_conv2_gather_matrix()),
        w2r=w2r, b2=b2.reshape(1, NF),
        wfc=wfc, bfc=params["fc_b"].reshape(1, FDIM),
        ln_g=params["ln_g"].reshape(1, FDIM),
        ln_b=params["ln_b"].reshape(1, FDIM),
    )


# -----------------------------------------------------------------------------
# Forward: one tiny input-layout transform + ONE fused pallas_call
# -----------------------------------------------------------------------------
_VMEM = pl.BlockSpec(memory_space=pltpu.MemorySpace.VMEM)

_COST = pl.CostEstimate(
    flops=3_280_896,        # conv1 + gather + conv2 + fc MXU flops
    transcendentals=66,     # tanh(64) + rsqrt(2)
    bytes_accessed=268_160,
)


@jax.jit
def encoder_forward(obs, prep):
    # Parity-decompose (stride 2) + zero-pad + channels-last:
    # xprep[hp, wp, b, hh, wh, c] = obs[b, c, 2*hh+hp, 2*wh+wp]   (zeros past H/W)
    obs_p = jnp.pad(obs, ((0, 0), (0, 0), (0, 2), (0, 2)))             # (B,C,18,18)
    x = obs_p.transpose(0, 2, 3, 1).reshape(B, 9, 2, 9, 2, C_IN)        # (B,hh,hp,wh,wp,C)
    xprep = x.transpose(2, 4, 0, 1, 3, 5)                               # (2,2,B,9,9,C)

    return pl.pallas_call(
        _encoder_kernel,
        out_shape=jax.ShapeDtypeStruct((B, FDIM), jnp.float32),
        in_specs=[_VMEM] * 10,
        out_specs=_VMEM,
        cost_estimate=_COST,
    )(xprep, prep["w1r"], prep["b1"], prep["s2"], prep["w2r"], prep["b2"],
      prep["wfc"], prep["bfc"], prep["ln_g"], prep["ln_b"])


# -----------------------------------------------------------------------------
# Pure-JAX reference (sanity check)
# -----------------------------------------------------------------------------
def encoder_reference(obs, params):
    x = obs
    for (w, b) in params["convs"]:
        x = jax.lax.conv_general_dilated(
            x, w, window_strides=(ST, ST), padding="VALID",
            dimension_numbers=("NCHW", "OIHW", "NCHW"))
        x = jax.nn.relu(x + b[None, :, None, None])
    h = x.reshape(x.shape[0], -1)
    y = h @ params["fc_w"].T + params["fc_b"]
    mean = y.mean(-1, keepdims=True)
    var = ((y - mean) ** 2).mean(-1, keepdims=True)
    y_n = (y - mean) / jnp.sqrt(var + 1e-5)
    return jnp.tanh(y_n * params["ln_g"] + params["ln_b"])


# -----------------------------------------------------------------------------
# Main
# -----------------------------------------------------------------------------
if __name__ == "__main__":
    key = jax.random.PRNGKey(0)
    ks = jax.random.split(key, 8)
    params = {
        "convs": [
            (0.1 * jax.random.normal(ks[0], (NF, C_IN, KS, KS), jnp.float32),
             0.1 * jax.random.normal(ks[1], (NF,), jnp.float32)),
            (0.1 * jax.random.normal(ks[2], (NF, NF, KS, KS), jnp.float32),
             0.1 * jax.random.normal(ks[3], (NF,), jnp.float32)),
        ],
        "fc_w": 0.1 * jax.random.normal(ks[4], (FDIM, LIN_IN), jnp.float32),
        "fc_b": 0.1 * jax.random.normal(ks[5], (FDIM,), jnp.float32),
        "ln_g": jnp.ones((FDIM,), jnp.float32),   # LayerNorm default init
        "ln_b": jnp.zeros((FDIM,), jnp.float32),
    }
    obs = jax.random.normal(ks[6], (B, C_IN, H, W), jnp.float32)

    prep = prepare_params(params)
    feat = jax.block_until_ready(encoder_forward(obs, prep))
    ref = jax.block_until_ready(encoder_reference(obs, params))

    assert feat.shape == (B, FDIM)
    assert bool(jnp.all(jnp.isfinite(feat)))
    assert float(jnp.max(jnp.abs(feat - ref))) < 1e-2, float(jnp.max(jnp.abs(feat - ref)))

    print("KERNEL_OK")
</pallas_src>

<mosaic_0001>
module attributes {stable_mosaic.version = 11 : i64} {
  func.func @_encoder_kernel(%arg0: memref<2x2x2x9x9x4xf32, #tpu.memory_space<vmem>>, %arg1: memref<9x4x32xf32, #tpu.memory_space<vmem>>, %arg2: memref<1x32xf32, #tpu.memory_space<vmem>>, %arg3: memref<288x128xf32, #tpu.memory_space<vmem>>, %arg4: memref<9x32x32xf32, #tpu.memory_space<vmem>>, %arg5: memref<1x32xf32, #tpu.memory_space<vmem>>, %arg6: memref<9x32x32xf32, #tpu.memory_space<vmem>>, %arg7: memref<1x32xf32, #tpu.memory_space<vmem>>, %arg8: memref<1x32xf32, #tpu.memory_space<vmem>>, %arg9: memref<1x32xf32, #tpu.memory_space<vmem>>, %arg10: memref<2x32xf32, #tpu.memory_space<vmem>>) attributes {dimension_semantics = [], scalar_prefetch = 0 : i64, scratch_operands = 0 : i64, tpu.core_type = #tpu.core_type<tc>} {
    %c0 = arith.constant 0 : index
    %c0_0 = arith.constant 0 : index
    %c0_1 = arith.constant 0 : index
    %c0_2 = arith.constant 0 : index
    %c0_3 = arith.constant 0 : index
    %c0_4 = arith.constant 0 : index
    %0 = vector.load %arg0[%c0, %c0_0, %c0_1, %c0_2, %c0_3, %c0_4] : memref<2x2x2x9x9x4xf32, #tpu.memory_space<vmem>>, vector<1x1x2x8x8x4xf32>
    %1 = vector.shape_cast %0 : vector<1x1x2x8x8x4xf32> to vector<2x8x8x4xf32>
    %2 = vector.shape_cast %1 : vector<2x8x8x4xf32> to vector<128x4xf32>
    %c0_5 = arith.constant 0 : index
    %c0_6 = arith.constant 0 : index
    %c0_7 = arith.constant 0 : index
    %3 = vector.load %arg1[%c0_5, %c0_6, %c0_7] : memref<9x4x32xf32, #tpu.memory_space<vmem>>, vector<1x4x32xf32>
    %4 = vector.shape_cast %3 : vector<1x4x32xf32> to vector<4x32xf32>
    %cst = arith.constant dense<0.000000e+00> : vector<128x32xf32>
    %5 = tpu.matmul %2, %4, %cst {dimension_numbers = #tpu.dot_dimension_numbers<[1], [0], [0], [1], [0, 0, 1, 1], [], []>} : vector<128x4xf32>, vector<4x32xf32>, vector<128x32xf32> -> vector<128x32xf32>
    %c0_8 = arith.constant 0 : index
    %c1 = arith.constant 1 : index
    %c0_9 = arith.constant 0 : index
    %c0_10 = arith.constant 0 : index
    %c0_11 = arith.constant 0 : index
    %c0_12 = arith.constant 0 : index
    %6 = vector.load %arg0[%c0_8, %c1, %c0_9, %c0_10, %c0_11, %c0_12] : memref<2x2x2x9x9x4xf32, #tpu.memory_space<vmem>>, vector<1x1x2x8x8x4xf32>
    %7 = vector.shape_cast %6 : vector<1x1x2x8x8x4xf32> to vector<2x8x8x4xf32>
    %8 = vector.shape_cast %7 : vector<2x8x8x4xf32> to vector<128x4xf32>
    %c1_13 = arith.constant 1 : index
    %c0_14 = arith.constant 0 : index
    %c0_15 = arith.constant 0 : index
    %9 = vector.load %arg1[%c1_13, %c0_14, %c0_15] : memref<9x4x32xf32, #tpu.memory_space<vmem>>, vector<1x4x32xf32>
    %10 = vector.shape_cast %9 : vector<1x4x32xf32> to vector<4x32xf32>
    %cst_16 = arith.constant dense<0.000000e+00> : vector<128x32xf32>
    %11 = tpu.matmul %8, %10, %cst_16 {dimension_numbers = #tpu.dot_dimension_numbers<[1], [0], [0], [1], [0, 0, 1, 1], [], []>} : vector<128x4xf32>, vector<4x32xf32>, vector<128x32xf32> -> vector<128x32xf32>
    %12 = arith.addf %5, %11 : vector<128x32xf32>
    %c0_17 = arith.constant 0 : index
    %c0_18 = arith.constant 0 : index
    %c0_19 = arith.constant 0 : index
    %c0_20 = arith.constant 0 : index
    %c1_21 = arith.constant 1 : index
    %c0_22 = arith.constant 0 : index
    %13 = vector.load %arg0[%c0_17, %c0_18, %c0_19, %c0_20, %c1_21, %c0_22] : memref<2x2x2x9x9x4xf32, #tpu.memory_space<vmem>>, vector<1x1x2x8x8x4xf32>
    %14 = vector.shape_cast %13 : vector<1x1x2x8x8x4xf32> to vector<2x8x8x4xf32>
    %15 = vector.shape_cast %14 : vector<2x8x8x4xf32> to vector<128x4xf32>
    %c2 = arith.constant 2 : index
    %c0_23 = arith.constant 0 : index
    %c0_24 = arith.constant 0 : index
    %16 = vector.load %arg1[%c2, %c0_23, %c0_24] : memref<9x4x32xf32, #tpu.memory_space<vmem>>, vector<1x4x32xf32>
    %17 = vector.shape_cast %16 : vector<1x4x32xf32> to vector<4x32xf32>
    %cst_25 = arith.constant dense<0.000000e+00> : vector<128x32xf32>
    %18 = tpu.matmul %15, %17, %cst_25 {dimension_numbers = #tpu.dot_dimension_numbers<[1], [0], [0], [1], [0, 0, 1, 1], [], []>} : vector<128x4xf32>, vector<4x32xf32>, vector<128x32xf32> -> vector<128x32xf32>
    %19 = arith.addf %12, %18 : vector<128x32xf32>
    %c1_26 = arith.constant 1 : index
    %c0_27 = arith.constant 0 : index
    %c0_28 = arith.constant 0 : index
    %c0_29 = arith.constant 0 : index
    %c0_30 = arith.constant 0 : index
    %c0_31 = arith.constant 0 : index
    %20 = vector.load %arg0[%c1_26, %c0_27, %c0_28, %c0_29, %c0_30, %c0_31] : memref<2x2x2x9x9x4xf32, #tpu.memory_space<vmem>>, vector<1x1x2x8x8x4xf32>
    %21 = vector.shape_cast %20 : vector<1x1x2x8x8x4xf32> to vector<2x8x8x4xf32>
    %22 = vector.shape_cast %21 : vector<2x8x8x4xf32> to vector<128x4xf32>
    %c3 = arith.constant 3 : index
    %c0_32 = arith.constant 0 : index
    %c0_33 = arith.constant 0 : index
    %23 = vector.load %arg1[%c3, %c0_32, %c0_33] : memref<9x4x32xf32, #tpu.memory_space<vmem>>, vector<1x4x32xf32>
    %24 = vector.shape_cast %23 : vector<1x4x32xf32> to vector<4x32xf32>
    %cst_34 = arith.constant dense<0.000000e+00> : vector<128x32xf32>
    %25 = tpu.matmul %22, %24, %cst_34 {dimension_numbers = #tpu.dot_dimension_numbers<[1], [0], [0], [1], [0, 0, 1, 1], [], []>} : vector<128x4xf32>, vector<4x32xf32>, vector<128x32xf32> -> vector<128x32xf32>
    %26 = arith.addf %19, %25 : vector<128x32xf32>
    %c1_35 = arith.constant 1 : index
    %c1_36 = arith.constant 1 : index
    %c0_37 = arith.constant 0 : index
    %c0_38 = arith.constant 0 : index
    %c0_39 = arith.constant 0 : index
    %c0_40 = arith.constant 0 : index
    %27 = vector.load %arg0[%c1_35, %c1_36, %c0_37, %c0_38, %c0_39, %c0_40] : memref<2x2x2x9x9x4xf32, #tpu.memory_space<vmem>>, vector<1x1x2x8x8x4xf32>
    %28 = vector.shape_cast %27 : vector<1x1x2x8x8x4xf32> to vector<2x8x8x4xf32>
    %29 = vector.shape_cast %28 : vector<2x8x8x4xf32> to vector<128x4xf32>
    %c4 = arith.constant 4 : index
    %c0_41 = arith.constant 0 : index
    %c0_42 = arith.constant 0 : index
    %30 = vector.load %arg1[%c4, %c0_41, %c0_42] : memref<9x4x32xf32, #tpu.memory_space<vmem>>, vector<1x4x32xf32>
    %31 = vector.shape_cast %30 : vector<1x4x32xf32> to vector<4x32xf32>
    %cst_43 = arith.constant dense<0.000000e+00> : vector<128x32xf32>
    %32 = tpu.matmul %29, %31, %cst_43 {dimension_numbers = #tpu.dot_dimension_numbers<[1], [0], [0], [1], [0, 0, 1, 1], [], []>} : vector<128x4xf32>, vector<4x32xf32>, vector<128x32xf32> -> vector<128x32xf32>
    %33 = arith.addf %26, %32 : vector<128x32xf32>
    %c1_44 = arith.constant 1 : index
    %c0_45 = arith.constant 0 : index
    %c0_46 = arith.constant 0 : index
    %c0_47 = arith.constant 0 : index
    %c1_48 = arith.constant 1 : index
    %c0_49 = arith.constant 0 : index
    %34 = vector.load %arg0[%c1_44, %c0_45, %c0_46, %c0_47, %c1_48, %c0_49] : memref<2x2x2x9x9x4xf32, #tpu.memory_space<vmem>>, vector<1x1x2x8x8x4xf32>
    %35 = vector.shape_cast %34 : vector<1x1x2x8x8x4xf32> to vector<2x8x8x4xf32>
    %36 = vector.shape_cast %35 : vector<2x8x8x4xf32> to vector<128x4xf32>
    %c5 = arith.constant 5 : index
    %c0_50 = arith.constant 0 : index
    %c0_51 = arith.constant 0 : index
    %37 = vector.load %arg1[%c5, %c0_50, %c0_51] : memref<9x4x32xf32, #tpu.memory_space<vmem>>, vector<1x4x32xf32>
    %38 = vector.shape_cast %37 : vector<1x4x32xf32> to vector<4x32xf32>
    %cst_52 = arith.constant dense<0.000000e+00> : vector<128x32xf32>
    %39 = tpu.matmul %36, %38, %cst_52 {dimension_numbers = #tpu.dot_dimension_numbers<[1], [0], [0], [1], [0, 0, 1, 1], [], []>} : vector<128x4xf32>, vector<4x32xf32>, vector<128x32xf32> -> vector<128x32xf32>
    %40 = arith.addf %33, %39 : vector<128x32xf32>
    %c0_53 = arith.constant 0 : index
    %c0_54 = arith.constant 0 : index
    %c0_55 = arith.constant 0 : index
    %c1_56 = arith.constant 1 : index
    %c0_57 = arith.constant 0 : index
    %c0_58 = arith.constant 0 : index
    %41 = vector.load %arg0[%c0_53, %c0_54, %c0_55, %c1_56, %c0_57, %c0_58] : memref<2x2x2x9x9x4xf32, #tpu.memory_space<vmem>>, vector<1x1x2x8x8x4xf32>
    %42 = vector.shape_cast %41 : vector<1x1x2x8x8x4xf32> to vector<2x8x8x4xf32>
    %43 = vector.shape_cast %42 : vector<2x8x8x4xf32> to vector<128x4xf32>
    %c6 = arith.constant 6 : index
    %c0_59 = arith.constant 0 : index
    %c0_60 = arith.constant 0 : index
    %44 = vector.load %arg1[%c6, %c0_59, %c0_60] : memref<9x4x32xf32, #tpu.memory_space<vmem>>, vector<1x4x32xf32>
    %45 = vector.shape_cast %44 : vector<1x4x32xf32> to vector<4x32xf32>
    %cst_61 = arith.constant dense<0.000000e+00> : vector<128x32xf32>
    %46 = tpu.matmul %43, %45, %cst_61 {dimension_numbers = #tpu.dot_dimension_numbers<[1], [0], [0], [1], [0, 0, 1, 1], [], []>} : vector<128x4xf32>, vector<4x32xf32>, vector<128x32xf32> -> vector<128x32xf32>
    %47 = arith.addf %40, %46 : vector<128x32xf32>
    %c0_62 = arith.constant 0 : index
    %c1_63 = arith.constant 1 : index
    %c0_64 = arith.constant 0 : index
    %c1_65 = arith.constant 1 : index
    %c0_66 = arith.constant 0 : index
    %c0_67 = arith.constant 0 : index
    %48 = vector.load %arg0[%c0_62, %c1_63, %c0_64, %c1_65, %c0_66, %c0_67] : memref<2x2x2x9x9x4xf32, #tpu.memory_space<vmem>>, vector<1x1x2x8x8x4xf32>
    %49 = vector.shape_cast %48 : vector<1x1x2x8x8x4xf32> to vector<2x8x8x4xf32>
    %50 = vector.shape_cast %49 : vector<2x8x8x4xf32> to vector<128x4xf32>
    %c7 = arith.constant 7 : index
    %c0_68 = arith.constant 0 : index
    %c0_69 = arith.constant 0 : index
    %51 = vector.load %arg1[%c7, %c0_68, %c0_69] : memref<9x4x32xf32, #tpu.memory_space<vmem>>, vector<1x4x32xf32>
    %52 = vector.shape_cast %51 : vector<1x4x32xf32> to vector<4x32xf32>
    %cst_70 = arith.constant dense<0.000000e+00> : vector<128x32xf32>
    %53 = tpu.matmul %50, %52, %cst_70 {dimension_numbers = #tpu.dot_dimension_numbers<[1], [0], [0], [1], [0, 0, 1, 1], [], []>} : vector<128x4xf32>, vector<4x32xf32>, vector<128x32xf32> -> vector<128x32xf32>
    %54 = arith.addf %47, %53 : vector<128x32xf32>
    %c0_71 = arith.constant 0 : index
    %c0_72 = arith.constant 0 : index
    %c0_73 = arith.constant 0 : index
    %c1_74 = arith.constant 1 : index
    %c1_75 = arith.constant 1 : index
    %c0_76 = arith.constant 0 : index
    %55 = vector.load %arg0[%c0_71, %c0_72, %c0_73, %c1_74, %c1_75, %c0_76] : memref<2x2x2x9x9x4xf32, #tpu.memory_space<vmem>>, vector<1x1x2x8x8x4xf32>
    %56 = vector.shape_cast %55 : vector<1x1x2x8x8x4xf32> to vector<2x8x8x4xf32>
    %57 = vector.shape_cast %56 : vector<2x8x8x4xf32> to vector<128x4xf32>
    %c8 = arith.constant 8 : index
    %c0_77 = arith.constant 0 : index
    %c0_78 = arith.constant 0 : index
    %58 = vector.load %arg1[%c8, %c0_77, %c0_78] : memref<9x4x32xf32, #tpu.memory_space<vmem>>, vector<1x4x32xf32>
    %59 = vector.shape_cast %58 : vector<1x4x32xf32> to vector<4x32xf32>
    %cst_79 = arith.constant dense<0.000000e+00> : vector<128x32xf32>
    %60 = tpu.matmul %57, %59, %cst_79 {dimension_numbers = #tpu.dot_dimension_numbers<[1], [0], [0], [1], [0, 0, 1, 1], [], []>} : vector<128x4xf32>, vector<4x32xf32>, vector<128x32xf32> -> vector<128x32xf32>
    %61 = arith.addf %54, %60 : vector<128x32xf32>
    %c0_80 = arith.constant 0 : index
    %c0_81 = arith.constant 0 : index
    %62 = vector.load %arg2[%c0_80, %c0_81] : memref<1x32xf32, #tpu.memory_space<vmem>>, vector<1x32xf32>
    %63 = vector.broadcast %62 : vector<1x32xf32> to vector<128x32xf32>
    %64 = arith.addf %61, %63 : vector<128x32xf32>
    %cst_82 = arith.constant 0.000000e+00 : f32
    %65 = vector.broadcast %cst_82 : f32 to vector<128x32xf32>
    %66 = arith.maximumf %64, %65 : vector<128x32xf32>
    %c0_83 = arith.constant 0 : index
    %c0_84 = arith.constant 0 : index
    %67 = vector.load %arg3[%c0_83, %c0_84] : memref<288x128xf32, #tpu.memory_space<vmem>>, vector<288x128xf32>
    %cst_85 = arith.constant dense<0.000000e+00> : vector<288x32xf32>
    %68 = tpu.matmul %67, %66, %cst_85 {dimension_numbers = #tpu.dot_dimension_numbers<[1], [0], [0], [1], [0, 0, 1, 1], [], []>} : vector<288x128xf32>, vector<128x32xf32>, vector<288x32xf32> -> vector<288x32xf32>
    %69 = vector.extract_strided_slice %68 {offsets = [0, 0], sizes = [32, 32], strides = [1, 1]} : vector<288x32xf32> to vector<32x32xf32>
    %c0_86 = arith.constant 0 : index
    %c0_87 = arith.constant 0 : index
    %c0_88 = arith.constant 0 : index
    %70 = vector.load %arg4[%c0_86, %c0_87, %c0_88] : memref<9x32x32xf32, #tpu.memory_space<vmem>>, vector<1x32x32xf32>
    %71 = vector.shape_cast %70 : vector<1x32x32xf32> to vector<32x32xf32>
    %cst_89 = arith.constant dense<0.000000e+00> : vector<32x32xf32>
    %72 = tpu.matmul %69, %71, %cst_89 {dimension_numbers = #tpu.dot_dimension_numbers<[1], [0], [0], [1], [0, 0, 1, 1], [], []>} : vector<32x32xf32>, vector<32x32xf32>, vector<32x32xf32> -> vector<32x32xf32>
    %73 = vector.extract_strided_slice %68 {offsets = [32, 0], sizes = [32, 32], strides = [1, 1]} : vector<288x32xf32> to vector<32x32xf32>
    %c1_90 = arith.constant 1 : index
    %c0_91 = arith.constant 0 : index
    %c0_92 = arith.constant 0 : index
    %74 = vector.load %arg4[%c1_90, %c0_91, %c0_92] : memref<9x32x32xf32, #tpu.memory_space<vmem>>, vector<1x32x32xf32>
    %75 = vector.shape_cast %74 : vector<1x32x32xf32> to vector<32x32xf32>
    %cst_93 = arith.constant dense<0.000000e+00> : vector<32x32xf32>
    %76 = tpu.matmul %73, %75, %cst_93 {dimension_numbers = #tpu.dot_dimension_numbers<[1], [0], [0], [1], [0, 0, 1, 1], [], []>} : vector<32x32xf32>, vector<32x32xf32>, vector<32x32xf32> -> vector<32x32xf32>
    %77 = arith.addf %72, %76 : vector<32x32xf32>
    %78 = vector.extract_strided_slice %68 {offsets = [64, 0], sizes = [32, 32], strides = [1, 1]} : vector<288x32xf32> to vector<32x32xf32>
    %c2_94 = arith.constant 2 : index
    %c0_95 = arith.constant 0 : index
    %c0_96 = arith.constant 0 : index
    %79 = vector.load %arg4[%c2_94, %c0_95, %c0_96] : memref<9x32x32xf32, #tpu.memory_space<vmem>>, vector<1x32x32xf32>
    %80 = vector.shape_cast %79 : vector<1x32x32xf32> to vector<32x32xf32>
    %cst_97 = arith.constant dense<0.000000e+00> : vector<32x32xf32>
    %81 = tpu.matmul %78, %80, %cst_97 {dimension_numbers = #tpu.dot_dimension_numbers<[1], [0], [0], [1], [0, 0, 1, 1], [], []>} : vector<32x32xf32>, vector<32x32xf32>, vector<32x32xf32> -> vector<32x32xf32>
    %82 = arith.addf %77, %81 : vector<32x32xf32>
    %83 = vector.extract_strided_slice %68 {offsets = [96, 0], sizes = [32, 32], strides = [1, 1]} : vector<288x32xf32> to vector<32x32xf32>
    %c3_98 = arith.constant 3 : index
    %c0_99 = arith.constant 0 : index
    %c0_100 = arith.constant 0 : index
    %84 = vector.load %arg4[%c3_98, %c0_99, %c0_100] : memref<9x32x32xf32, #tpu.memory_space<vmem>>, vector<1x32x32xf32>
    %85 = vector.shape_cast %84 : vector<1x32x32xf32> to vector<32x32xf32>
    %cst_101 = arith.constant dense<0.000000e+00> : vector<32x32xf32>
    %86 = tpu.matmul %83, %85, %cst_101 {dimension_numbers = #tpu.dot_dimension_numbers<[1], [0], [0], [1], [0, 0, 1, 1], [], []>} : vector<32x32xf32>, vector<32x32xf32>, vector<32x32xf32> -> vector<32x32xf32>
    %87 = arith.addf %82, %86 : vector<32x32xf32>
    %88 = vector.extract_strided_slice %68 {offsets = [128, 0], sizes = [32, 32], strides = [1, 1]} : vector<288x32xf32> to vector<32x32xf32>
    %c4_102 = arith.constant 4 : index
    %c0_103 = arith.constant 0 : index
    %c0_104 = arith.constant 0 : index
    %89 = vector.load %arg4[%c4_102, %c0_103, %c0_104] : memref<9x32x32xf32, #tpu.memory_space<vmem>>, vector<1x32x32xf32>
    %90 = vector.shape_cast %89 : vector<1x32x32xf32> to vector<32x32xf32>
    %cst_105 = arith.constant dense<0.000000e+00> : vector<32x32xf32>
    %91 = tpu.matmul %88, %90, %cst_105 {dimension_numbers = #tpu.dot_dimension_numbers<[1], [0], [0], [1], [0, 0, 1, 1], [], []>} : vector<32x32xf32>, vector<32x32xf32>, vector<32x32xf32> -> vector<32x32xf32>
    %92 = arith.addf %87, %91 : vector<32x32xf32>
    %93 = vector.extract_strided_slice %68 {offsets = [160, 0], sizes = [32, 32], strides = [1, 1]} : vector<288x32xf32> to vector<32x32xf32>
    %c5_106 = arith.constant 5 : index
    %c0_107 = arith.constant 0 : index
    %c0_108 = arith.constant 0 : index
    %94 = vector.load %arg4[%c5_106, %c0_107, %c0_108] : memref<9x32x32xf32, #tpu.memory_space<vmem>>, vector<1x32x32xf32>
    %95 = vector.shape_cast %94 : vector<1x32x32xf32> to vector<32x32xf32>
    %cst_109 = arith.constant dense<0.000000e+00> : vector<32x32xf32>
    %96 = tpu.matmul %93, %95, %cst_109 {dimension_numbers = #tpu.dot_dimension_numbers<[1], [0], [0], [1], [0, 0, 1, 1], [], []>} : vector<32x32xf32>, vector<32x32xf32>, vector<32x32xf32> -> vector<32x32xf32>
    %97 = arith.addf %92, %96 : vector<32x32xf32>
    %98 = vector.extract_strided_slice %68 {offsets = [192, 0], sizes = [32, 32], strides = [1, 1]} : vector<288x32xf32> to vector<32x32xf32>
    %c6_110 = arith.constant 6 : index
    %c0_111 = arith.constant 0 : index
    %c0_112 = arith.constant 0 : index
    %99 = vector.load %arg4[%c6_110, %c0_111, %c0_112] : memref<9x32x32xf32, #tpu.memory_space<vmem>>, vector<1x32x32xf32>
    %100 = vector.shape_cast %99 : vector<1x32x32xf32> to vector<32x32xf32>
    %cst_113 = arith.constant dense<0.000000e+00> : vector<32x32xf32>
    %101 = tpu.matmul %98, %100, %cst_113 {dimension_numbers = #tpu.dot_dimension_numbers<[1], [0], [0], [1], [0, 0, 1, 1], [], []>} : vector<32x32xf32>, vector<32x32xf32>, vector<32x32xf32> -> vector<32x32xf32>
    %102 = arith.addf %97, %101 : vector<32x32xf32>
    %103 = vector.extract_strided_slice %68 {offsets = [224, 0], sizes = [32, 32], strides = [1, 1]} : vector<288x32xf32> to vector<32x32xf32>
    %c7_114 = arith.constant 7 : index
    %c0_115 = arith.constant 0 : index
    %c0_116 = arith.constant 0 : index
    %104 = vector.load %arg4[%c7_114, %c0_115, %c0_116] : memref<9x32x32xf32, #tpu.memory_space<vmem>>, vector<1x32x32xf32>
    %105 = vector.shape_cast %104 : vector<1x32x32xf32> to vector<32x32xf32>
    %cst_117 = arith.constant dense<0.000000e+00> : vector<32x32xf32>
    %106 = tpu.matmul %103, %105, %cst_117 {dimension_numbers = #tpu.dot_dimension_numbers<[1], [0], [0], [1], [0, 0, 1, 1], [], []>} : vector<32x32xf32>, vector<32x32xf32>, vector<32x32xf32> -> vector<32x32xf32>
    %107 = arith.addf %102, %106 : vector<32x32xf32>
    %108 = vector.extract_strided_slice %68 {offsets = [256, 0], sizes = [32, 32], strides = [1, 1]} : vector<288x32xf32> to vector<32x32xf32>
    %c8_118 = arith.constant 8 : index
    %c0_119 = arith.constant 0 : index
    %c0_120 = arith.constant 0 : index
    %109 = vector.load %arg4[%c8_118, %c0_119, %c0_120] : memref<9x32x32xf32, #tpu.memory_space<vmem>>, vector<1x32x32xf32>
    %110 = vector.shape_cast %109 : vector<1x32x32xf32> to vector<32x32xf32>
    %cst_121 = arith.constant dense<0.000000e+00> : vector<32x32xf32>
    %111 = tpu.matmul %108, %110, %cst_121 {dimension_numbers = #tpu.dot_dimension_numbers<[1], [0], [0], [1], [0, 0, 1, 1], [], []>} : vector<32x32xf32>, vector<32x32xf32>, vector<32x32xf32> -> vector<32x32xf32>
    %112 = arith.addf %107, %111 : vector<32x32xf32>
    %c0_122 = arith.constant 0 : index
    %c0_123 = arith.constant 0 : index
    %113 = vector.load %arg5[%c0_122, %c0_123] : memref<1x32xf32, #tpu.memory_space<vmem>>, vector<1x32xf32>
    %114 = vector.broadcast %113 : vector<1x32xf32> to vector<32x32xf32>
    %115 = arith.addf %112, %114 : vector<32x32xf32>
    %cst_124 = arith.constant 0.000000e+00 : f32
    %116 = vector.broadcast %cst_124 : f32 to vector<32x32xf32>
    %117 = arith.maximumf %115, %116 : vector<32x32xf32>
    %118 = vector.extract_strided_slice %117 {offsets = [0, 0], sizes = [2, 32], strides = [1, 1]} : vector<32x32xf32> to vector<2x32xf32>
    %c0_125 = arith.constant 0 : index
    %c0_126 = arith.constant 0 : index
    %c0_127 = arith.constant 0 : index
    %119 = vector.load %arg6[%c0_125, %c0_126, %c0_127] : memref<9x32x32xf32, #tpu.memory_space<vmem>>, vector<1x32x32xf32>
    %120 = vector.shape_cast %119 : vector<1x32x32xf32> to vector<32x32xf32>
    %cst_128 = arith.constant dense<0.000000e+00> : vector<2x32xf32>
    %121 = tpu.matmul %118, %120, %cst_128 {dimension_numbers = #tpu.dot_dimension_numbers<[1], [0], [0], [1], [0, 0, 1, 1], [], []>} : vector<2x32xf32>, vector<32x32xf32>, vector<2x32xf32> -> vector<2x32xf32>
    %122 = vector.extract_strided_slice %117 {offsets = [2, 0], sizes = [2, 32], strides = [1, 1]} : vector<32x32xf32> to vector<2x32xf32>
    %c1_129 = arith.constant 1 : index
    %c0_130 = arith.constant 0 : index
    %c0_131 = arith.constant 0 : index
    %123 = vector.load %arg6[%c1_129, %c0_130, %c0_131] : memref<9x32x32xf32, #tpu.memory_space<vmem>>, vector<1x32x32xf32>
    %124 = vector.shape_cast %123 : vector<1x32x32xf32> to vector<32x32xf32>
    %cst_132 = arith.constant dense<0.000000e+00> : vector<2x32xf32>
    %125 = tpu.matmul %122, %124, %cst_132 {dimension_numbers = #tpu.dot_dimension_numbers<[1], [0], [0], [1], [0, 0, 1, 1], [], []>} : vector<2x32xf32>, vector<32x32xf32>, vector<2x32xf32> -> vector<2x32xf32>
    %126 = arith.addf %121, %125 : vector<2x32xf32>
    %127 = vector.extract_strided_slice %117 {offsets = [4, 0], sizes = [2, 32], strides = [1, 1]} : vector<32x32xf32> to vector<2x32xf32>
    %c2_133 = arith.constant 2 : index
    %c0_134 = arith.constant 0 : index
    %c0_135 = arith.constant 0 : index
    %128 = vector.load %arg6[%c2_133, %c0_134, %c0_135] : memref<9x32x32xf32, #tpu.memory_space<vmem>>, vector<1x32x32xf32>
    %129 = vector.shape_cast %128 : vector<1x32x32xf32> to vector<32x32xf32>
    %cst_136 = arith.constant dense<0.000000e+00> : vector<2x32xf32>
    %130 = tpu.matmul %127, %129, %cst_136 {dimension_numbers = #tpu.dot_dimension_numbers<[1], [0], [0], [1], [0, 0, 1, 1], [], []>} : vector<2x32xf32>, vector<32x32xf32>, vector<2x32xf32> -> vector<2x32xf32>
    %131 = arith.addf %126, %130 : vector<2x32xf32>
    %132 = vector.extract_strided_slice %117 {offsets = [6, 0], sizes = [2, 32], strides = [1, 1]} : vector<32x32xf32> to vector<2x32xf32>
    %c3_137 = arith.constant 3 : index
    %c0_138 = arith.constant 0 : index
    %c0_139 = arith.constant 0 : index
    %133 = vector.load %arg6[%c3_137, %c0_138, %c0_139] : memref<9x32x32xf32, #tpu.memory_space<vmem>>, vector<1x32x32xf32>
    %134 = vector.shape_cast %133 : vector<1x32x32xf32> to vector<32x32xf32>
    %cst_140 = arith.constant dense<0.000000e+00> : vector<2x32xf32>
    %135 = tpu.matmul %132, %134, %cst_140 {dimension_numbers = #tpu.dot_dimension_numbers<[1], [0], [0], [1], [0, 0, 1, 1], [], []>} : vector<2x32xf32>, vector<32x32xf32>, vector<2x32xf32> -> vector<2x32xf32>
    %136 = arith.addf %131, %135 : vector<2x32xf32>
    %137 = vector.extract_strided_slice %117 {offsets = [8, 0], sizes = [2, 32], strides = [1, 1]} : vector<32x32xf32> to vector<2x32xf32>
    %c4_141 = arith.constant 4 : index
    %c0_142 = arith.constant 0 : index
    %c0_143 = arith.constant 0 : index
    %138 = vector.load %arg6[%c4_141, %c0_142, %c0_143] : memref<9x32x32xf32, #tpu.memory_space<vmem>>, vector<1x32x32xf32>
    %139 = vector.shape_cast %138 : vector<1x32x32xf32> to vector<32x32xf32>
    %cst_144 = arith.constant dense<0.000000e+00> : vector<2x32xf32>
    %140 = tpu.matmul %137, %139, %cst_144 {dimension_numbers = #tpu.dot_dimension_numbers<[1], [0], [0], [1], [0, 0, 1, 1], [], []>} : vector<2x32xf32>, vector<32x32xf32>, vector<2x32xf32> -> vector<2x32xf32>
    %141 = arith.addf %136, %140 : vector<2x32xf32>
    %142 = vector.extract_strided_slice %117 {offsets = [10, 0], sizes = [2, 32], strides = [1, 1]} : vector<32x32xf32> to vector<2x32xf32>
    %c5_145 = arith.constant 5 : index
    %c0_146 = arith.constant 0 : index
    %c0_147 = arith.constant 0 : index
    %143 = vector.load %arg6[%c5_145, %c0_146, %c0_147] : memref<9x32x32xf32, #tpu.memory_space<vmem>>, vector<1x32x32xf32>
    %144 = vector.shape_cast %143 : vector<1x32x32xf32> to vector<32x32xf32>
    %cst_148 = arith.constant dense<0.000000e+00> : vector<2x32xf32>
    %145 = tpu.matmul %142, %144, %cst_148 {dimension_numbers = #tpu.dot_dimension_numbers<[1], [0], [0], [1], [0, 0, 1, 1], [], []>} : vector<2x32xf32>, vector<32x32xf32>, vector<2x32xf32> -> vector<2x32xf32>
    %146 = arith.addf %141, %145 : vector<2x32xf32>
    %147 = vector.extract_strided_slice %117 {offsets = [12, 0], sizes = [2, 32], strides = [1, 1]} : vector<32x32xf32> to vector<2x32xf32>
    %c6_149 = arith.constant 6 : index
    %c0_150 = arith.constant 0 : index
    %c0_151 = arith.constant 0 : index
    %148 = vector.load %arg6[%c6_149, %c0_150, %c0_151] : memref<9x32x32xf32, #tpu.memory_space<vmem>>, vector<1x32x32xf32>
    %149 = vector.shape_cast %148 : vector<1x32x32xf32> to vector<32x32xf32>
    %cst_152 = arith.constant dense<0.000000e+00> : vector<2x32xf32>
    %150 = tpu.matmul %147, %149, %cst_152 {dimension_numbers = #tpu.dot_dimension_numbers<[1], [0], [0], [1], [0, 0, 1, 1], [], []>} : vector<2x32xf32>, vector<32x32xf32>, vector<2x32xf32> -> vector<2x32xf32>
    %151 = arith.addf %146, %150 : vector<2x32xf32>
    %152 = vector.extract_strided_slice %117 {offsets = [14, 0], sizes = [2, 32], strides = [1, 1]} : vector<32x32xf32> to vector<2x32xf32>
    %c7_153 = arith.constant 7 : index
    %c0_154 = arith.constant 0 : index
    %c0_155 = arith.constant 0 : index
    %153 = vector.load %arg6[%c7_153, %c0_154, %c0_155] : memref<9x32x32xf32, #tpu.memory_space<vmem>>, vector<1x32x32xf32>
    %154 = vector.shape_cast %153 : vector<1x32x32xf32> to vector<32x32xf32>
    %cst_156 = arith.constant dense<0.000000e+00> : vector<2x32xf32>
    %155 = tpu.matmul %152, %154, %cst_156 {dimension_numbers = #tpu.dot_dimension_numbers<[1], [0], [0], [1], [0, 0, 1, 1], [], []>} : vector<2x32xf32>, vector<32x32xf32>, vector<2x32xf32> -> vector<2x32xf32>
    %156 = arith.addf %151, %155 : vector<2x32xf32>
    %157 = vector.extract_strided_slice %117 {offsets = [16, 0], sizes = [2, 32], strides = [1, 1]} : vector<32x32xf32> to vector<2x32xf32>
    %c8_157 = arith.constant 8 : index
    %c0_158 = arith.constant 0 : index
    %c0_159 = arith.constant 0 : index
    %158 = vector.load %arg6[%c8_157, %c0_158, %c0_159] : memref<9x32x32xf32, #tpu.memory_space<vmem>>, vector<1x32x32xf32>
    %159 = vector.shape_cast %158 : vector<1x32x32xf32> to vector<32x32xf32>
    %cst_160 = arith.constant dense<0.000000e+00> : vector<2x32xf32>
    %160 = tpu.matmul %157, %159, %cst_160 {dimension_numbers = #tpu.dot_dimension_numbers<[1], [0], [0], [1], [0, 0, 1, 1], [], []>} : vector<2x32xf32>, vector<32x32xf32>, vector<2x32xf32> -> vector<2x32xf32>
    %161 = arith.addf %156, %160 : vector<2x32xf32>
    %c0_161 = arith.constant 0 : index
    %c0_162 = arith.constant 0 : index
    %162 = vector.load %arg7[%c0_161, %c0_162] : memref<1x32xf32, #tpu.memory_space<vmem>>, vector<1x32xf32>
    %163 = vector.broadcast %162 : vector<1x32xf32> to vector<2x32xf32>
    %164 = arith.addf %161, %163 : vector<2x32xf32>
    %cst_163 = arith.constant dense<0.000000e+00> : vector<2xf32>
    %165 = vector.multi_reduction <add>, %164, %cst_163 [1] : vector<2x32xf32> to vector<2xf32>
    %166 = vector.shape_cast %165 : vector<2xf32> to vector<2x1xf32>
    %cst_164 = arith.constant 3.200000e+01 : f32
    %167 = vector.broadcast %cst_164 : f32 to vector<2x1xf32>
    %168 = arith.divf %166, %167 : vector<2x1xf32>
    %169 = vector.broadcast %168 : vector<2x1xf32> to vector<2x32xf32>
    %170 = arith.subf %164, %169 : vector<2x32xf32>
    %171 = arith.mulf %170, %170 : vector<2x32xf32>
    %cst_165 = arith.constant dense<0.000000e+00> : vector<2xf32>
    %172 = vector.multi_reduction <add>, %171, %cst_165 [1] : vector<2x32xf32> to vector<2xf32>
    %173 = vector.shape_cast %172 : vector<2xf32> to vector<2x1xf32>
    %cst_166 = arith.constant 3.200000e+01 : f32
    %174 = vector.broadcast %cst_166 : f32 to vector<2x1xf32>
    %175 = arith.divf %173, %174 : vector<2x1xf32>
    %176 = vector.broadcast %168 : vector<2x1xf32> to vector<2x32xf32>
    %177 = arith.subf %164, %176 : vector<2x32xf32>
    %cst_167 = arith.constant 9.99999974E-6 : f32
    %178 = vector.broadcast %cst_167 : f32 to vector<2x1xf32>
    %179 = arith.addf %175, %178 : vector<2x1xf32>
    %180 = math.rsqrt %179 : vector<2x1xf32>
    %181 = vector.broadcast %180 : vector<2x1xf32> to vector<2x32xf32>
    %182 = arith.mulf %177, %181 : vector<2x32xf32>
    %c0_168 = arith.constant 0 : index
    %c0_169 = arith.constant 0 : index
    %183 = vector.load %arg8[%c0_168, %c0_169] : memref<1x32xf32, #tpu.memory_space<vmem>>, vector<1x32xf32>
    %184 = vector.broadcast %183 : vector<1x32xf32> to vector<2x32xf32>
    %185 = arith.mulf %182, %184 : vector<2x32xf32>
    %c0_170 = arith.constant 0 : index
    %c0_171 = arith.constant 0 : index
    %186 = vector.load %arg9[%c0_170, %c0_171] : memref<1x32xf32, #tpu.memory_space<vmem>>, vector<1x32xf32>
    %187 = vector.broadcast %186 : vector<1x32xf32> to vector<2x32xf32>
    %188 = arith.addf %185, %187 : vector<2x32xf32>
    %189 = math.tanh %188 : vector<2x32xf32>
    %c0_172 = arith.constant 0 : index
    %c0_173 = arith.constant 0 : index
    %190 = vector.load %arg10[%c0_172, %c0_173] : memref<2x32xf32, #tpu.memory_space<vmem>>, vector<2x32xf32>
    tpu.vector_store %arg10[%c0_172, %c0_173], %189 {strides = array<i32>} : memref<2x32xf32, #tpu.memory_space<vmem>>, vector<2x32xf32>,
    return
  }
}

</mosaic_0001>

<llo_original>
// kernel: encoder_forward.1
$region0: #{encoder_forward.1}
  #allocation0 [shape = 'u32[]', space=smem, size = 0x4, offset = 0x4, fixed_abs, tag = 'smem constant byte address 0x4 - core index']
  #allocation1 [shape = 'u32[144,128]{1,0:T(1,128)}', space=vmem, size = 0x12000, scoped, tag = 'internal scratch']
  %s0 = inlined_call_operand.vmem [shape: f32[2,2,2,9,9,4], index: 0, kind: input, shape index: {}]
  %s1 = inlined_call_operand.vmem [shape: f32[9,4,32], index: 1, kind: input, shape index: {}]
  %s2 = inlined_call_operand.vmem [shape: f32[1,32], index: 2, kind: input, shape index: {}]
  %s3 = inlined_call_operand.vmem [shape: f32[288,128], index: 3, kind: input, shape index: {}]
  %s4 = inlined_call_operand.vmem [shape: f32[9,32,32], index: 4, kind: input, shape index: {}]
  %s5 = inlined_call_operand.vmem [shape: f32[1,32], index: 5, kind: input, shape index: {}]
  %s6 = inlined_call_operand.vmem [shape: f32[9,32,32], index: 6, kind: input, shape index: {}]
  %s7 = inlined_call_operand.vmem [shape: f32[1,32], index: 7, kind: input, shape index: {}]
  %s8 = inlined_call_operand.vmem [shape: f32[1,32], index: 8, kind: input, shape index: {}]
  %s9 = inlined_call_operand.vmem [shape: f32[1,32], index: 9, kind: input, shape index: {}]
  %s10 = inlined_call_operand.hbm [shape: f32[2,32], index: 10, kind: output, shape index: {}]
  %s11 = sld [smem:[#allocation0]]
  $region50: #{encoder_forward.1} parent=0
    _
  %s13 = ssub.s32 1, %s11
  %s14 = scalar_select 0, %s13, %s11
  $region1: #{encoder_forward.1} parent=0
    #allocation2 [shape = 'u8[1024]{0}', space=vmem, size = 0x400, scoped, tag = 'output window, operand 0, single buffered']
    #allocation3 [shape = 's32[1]{0}', space=sflag, size = 0x4, scoped, tag = 'scoped memory for encoder_forward.1']
    %15 = vsyncpa [#allocation3], 0
    // Predicated region
    $region2: #{encoder_forward.1} parent=1 // pred_check
      _
    $region3: #{encoder_forward.1} parent=1 // pred_check_branch
      %17 = sbr.rel (0) target = $region5
    $region4: #{encoder_forward.1} parent=1 // pred_region
      _
    $region5: #{encoder_forward.1} parent=1 // pred_fallthru
      _
    // Predicated region
    $region6: #{encoder_forward.1} parent=1 // pred_check
      _
    $region7: #{encoder_forward.1} parent=1 // pred_check_branch
      %19 = sbr.rel (0) target = $region9
    $region8: #{encoder_forward.1} parent=1 // pred_region
      _
    $region9: #{encoder_forward.1} parent=1 // pred_fallthru
      _
    // Predicated region
    $region10: #{encoder_forward.1} parent=1 // pred_check
      _
    $region11: #{encoder_forward.1} parent=1 // pred_check_branch
      %21 = sbr.rel (0) target = $region13
    $region12: #{encoder_forward.1} parent=1 // pred_region
      _
    $region13: #{encoder_forward.1} parent=1 // pred_fallthru
      _
    // Predicated region
    $region14: #{encoder_forward.1} parent=1 // pred_check
      _
    $region15: #{encoder_forward.1} parent=1 // pred_check_branch
      %23 = sbr.rel (0) target = $region17
    $region16: #{encoder_forward.1} parent=1 // pred_region
      _
    $region17: #{encoder_forward.1} parent=1 // pred_fallthru
      _
    // Predicated region
    $region18: #{encoder_forward.1} parent=1 // pred_check
      _
    $region19: #{encoder_forward.1} parent=1 // pred_check_branch
      %25 = sbr.rel (0) target = $region21
    $region20: #{encoder_forward.1} parent=1 // pred_region
      _
    $region21: #{encoder_forward.1} parent=1 // pred_fallthru
      _
    // Predicated region
    $region22: #{encoder_forward.1} parent=1 // pred_check
      _
    $region23: #{encoder_forward.1} parent=1 // pred_check_branch
      %27 = sbr.rel (0) target = $region25
    $region24: #{encoder_forward.1} parent=1 // pred_region
      _
    $region25: #{encoder_forward.1} parent=1 // pred_fallthru
      _
    // Predicated region
    $region26: #{encoder_forward.1} parent=1 // pred_check
      _
    $region27: #{encoder_forward.1} parent=1 // pred_check_branch
      %29 = sbr.rel (0) target = $region29
    $region28: #{encoder_forward.1} parent=1 // pred_region
      _
    $region29: #{encoder_forward.1} parent=1 // pred_fallthru
      _
    // Predicated region
    $region30: #{encoder_forward.1} parent=1 // pred_check
      _
    $region31: #{encoder_forward.1} parent=1 // pred_check_branch
      %31 = sbr.rel (0) target = $region33
    $region32: #{encoder_forward.1} parent=1 // pred_region
      _
    $region33: #{encoder_forward.1} parent=1 // pred_fallthru
      _
    // Predicated region
    $region34: #{encoder_forward.1} parent=1 // pred_check
      _
    $region35: #{encoder_forward.1} parent=1 // pred_check_branch
      %33 = sbr.rel (0) target = $region37
    $region36: #{encoder_forward.1} parent=1 // pred_region
      _
    $region37: #{encoder_forward.1} parent=1 // pred_fallthru
      _
    // Predicated region
    $region38: #{encoder_forward.1} parent=1 // pred_check
      _
    $region39: #{encoder_forward.1} parent=1 // pred_check_branch
      %35 = sbr.rel (0) target = $region41
    $region40: #{encoder_forward.1} parent=1 // pred_region
      _
    $region41: #{encoder_forward.1} parent=1 // pred_fallthru
      _
    %v36 = vld [vmem:[%s0] sm:$0xff]
    %v37 = vld [vmem:[%s0 + $0x10] sm:$0xff]
    %v38 = vld [vmem:[%s0 + $0x20] sm:$0xff]
    %v39 = vld [vmem:[%s0 + $0x30] sm:$0xff]
    %v40 = vld [vmem:[%s0 + $0x40] sm:$0xff]
    %v41 = vld [vmem:[%s0 + $0x50] sm:$0xff]
    %v42 = vld [vmem:[%s0 + $0x60] sm:$0xff]
    %v43 = vld [vmem:[%s0 + $0x70] sm:$0xff]
    %v44 = vld [vmem:[%s0 + $0x90] sm:$0xff]
    %v45 = vld [vmem:[%s0 + $0xa0] sm:$0xff]
    %v46 = vld [vmem:[%s0 + $0xb0] sm:$0xff]
    %v47 = vld [vmem:[%s0 + $0xc0] sm:$0xff]
    %v48 = vld [vmem:[%s0 + $0xd0] sm:$0xff]
    %v49 = vld [vmem:[%s0 + $0xe0] sm:$0xff]
    %v50 = vld [vmem:[%s0 + $0xf0] sm:$0xff]
    %v51 = vld [vmem:[%s0 + $0x100] sm:$0xff]
    %v52 = vld [vmem:[%s1] sm:$0xf]
    %s53 = scalar_lea.vmem %s0, 288
    %v54 = vld [vmem:[%s53] sm:$0xff]
    %v55 = vld [vmem:[%s53 + $0x10] sm:$0xff]
    %v56 = vld [vmem:[%s53 + $0x20] sm:$0xff]
    %v57 = vld [vmem:[%s53 + $0x30] sm:$0xff]
    %v58 = vld [vmem:[%s53 + $0x40] sm:$0xff]
    %v59 = vld [vmem:[%s53 + $0x50] sm:$0xff]
    %v60 = vld [vmem:[%s53 + $0x60] sm:$0xff]
    %v61 = vld [vmem:[%s53 + $0x70] sm:$0xff]
    %v62 = vld [vmem:[%s53 + $0x90] sm:$0xff]
    %v63 = vld [vmem:[%s53 + $0xa0] sm:$0xff]
    %v64 = vld [vmem:[%s53 + $0xb0] sm:$0xff]
    %v65 = vld [vmem:[%s53 + $0xc0] sm:$0xff]
    %v66 = vld [vmem:[%s53 + $0xd0] sm:$0xff]
    %v67 = vld [vmem:[%s53 + $0xe0] sm:$0xff]
    %v68 = vld [vmem:[%s53 + $0xf0] sm:$0xff]
    %v69 = vld [vmem:[%s53 + $0x100] sm:$0xff]
    %s70 = scalar_lea.vmem %s1, 4
    %v71 = vld [vmem:[%s70] sm:$0xf]
    %vm72 = vcmask 31744
    %v74 = vsel %vm72, %v54, 0
    %v77 = vsel %vm72, %v55, 0
    %v80 = vsel %vm72, %v56, 0
    %v83 = vsel %vm72, %v57, 0
    %v86 = vsel %vm72, %v58, 0
    %v89 = vsel %vm72, %v59, 0
    %v92 = vsel %vm72, %v60, 0
    %v95 = vsel %vm72, %v61, 0
    %v98 = vsel %vm72, %v62, 0
    %v101 = vsel %vm72, %v63, 0
    %v104 = vsel %vm72, %v64, 0
    %v107 = vsel %vm72, %v65, 0
    %v110 = vsel %vm72, %v66, 0
    %v113 = vsel %vm72, %v67, 0
    %v116 = vsel %vm72, %v68, 0
    %v119 = vsel %vm72, %v69, 0
    %vm121 = vcmask 1043456
    %v123 = vsel %vm121, %v71, 0
    %125 = vmatprep.subr.mxu0 0.0
    %126 = vmatpush1.msra.mxu0 0.0
    %127 = vmatprep.subr.mxu0 0.0
    %128 = vmatpush1.msra.mxu0 0.0
    %129 = vmatprep.subr.mxu0 0.0
    %130 = vmatpush1.msra.mxu0 0.0
    %131 = vmatprep.subr.mxu0 0.0
    %132 = vmatpush1.msra.mxu0 0.0
    %133 = vmatprep.subr.mxu0 0.0
    %134 = vmatpush1.msra.mxu0 0.0
    %135 = vmatprep.subr.mxu0 0.0
    %136 = vmatpush1.msra.mxu0 0.0
    %137 = vmatprep.subr.mxu0 0.0
    %138 = vmatpush1.msra.mxu0 0.0
    %139 = vmatprep.subr.mxu0 0.0
    %140 = vmatpush1.msra.mxu0 0.0
    %141 = vmatprep.subr.mxu0 0.0
    %142 = vmatpush1.msra.mxu0 0.0
    %143 = vmatprep.subr.mxu0 0.0
    %144 = vmatpush1.msra.mxu0 0.0
    %145 = vmatprep.subr.mxu0 0.0
    %146 = vmatpush1.msra.mxu0 0.0
    %147 = vmatprep.subr.mxu0 0.0
    %148 = vmatpush1.msra.mxu0 0.0
    %149 = vmatprep.subr.mxu0 0.0
    %150 = vmatpush1.msra.mxu0 0.0
    %151 = vmatprep.subr.mxu0 0.0
    %152 = vmatpush1.msra.mxu0 0.0
    %153 = vmatprep.subr.mxu0 0.0
    %154 = vmatpush1.msra.mxu0 0.0
    %155 = vmatprep.subr.mxu0 0.0
    %156 = vmatpush1.msra.mxu0 %v123
    %157 = vmatprep.subr.mxu0 0.0
    %158 = vmatpush2.msra.mxu0 0.0
    %159 = vmatprep.subr.mxu0 0.0
    %160 = vmatpush2.msra.mxu0 0.0
    %161 = vmatprep.subr.mxu0 0.0
    %162 = vmatpush2.msra.mxu0 0.0
    %163 = vmatprep.subr.mxu0 0.0
    %164 = vmatpush2.msra.mxu0 0.0
    %165 = vmatprep.subr.mxu0 0.0
    %166 = vmatpush2.msra.mxu0 0.0
    %167 = vmatprep.subr.mxu0 0.0
    %168 = vmatpush2.msra.mxu0 0.0
    %169 = vmatprep.subr.mxu0 0.0
    %170 = vmatpush2.msra.mxu0 0.0
    %171 = vmatprep.subr.mxu0 0.0
    %172 = vmatpush2.msra.mxu0 0.0
    %173 = vmatprep.subr.mxu0 0.0
    %174 = vmatpush2.msra.mxu0 0.0
    %175 = vmatprep.subr.mxu0 0.0
    %176 = vmatpush2.msra.mxu0 0.0
    %177 = vmatprep.subr.mxu0 0.0
    %178 = vmatpush2.msra.mxu0 0.0
    %179 = vmatprep.subr.mxu0 0.0
    %180 = vmatpush2.msra.mxu0 0.0
    %181 = vmatprep.subr.mxu0 0.0
    %182 = vmatpush2.msra.mxu0 0.0
    %183 = vmatprep.subr.mxu0 0.0
    %184 = vmatpush2.msra.mxu0 0.0
    %185 = vmatprep.subr.mxu0 0.0
    %186 = vmatpush2.msra.mxu0 0.0
    %187 = vmatprep.subr.mxu0 0.0
    %188 = vmatpush2.msra.mxu0 0.0
    %189 = vmatprep.mubr.f32.mxu0 0.0
    %190 = vmatmul.mubr.f32.gmra.mxu0 %v74
    %v191 = vpop.f32.mrf.mxu0
    %v192 = vadd.f32 0.0, %v191
    %v193 = vpop.f32.mrf.mxu0
    %194 = vmatprep.mubr.f32.mxu0 0.0
    %195 = vmatmul.mubr.f32.gmra.mxu0 %v77
    %v196 = vpop.f32.mrf.mxu0
    %v197 = vadd.f32 0.0, %v196
    %v198 = vpop.f32.mrf.mxu0
    %199 = vmatprep.mubr.f32.mxu0 0.0
    %200 = vmatmul.mubr.f32.gmra.mxu0 %v80
    %v201 = vpop.f32.mrf.mxu0
    %v202 = vadd.f32 0.0, %v201
    %v203 = vpop.f32.mrf.mxu0
    %204 = vmatprep.mubr.f32.mxu0 0.0
    %205 = vmatmul.mubr.f32.gmra.mxu0 %v83
    %v206 = vpop.f32.mrf.mxu0
    %v207 = vadd.f32 0.0, %v206
    %v208 = vpop.f32.mrf.mxu0
    %209 = vmatprep.mubr.f32.mxu0 0.0
    %210 = vmatmul.mubr.f32.gmra.mxu0 %v86
    %v211 = vpop.f32.mrf.mxu0
    %v212 = vadd.f32 0.0, %v211
    %v213 = vpop.f32.mrf.mxu0
    %214 = vmatprep.mubr.f32.mxu0 0.0
    %215 = vmatmul.mubr.f32.gmra.mxu0 %v89
    %v216 = vpop.f32.mrf.mxu0
    %v217 = vadd.f32 0.0, %v216
    %v218 = vpop.f32.mrf.mxu0
    %219 = vmatprep.mubr.f32.mxu0 0.0
    %220 = vmatmul.mubr.f32.gmra.mxu0 %v92
    %v221 = vpop.f32.mrf.mxu0
    %v222 = vadd.f32 0.0, %v221
    %v223 = vpop.f32.mrf.mxu0
    %224 = vmatprep.mubr.f32.mxu0 0.0
    %225 = vmatmul.mubr.f32.gmra.mxu0 %v95
    %v226 = vpop.f32.mrf.mxu0
    %v227 = vadd.f32 0.0, %v226
    %v228 = vpop.f32.mrf.mxu0
    %229 = vmatprep.mubr.f32.mxu0 0.0
    %230 = vmatmul.mubr.f32.gmra.mxu0 %v98
    %v231 = vpop.f32.mrf.mxu0
    %v232 = vadd.f32 0.0, %v231
    %v233 = vpop.f32.mrf.mxu0
    %234 = vmatprep.mubr.f32.mxu0 0.0
    %235 = vmatmul.mubr.f32.gmra.mxu0 %v101
    %v236 = vpop.f32.mrf.mxu0
    %v237 = vadd.f32 0.0, %v236
    %v238 = vpop.f32.mrf.mxu0
    %239 = vmatprep.mubr.f32.mxu0 0.0
    %240 = vmatmul.mubr.f32.gmra.mxu0 %v104
    %v241 = vpop.f32.mrf.mxu0
    %v242 = vadd.f32 0.0, %v241
    %v243 = vpop.f32.mrf.mxu0
    %244 = vmatprep.mubr.f32.mxu0 0.0
    %245 = vmatmul.mubr.f32.gmra.mxu0 %v107
    %v246 = vpop.f32.mrf.mxu0
    %v247 = vadd.f32 0.0, %v246
    %v248 = vpop.f32.mrf.mxu0
    %249 = vmatprep.mubr.f32.mxu0 0.0
    %250 = vmatmul.mubr.f32.gmra.mxu0 %v110
    %v251 = vpop.f32.mrf.mxu0
    %v252 = vadd.f32 0.0, %v251
    %v253 = vpop.f32.mrf.mxu0
    %254 = vmatprep.mubr.f32.mxu0 0.0
    %255 = vmatmul.mubr.f32.gmra.mxu0 %v113
    %v256 = vpop.f32.mrf.mxu0
    %v257 = vadd.f32 0.0, %v256
    %v258 = vpop.f32.mrf.mxu0
    %259 = vmatprep.mubr.f32.mxu0 0.0
    %260 = vmatmul.mubr.f32.gmra.mxu0 %v116
    %v261 = vpop.f32.mrf.mxu0
    %v262 = vadd.f32 0.0, %v261
    %v263 = vpop.f32.mrf.mxu0
    %264 = vmatprep.mubr.f32.mxu0 0.0
    %265 = vmatmul.mubr.f32.gmra.mxu0 %v119
    %v266 = vpop.f32.mrf.mxu0
    %v267 = vadd.f32 0.0, %v266
    %v268 = vpop.f32.mrf.mxu0
    %269 = vdwg.mxu0
    %v271 = vsel %vm72, %v36, 0
    %v274 = vsel %vm72, %v37, 0
    %v277 = vsel %vm72, %v38, 0
    %v280 = vsel %vm72, %v39, 0
    %v283 = vsel %vm72, %v40, 0
    %v286 = vsel %vm72, %v41, 0
    %v289 = vsel %vm72, %v42, 0
    %v292 = vsel %vm72, %v43, 0
    %v295 = vsel %vm72, %v44, 0
    %v298 = vsel %vm72, %v45, 0
    %v301 = vsel %vm72, %v46, 0
    %v304 = vsel %vm72, %v47, 0
    %v307 = vsel %vm72, %v48, 0
    %v310 = vsel %vm72, %v49, 0
    %v313 = vsel %vm72, %v50, 0
    %v316 = vsel %vm72, %v51, 0
    %v319 = vsel %vm121, %v52, 0
    %321 = vmatprep.subr.mxu0 0.0
    %322 = vmatpush1.msra.mxu0 0.0
    %323 = vmatprep.subr.mxu0 0.0
    %324 = vmatpush1.msra.mxu0 0.0
    %325 = vmatprep.subr.mxu0 0.0
    %326 = vmatpush1.msra.mxu0 0.0
    %327 = vmatprep.subr.mxu0 0.0
    %328 = vmatpush1.msra.mxu0 0.0
    %329 = vmatprep.subr.mxu0 0.0
    %330 = vmatpush1.msra.mxu0 0.0
    %331 = vmatprep.subr.mxu0 0.0
    %332 = vmatpush1.msra.mxu0 0.0
    %333 = vmatprep.subr.mxu0 0.0
    %334 = vmatpush1.msra.mxu0 0.0
    %335 = vmatprep.subr.mxu0 0.0
    %336 = vmatpush1.msra.mxu0 0.0
    %337 = vmatprep.subr.mxu0 0.0
    %338 = vmatpush1.msra.mxu0 0.0
    %339 = vmatprep.subr.mxu0 0.0
    %340 = vmatpush1.msra.mxu0 0.0
    %341 = vmatprep.subr.mxu0 0.0
    %342 = vmatpush1.msra.mxu0 0.0
    %343 = vmatprep.subr.mxu0 0.0
    %344 = vmatpush1.msra.mxu0 0.0
    %345 = vmatprep.subr.mxu0 0.0
    %346 = vmatpush1.msra.mxu0 0.0
    %347 = vmatprep.subr.mxu0 0.0
    %348 = vmatpush1.msra.mxu0 0.0
    %349 = vmatprep.subr.mxu0 0.0
    %350 = vmatpush1.msra.mxu0 0.0
    %351 = vmatprep.subr.mxu0 0.0
    %352 = vmatpush1.msra.mxu0 %v319
    %353 = vmatprep.subr.mxu0 0.0
    %354 = vmatpush2.msra.mxu0 0.0
    %355 = vmatprep.subr.mxu0 0.0
    %356 = vmatpush2.msra.mxu0 0.0
    %357 = vmatprep.subr.mxu0 0.0
    %358 = vmatpush2.msra.mxu0 0.0
    %359 = vmatprep.subr.mxu0 0.0
    %360 = vmatpush2.msra.mxu0 0.0
    %361 = vmatprep.subr.mxu0 0.0
    %362 = vmatpush2.msra.mxu0 0.0
    %363 = vmatprep.subr.mxu0 0.0
    %364 = vmatpush2.msra.mxu0 0.0
    %365 = vmatprep.subr.mxu0 0.0
    %366 = vmatpush2.msra.mxu0 0.0
    %367 = vmatprep.subr.mxu0 0.0
    %368 = vmatpush2.msra.mxu0 0.0
    %369 = vmatprep.subr.mxu0 0.0
    %370 = vmatpush2.msra.mxu0 0.0
    %371 = vmatprep.subr.mxu0 0.0
    %372 = vmatpush2.msra.mxu0 0.0
    %373 = vmatprep.subr.mxu0 0.0
    %374 = vmatpush2.msra.mxu0 0.0
    %375 = vmatprep.subr.mxu0 0.0
    %376 = vmatpush2.msra.mxu0 0.0
    %377 = vmatprep.subr.mxu0 0.0
    %378 = vmatpush2.msra.mxu0 0.0
    %379 = vmatprep.subr.mxu0 0.0
    %380 = vmatpush2.msra.mxu0 0.0
    %381 = vmatprep.subr.mxu0 0.0
    %382 = vmatpush2.msra.mxu0 0.0
    %383 = vmatprep.subr.mxu0 0.0
    %384 = vmatpush2.msra.mxu0 0.0
    %385 = vmatprep.mubr.f32.mxu0 0.0
    %386 = vmatmul.mubr.f32.gmra.mxu0 %v271
    %v387 = vpop.f32.mrf.mxu0
    %v388 = vadd.f32 %v192, %v387
    %v389 = vpop.f32.mrf.mxu0
    %390 = vmatprep.mubr.f32.mxu0 0.0
    %391 = vmatmul.mubr.f32.gmra.mxu0 %v274
    %v392 = vpop.f32.mrf.mxu0
    %v393 = vadd.f32 %v197, %v392
    %v394 = vpop.f32.mrf.mxu0
    %395 = vmatprep.mubr.f32.mxu0 0.0
    %396 = vmatmul.mubr.f32.gmra.mxu0 %v277
    %v397 = vpop.f32.mrf.mxu0
    %v398 = vadd.f32 %v202, %v397
    %v399 = vpop.f32.mrf.mxu0
    %400 = vmatprep.mubr.f32.mxu0 0.0
    %401 = vmatmul.mubr.f32.gmra.mxu0 %v280
    %v402 = vpop.f32.mrf.mxu0
    %v403 = vadd.f32 %v207, %v402
    %v404 = vpop.f32.mrf.mxu0
    %405 = vmatprep.mubr.f32.mxu0 0.0
    %406 = vmatmul.mubr.f32.gmra.mxu0 %v283
    %v407 = vpop.f32.mrf.mxu0
    %v408 = vadd.f32 %v212, %v407
    %v409 = vpop.f32.mrf.mxu0
    %410 = vmatprep.mubr.f32.mxu0 0.0
    %411 = vmatmul.mubr.f32.gmra.mxu0 %v286
    %v412 = vpop.f32.mrf.mxu0
    %v413 = vadd.f32 %v217, %v412
    %v414 = vpop.f32.mrf.mxu0
    %415 = vmatprep.mubr.f32.mxu0 0.0
    %416 = vmatmul.mubr.f32.gmra.mxu0 %v289
    %v417 = vpop.f32.mrf.mxu0
    %v418 = vadd.f32 %v222, %v417
    %v419 = vpop.f32.mrf.mxu0
    %420 = vmatprep.mubr.f32.mxu0 0.0
    %421 = vmatmul.mubr.f32.gmra.mxu0 %v292
    %v422 = vpop.f32.mrf.mxu0
    %v423 = vadd.f32 %v227, %v422
    %v424 = vpop.f32.mrf.mxu0
    %425 = vmatprep.mubr.f32.mxu0 0.0
    %426 = vmatmul.mubr.f32.gmra.mxu0 %v295
    %v427 = vpop.f32.mrf.mxu0
    %v428 = vadd.f32 %v232, %v427
    %v429 = vpop.f32.mrf.mxu0
    %430 = vmatprep.mubr.f32.mxu0 0.0
    %431 = vmatmul.mubr.f32.gmra.mxu0 %v298
    %v432 = vpop.f32.mrf.mxu0
    %v433 = vadd.f32 %v237, %v432
    %v434 = vpop.f32.mrf.mxu0
    %435 = vmatprep.mubr.f32.mxu0 0.0
    %436 = vmatmul.mubr.f32.gmra.mxu0 %v301
    %v437 = vpop.f32.mrf.mxu0
    %v438 = vadd.f32 %v242, %v437
    %v439 = vpop.f32.mrf.mxu0
    %440 = vmatprep.mubr.f32.mxu0 0.0
    %441 = vmatmul.mubr.f32.gmra.mxu0 %v304
    %v442 = vpop.f32.mrf.mxu0
    %v443 = vadd.f32 %v247, %v442
    %v444 = vpop.f32.mrf.mxu0
    %445 = vmatprep.mubr.f32.mxu0 0.0
    %446 = vmatmul.mubr.f32.gmra.mxu0 %v307
    %v447 = vpop.f32.mrf.mxu0
    %v448 = vadd.f32 %v252, %v447
    %v449 = vpop.f32.mrf.mxu0
    %450 = vmatprep.mubr.f32.mxu0 0.0
    %451 = vmatmul.mubr.f32.gmra.mxu0 %v310
    %v452 = vpop.f32.mrf.mxu0
    %v453 = vadd.f32 %v257, %v452
    %v454 = vpop.f32.mrf.mxu0
    %455 = vmatprep.mubr.f32.mxu0 0.0
    %456 = vmatmul.mubr.f32.gmra.mxu0 %v313
    %v457 = vpop.f32.mrf.mxu0
    %v458 = vadd.f32 %v262, %v457
    %v459 = vpop.f32.mrf.mxu0
    %460 = vmatprep.mubr.f32.mxu0 0.0
    %461 = vmatmul.mubr.f32.gmra.mxu0 %v316
    %v462 = vpop.f32.mrf.mxu0
    %v463 = vadd.f32 %v267, %v462
    %v464 = vpop.f32.mrf.mxu0
    %465 = vdwg.mxu0
    %v466 = vld [vmem:[%s0 + $0x1] sm:$0xff]
    %v467 = vld [vmem:[%s0 + $0x11] sm:$0xff]
    %v468 = vld [vmem:[%s0 + $0x21] sm:$0xff]
    %v469 = vld [vmem:[%s0 + $0x31] sm:$0xff]
    %v470 = vld [vmem:[%s0 + $0x41] sm:$0xff]
    %v471 = vld [vmem:[%s0 + $0x51] sm:$0xff]
    %v472 = vld [vmem:[%s0 + $0x61] sm:$0xff]
    %v473 = vld [vmem:[%s0 + $0x71] sm:$0xff]
    %v474 = vld [vmem:[%s0 + $0x91] sm:$0xff]
    %v475 = vld [vmem:[%s0 + $0xa1] sm:$0xff]
    %v476 = vld [vmem:[%s0 + $0xb1] sm:$0xff]
    %v477 = vld [vmem:[%s0 + $0xc1] sm:$0xff]
    %v478 = vld [vmem:[%s0 + $0xd1] sm:$0xff]
    %v479 = vld [vmem:[%s0 + $0xe1] sm:$0xff]
    %v480 = vld [vmem:[%s0 + $0xf1] sm:$0xff]
    %v481 = vld [vmem:[%s0 + $0x101] sm:$0xff]
    %s482 = scalar_lea.vmem %s1, 8
    %v483 = vld [vmem:[%s482] sm:$0xf]
    %v485 = vsel %vm72, %v466, 0
    %v488 = vsel %vm72, %v467, 0
    %v491 = vsel %vm72, %v468, 0
    %v494 = vsel %vm72, %v469, 0
    %v497 = vsel %vm72, %v470, 0
    %v500 = vsel %vm72, %v471, 0
    %v503 = vsel %vm72, %v472, 0
    %v506 = vsel %vm72, %v473, 0
    %v509 = vsel %vm72, %v474, 0
    %v512 = vsel %vm72, %v475, 0
    %v515 = vsel %vm72, %v476, 0
    %v518 = vsel %vm72, %v477, 0
    %v521 = vsel %vm72, %v478, 0
    %v524 = vsel %vm72, %v479, 0
    %v527 = vsel %vm72, %v480, 0
    %v530 = vsel %vm72, %v481, 0
    %v533 = vsel %vm121, %v483, 0
    %535 = vmatprep.subr.mxu0 0.0
    %536 = vmatpush1.msra.mxu0 0.0
    %537 = vmatprep.subr.mxu0 0.0
    %538 = vmatpush1.msra.mxu0 0.0
    %539 = vmatprep.subr.mxu0 0.0
    %540 = vmatpush1.msra.mxu0 0.0
    %541 = vmatprep.subr.mxu0 0.0
    %542 = vmatpush1.msra.mxu0 0.0
    %543 = vmatprep.subr.mxu0 0.0
    %544 = vmatpush1.msra.mxu0 0.0
    %545 = vmatprep.subr.mxu0 0.0
    %546 = vmatpush1.msra.mxu0 0.0
    %547 = vmatprep.subr.mxu0 0.0
    %548 = vmatpush1.msra.mxu0 0.0
    %549 = vmatprep.subr.mxu0 0.0
    %550 = vmatpush1.msra.mxu0 0.0
    %551 = vmatprep.subr.mxu0 0.0
    %552 = vmatpush1.msra.mxu0 0.0
    %553 = vmatprep.subr.mxu0 0.0
    %554 = vmatpush1.msra.mxu0 0.0
    %555 = vmatprep.subr.mxu0 0.0
    %556 = vmatpush1.msra.mxu0 0.0
    %557 = vmatprep.subr.mxu0 0.0
    %558 = vmatpush1.msra.mxu0 0.0
    %559 = vmatprep.subr.mxu0 0.0
    %560 = vmatpush1.msra.mxu0 0.0
    %561 = vmatprep.subr.mxu0 0.0
    %562 = vmatpush1.msra.mxu0 0.0
    %563 = vmatprep.subr.mxu0 0.0
    %564 = vmatpush1.msra.mxu0 0.0
    %565 = vmatprep.subr.mxu0 0.0
    %566 = vmatpush1.msra.mxu0 %v533
    %567 = vmatprep.subr.mxu0 0.0
    %568 = vmatpush2.msra.mxu0 0.0
    %569 = vmatprep.subr.mxu0 0.0
    %570 = vmatpush2.msra.mxu0 0.0
    %571 = vmatprep.subr.mxu0 0.0
    %572 = vmatpush2.msra.mxu0 0.0
    %573 = vmatprep.subr.mxu0 0.0
    %574 = vmatpush2.msra.mxu0 0.0
    %575 = vmatprep.subr.mxu0 0.0
    %576 = vmatpush2.msra.mxu0 0.0
    %577 = vmatprep.subr.mxu0 0.0
    %578 = vmatpush2.msra.mxu0 0.0
    %579 = vmatprep.subr.mxu0 0.0
    %580 = vmatpush2.msra.mxu0 0.0
    %581 = vmatprep.subr.mxu0 0.0
    %582 = vmatpush2.msra.mxu0 0.0
    %583 = vmatprep.subr.mxu0 0.0
    %584 = vmatpush2.msra.mxu0 0.0
    %585 = vmatprep.subr.mxu0 0.0
    %586 = vmatpush2.msra.mxu0 0.0
    %587 = vmatprep.subr.mxu0 0.0
    %588 = vmatpush2.msra.mxu0 0.0
    %589 = vmatprep.subr.mxu0 0.0
    %590 = vmatpush2.msra.mxu0 0.0
    %591 = vmatprep.subr.mxu0 0.0
    %592 = vmatpush2.msra.mxu0 0.0
    %593 = vmatprep.subr.mxu0 0.0
    %594 = vmatpush2.msra.mxu0 0.0
    %595 = vmatprep.subr.mxu0 0.0
    %596 = vmatpush2.msra.mxu0 0.0
    %597 = vmatprep.subr.mxu0 0.0
    %598 = vmatpush2.msra.mxu0 0.0
    %599 = vmatprep.mubr.f32.mxu0 0.0
    %600 = vmatmul.mubr.f32.gmra.mxu0 %v485
    %v601 = vpop.f32.mrf.mxu0
    %v602 = vadd.f32 0.0, %v601
    %v603 = vpop.f32.mrf.mxu0
    %604 = vmatprep.mubr.f32.mxu0 0.0
    %605 = vmatmul.mubr.f32.gmra.mxu0 %v488
    %v606 = vpop.f32.mrf.mxu0
    %v607 = vadd.f32 0.0, %v606
    %v608 = vpop.f32.mrf.mxu0
    %609 = vmatprep.mubr.f32.mxu0 0.0
    %610 = vmatmul.mubr.f32.gmra.mxu0 %v491
    %v611 = vpop.f32.mrf.mxu0
    %v612 = vadd.f32 0.0, %v611
    %v613 = vpop.f32.mrf.mxu0
    %614 = vmatprep.mubr.f32.mxu0 0.0
    %615 = vmatmul.mubr.f32.gmra.mxu0 %v494
    %v616 = vpop.f32.mrf.mxu0
    %v617 = vadd.f32 0.0, %v616
    %v618 = vpop.f32.mrf.mxu0
    %619 = vmatprep.mubr.f32.mxu0 0.0
    %620 = vmatmul.mubr.f32.gmra.mxu0 %v497
    %v621 = vpop.f32.mrf.mxu0
    %v622 = vadd.f32 0.0, %v621
    %v623 = vpop.f32.mrf.mxu0
    %624 = vmatprep.mubr.f32.mxu0 0.0
    %625 = vmatmul.mubr.f32.gmra.mxu0 %v500
    %v626 = vpop.f32.mrf.mxu0
    %v627 = vadd.f32 0.0, %v626
    %v628 = vpop.f32.mrf.mxu0
    %629 = vmatprep.mubr.f32.mxu0 0.0
    %630 = vmatmul.mubr.f32.gmra.mxu0 %v503
    %v631 = vpop.f32.mrf.mxu0
    %v632 = vadd.f32 0.0, %v631
    %v633 = vpop.f32.mrf.mxu0
    %634 = vmatprep.mubr.f32.mxu0 0.0
    %635 = vmatmul.mubr.f32.gmra.mxu0 %v506
    %v636 = vpop.f32.mrf.mxu0
    %v637 = vadd.f32 0.0, %v636
    %v638 = vpop.f32.mrf.mxu0
    %639 = vmatprep.mubr.f32.mxu0 0.0
    %640 = vmatmul.mubr.f32.gmra.mxu0 %v509
    %v641 = vpop.f32.mrf.mxu0
    %v642 = vadd.f32 0.0, %v641
    %v643 = vpop.f32.mrf.mxu0
    %644 = vmatprep.mubr.f32.mxu0 0.0
    %645 = vmatmul.mubr.f32.gmra.mxu0 %v512
    %v646 = vpop.f32.mrf.mxu0
    %v647 = vadd.f32 0.0, %v646
    %v648 = vpop.f32.mrf.mxu0
    %649 = vmatprep.mubr.f32.mxu0 0.0
    %650 = vmatmul.mubr.f32.gmra.mxu0 %v515
    %v651 = vpop.f32.mrf.mxu0
    %v652 = vadd.f32 0.0, %v651
    %v653 = vpop.f32.mrf.mxu0
    %654 = vmatprep.mubr.f32.mxu0 0.0
    %655 = vmatmul.mubr.f32.gmra.mxu0 %v518
    %v656 = vpop.f32.mrf.mxu0
    %v657 = vadd.f32 0.0, %v656
    %v658 = vpop.f32.mrf.mxu0
    %659 = vmatprep.mubr.f32.mxu0 0.0
    %660 = vmatmul.mubr.f32.gmra.mxu0 %v521
    %v661 = vpop.f32.mrf.mxu0
    %v662 = vadd.f32 0.0, %v661
    %v663 = vpop.f32.mrf.mxu0
    %664 = vmatprep.mubr.f32.mxu0 0.0
    %665 = vmatmul.mubr.f32.gmra.mxu0 %v524
    %v666 = vpop.f32.mrf.mxu0
    %v667 = vadd.f32 0.0, %v666
    %v668 = vpop.f32.mrf.mxu0
    %669 = vmatprep.mubr.f32.mxu0 0.0
    %670 = vmatmul.mubr.f32.gmra.mxu0 %v527
    %v671 = vpop.f32.mrf.mxu0
    %v672 = vadd.f32 0.0, %v671
    %v673 = vpop.f32.mrf.mxu0
    %674 = vmatprep.mubr.f32.mxu0 0.0
    %675 = vmatmul.mubr.f32.gmra.mxu0 %v530
    %v676 = vpop.f32.mrf.mxu0
    %v677 = vadd.f32 0.0, %v676
    %v678 = vpop.f32.mrf.mxu0
    %679 = vdwg.mxu0
    %v680 = vadd.f32 %v388, %v602
    %v681 = vadd.f32 %v393, %v607
    %v682 = vadd.f32 %v398, %v612
    %v683 = vadd.f32 %v403, %v617
    %v684 = vadd.f32 %v408, %v622
    %v685 = vadd.f32 %v413, %v627
    %v686 = vadd.f32 %v418, %v632
    %v687 = vadd.f32 %v423, %v637
    %v688 = vadd.f32 %v428, %v642
    %v689 = vadd.f32 %v433, %v647
    %v690 = vadd.f32 %v438, %v652
    %v691 = vadd.f32 %v443, %v657
    %v692 = vadd.f32 %v448, %v662
    %v693 = vadd.f32 %v453, %v667
    %v694 = vadd.f32 %v458, %v672
    %v695 = vadd.f32 %v463, %v677
    %s696 = scalar_lea.vmem %s0, 576
    %v697 = vld [vmem:[%s696] sm:$0xff]
    %v698 = vld [vmem:[%s696 + $0x10] sm:$0xff]
    %v699 = vld [vmem:[%s696 + $0x20] sm:$0xff]
    %v700 = vld [vmem:[%s696 + $0x30] sm:$0xff]
    %v701 = vld [vmem:[%s696 + $0x40] sm:$0xff]
    %v702 = vld [vmem:[%s696 + $0x50] sm:$0xff]
    %v703 = vld [vmem:[%s696 + $0x60] sm:$0xff]
    %v704 = vld [vmem:[%s696 + $0x70] sm:$0xff]
    %v705 = vld [vmem:[%s696 + $0x90] sm:$0xff]
    %v706 = vld [vmem:[%s696 + $0xa0] sm:$0xff]
    %v707 = vld [vmem:[%s696 + $0xb0] sm:$0xff]
    %v708 = vld [vmem:[%s696 + $0xc0] sm:$0xff]
    %v709 = vld [vmem:[%s696 + $0xd0] sm:$0xff]
    %v710 = vld [vmem:[%s696 + $0xe0] sm:$0xff]
    %v711 = vld [vmem:[%s696 + $0xf0] sm:$0xff]
    %v712 = vld [vmem:[%s696 + $0x100] sm:$0xff]
    %s713 = scalar_lea.vmem %s1, 12
    %v714 = vld [vmem:[%s713] sm:$0xf]
    %v716 = vsel %vm72, %v697, 0
    %v719 = vsel %vm72, %v698, 0
    %v722 = vsel %vm72, %v699, 0
    %v725 = vsel %vm72, %v700, 0
    %v728 = vsel %vm72, %v701, 0
    %v731 = vsel %vm72, %v702, 0
    %v734 = vsel %vm72, %v703, 0
    %v737 = vsel %vm72, %v704, 0
    %v740 = vsel %vm72, %v705, 0
    %v743 = vsel %vm72, %v706, 0
    %v746 = vsel %vm72, %v707, 0
    %v749 = vsel %vm72, %v708, 0
    %v752 = vsel %vm72, %v709, 0
    %v755 = vsel %vm72, %v710, 0
    %v758 = vsel %vm72, %v711, 0
    %v761 = vsel %vm72, %v712, 0
    %v764 = vsel %vm121, %v714, 0
    %766 = vmatprep.subr.mxu0 0.0
    %767 = vmatpush1.msra.mxu0 0.0
    %768 = vmatprep.subr.mxu0 0.0
    %769 = vmatpush1.msra.mxu0 0.0
    %770 = vmatprep.subr.mxu0 0.0
    %771 = vmatpush1.msra.mxu0 0.0
    %772 = vmatprep.subr.mxu0 0.0
    %773 = vmatpush1.msra.mxu0 0.0
    %774 = vmatprep.subr.mxu0 0.0
    %775 = vmatpush1.msra.mxu0 0.0
    %776 = vmatprep.subr.mxu0 0.0
    %777 = vmatpush1.msra.mxu0 0.0
    %778 = vmatprep.subr.mxu0 0.0
    %779 = vmatpush1.msra.mxu0 0.0
    %780 = vmatprep.subr.mxu0 0.0
    %781 = vmatpush1.msra.mxu0 0.0
    %782 = vmatprep.subr.mxu0 0.0
    %783 = vmatpush1.msra.mxu0 0.0
    %784 = vmatprep.subr.mxu0 0.0
    %785 = vmatpush1.msra.mxu0 0.0
    %786 = vmatprep.subr.mxu0 0.0
    %787 = vmatpush1.msra.mxu0 0.0
    %788 = vmatprep.subr.mxu0 0.0
    %789 = vmatpush1.msra.mxu0 0.0
    %790 = vmatprep.subr.mxu0 0.0
    %791 = vmatpush1.msra.mxu0 0.0
    %792 = vmatprep.subr.mxu0 0.0
    %793 = vmatpush1.msra.mxu0 0.0
    %794 = vmatprep.subr.mxu0 0.0
    %795 = vmatpush1.msra.mxu0 0.0
    %796 = vmatprep.subr.mxu0 0.0
    %797 = vmatpush1.msra.mxu0 %v764
    %798 = vmatprep.subr.mxu0 0.0
    %799 = vmatpush2.msra.mxu0 0.0
    %800 = vmatprep.subr.mxu0 0.0
    %801 = vmatpush2.msra.mxu0 0.0
    %802 = vmatprep.subr.mxu0 0.0
    %803 = vmatpush2.msra.mxu0 0.0
    %804 = vmatprep.subr.mxu0 0.0
    %805 = vmatpush2.msra.mxu0 0.0
    %806 = vmatprep.subr.mxu0 0.0
    %807 = vmatpush2.msra.mxu0 0.0
    %808 = vmatprep.subr.mxu0 0.0
    %809 = vmatpush2.msra.mxu0 0.0
    %810 = vmatprep.subr.mxu0 0.0
    %811 = vmatpush2.msra.mxu0 0.0
    %812 = vmatprep.subr.mxu0 0.0
    %813 = vmatpush2.msra.mxu0 0.0
    %814 = vmatprep.subr.mxu0 0.0
    %815 = vmatpush2.msra.mxu0 0.0
    %816 = vmatprep.subr.mxu0 0.0
    %817 = vmatpush2.msra.mxu0 0.0
    %818 = vmatprep.subr.mxu0 0.0
    %819 = vmatpush2.msra.mxu0 0.0
    %820 = vmatprep.subr.mxu0 0.0
    %821 = vmatpush2.msra.mxu0 0.0
    %822 = vmatprep.subr.mxu0 0.0
    %823 = vmatpush2.msra.mxu0 0.0
    %824 = vmatprep.subr.mxu0 0.0
    %825 = vmatpush2.msra.mxu0 0.0
    %826 = vmatprep.subr.mxu0 0.0
    %827 = vmatpush2.msra.mxu0 0.0
    %828 = vmatprep.subr.mxu0 0.0
    %829 = vmatpush2.msra.mxu0 0.0
    %830 = vmatprep.mubr.f32.mxu0 0.0
    %831 = vmatmul.mubr.f32.gmra.mxu0 %v716
    %v832 = vpop.f32.mrf.mxu0
    %v833 = vadd.f32 0.0, %v832
    %v834 = vpop.f32.mrf.mxu0
    %835 = vmatprep.mubr.f32.mxu0 0.0
    %836 = vmatmul.mubr.f32.gmra.mxu0 %v719
    %v837 = vpop.f32.mrf.mxu0
    %v838 = vadd.f32 0.0, %v837
    %v839 = vpop.f32.mrf.mxu0
    %840 = vmatprep.mubr.f32.mxu0 0.0
    %841 = vmatmul.mubr.f32.gmra.mxu0 %v722
    %v842 = vpop.f32.mrf.mxu0
    %v843 = vadd.f32 0.0, %v842
    %v844 = vpop.f32.mrf.mxu0
    %845 = vmatprep.mubr.f32.mxu0 0.0
    %846 = vmatmul.mubr.f32.gmra.mxu0 %v725
    %v847 = vpop.f32.mrf.mxu0
    %v848 = vadd.f32 0.0, %v847
    %v849 = vpop.f32.mrf.mxu0
    %850 = vmatprep.mubr.f32.mxu0 0.0
    %851 = vmatmul.mubr.f32.gmra.mxu0 %v728
    %v852 = vpop.f32.mrf.mxu0
    %v853 = vadd.f32 0.0, %v852
    %v854 = vpop.f32.mrf.mxu0
    %855 = vmatprep.mubr.f32.mxu0 0.0
    %856 = vmatmul.mubr.f32.gmra.mxu0 %v731
    %v857 = vpop.f32.mrf.mxu0
    %v858 = vadd.f32 0.0, %v857
    %v859 = vpop.f32.mrf.mxu0
    %860 = vmatprep.mubr.f32.mxu0 0.0
    %861 = vmatmul.mubr.f32.gmra.mxu0 %v734
    %v862 = vpop.f32.mrf.mxu0
    %v863 = vadd.f32 0.0, %v862
    %v864 = vpop.f32.mrf.mxu0
    %865 = vmatprep.mubr.f32.mxu0 0.0
    %866 = vmatmul.mubr.f32.gmra.mxu0 %v737
    %v867 = vpop.f32.mrf.mxu0
    %v868 = vadd.f32 0.0, %v867
    %v869 = vpop.f32.mrf.mxu0
    %870 = vmatprep.mubr.f32.mxu0 0.0
    %871 = vmatmul.mubr.f32.gmra.mxu0 %v740
    %v872 = vpop.f32.mrf.mxu0
    %v873 = vadd.f32 0.0, %v872
    %v874 = vpop.f32.mrf.mxu0
    %875 = vmatprep.mubr.f32.mxu0 0.0
    %876 = vmatmul.mubr.f32.gmra.mxu0 %v743
    %v877 = vpop.f32.mrf.mxu0
    %v878 = vadd.f32 0.0, %v877
    %v879 = vpop.f32.mrf.mxu0
    %880 = vmatprep.mubr.f32.mxu0 0.0
    %881 = vmatmul.mubr.f32.gmra.mxu0 %v746
    %v882 = vpop.f32.mrf.mxu0
    %v883 = vadd.f32 0.0, %v882
    %v884 = vpop.f32.mrf.mxu0
    %885 = vmatprep.mubr.f32.mxu0 0.0
    %886 = vmatmul.mubr.f32.gmra.mxu0 %v749
    %v887 = vpop.f32.mrf.mxu0
    %v888 = vadd.f32 0.0, %v887
    %v889 = vpop.f32.mrf.mxu0
    %890 = vmatprep.mubr.f32.mxu0 0.0
    %891 = vmatmul.mubr.f32.gmra.mxu0 %v752
    %v892 = vpop.f32.mrf.mxu0
    %v893 = vadd.f32 0.0, %v892
    %v894 = vpop.f32.mrf.mxu0
    %895 = vmatprep.mubr.f32.mxu0 0.0
    %896 = vmatmul.mubr.f32.gmra.mxu0 %v755
    %v897 = vpop.f32.mrf.mxu0
    %v898 = vadd.f32 0.0, %v897
    %v899 = vpop.f32.mrf.mxu0
    %900 = vmatprep.mubr.f32.mxu0 0.0
    %901 = vmatmul.mubr.f32.gmra.mxu0 %v758
    %v902 = vpop.f32.mrf.mxu0
    %v903 = vadd.f32 0.0, %v902
    %v904 = vpop.f32.mrf.mxu0
    %905 = vmatprep.mubr.f32.mxu0 0.0
    %906 = vmatmul.mubr.f32.gmra.mxu0 %v761
    %v907 = vpop.f32.mrf.mxu0
    %v908 = vadd.f32 0.0, %v907
    %v909 = vpop.f32.mrf.mxu0
    %910 = vdwg.mxu0
    %v911 = vadd.f32 %v680, %v833
    %v912 = vadd.f32 %v681, %v838
    %v913 = vadd.f32 %v682, %v843
    %v914 = vadd.f32 %v683, %v848
    %v915 = vadd.f32 %v684, %v853
    %v916 = vadd.f32 %v685, %v858
    %v917 = vadd.f32 %v686, %v863
    %v918 = vadd.f32 %v687, %v868
    %v919 = vadd.f32 %v688, %v873
    %v920 = vadd.f32 %v689, %v878
    %v921 = vadd.f32 %v690, %v883
    %v922 = vadd.f32 %v691, %v888
    %v923 = vadd.f32 %v692, %v893
    %v924 = vadd.f32 %v693, %v898
    %v925 = vadd.f32 %v694, %v903
    %v926 = vadd.f32 %v695, %v908
    %s927 = scalar_lea.vmem %s0, 864
    %v928 = vld [vmem:[%s927] sm:$0xff]
    %v929 = vld [vmem:[%s927 + $0x10] sm:$0xff]
    %v930 = vld [vmem:[%s927 + $0x20] sm:$0xff]
    %v931 = vld [vmem:[%s927 + $0x30] sm:$0xff]
    %v932 = vld [vmem:[%s927 + $0x40] sm:$0xff]
    %v933 = vld [vmem:[%s927 + $0x50] sm:$0xff]
    %v934 = vld [vmem:[%s927 + $0x60] sm:$0xff]
    %v935 = vld [vmem:[%s927 + $0x70] sm:$0xff]
    %v936 = vld [vmem:[%s927 + $0x90] sm:$0xff]
    %v937 = vld [vmem:[%s927 + $0xa0] sm:$0xff]
    %v938 = vld [vmem:[%s927 + $0xb0] sm:$0xff]
    %v939 = vld [vmem:[%s927 + $0xc0] sm:$0xff]
    %v940 = vld [vmem:[%s927 + $0xd0] sm:$0xff]
    %v941 = vld [vmem:[%s927 + $0xe0] sm:$0xff]
    %v942 = vld [vmem:[%s927 + $0xf0] sm:$0xff]
    %v943 = vld [vmem:[%s927 + $0x100] sm:$0xff]
    %s944 = scalar_lea.vmem %s1, 16
    %v945 = vld [vmem:[%s944] sm:$0xf]
    %v947 = vsel %vm72, %v928, 0
    %v950 = vsel %vm72, %v929, 0
    %v953 = vsel %vm72, %v930, 0
    %v956 = vsel %vm72, %v931, 0
    %v959 = vsel %vm72, %v932, 0
    %v962 = vsel %vm72, %v933, 0
    %v965 = vsel %vm72, %v934, 0
    %v968 = vsel %vm72, %v935, 0
    %v971 = vsel %vm72, %v936, 0
    %v974 = vsel %vm72, %v937, 0
    %v977 = vsel %vm72, %v938, 0
    %v980 = vsel %vm72, %v939, 0
    %v983 = vsel %vm72, %v940, 0
    %v986 = vsel %vm72, %v941, 0
    %v989 = vsel %vm72, %v942, 0
    %v992 = vsel %vm72, %v943, 0
    %v995 = vsel %vm121, %v945, 0
    %997 = vmatprep.subr.mxu0 0.0
    %998 = vmatpush1.msra.mxu0 0.0
    %999 = vmatprep.subr.mxu0 0.0
    %1000 = vmatpush1.msra.mxu0 0.0
    %1001 = vmatprep.subr.mxu0 0.0
    %1002 = vmatpush1.msra.mxu0 0.0
    %1003 = vmatprep.subr.mxu0 0.0
    %1004 = vmatpush1.msra.mxu0 0.0
    %1005 = vmatprep.subr.mxu0 0.0
    %1006 = vmatpush1.msra.mxu0 0.0
    %1007 = vmatprep.subr.mxu0 0.0
    %1008 = vmatpush1.msra.mxu0 0.0
    %1009 = vmatprep.subr.mxu0 0.0
    %1010 = vmatpush1.msra.mxu0 0.0
    %1011 = vmatprep.subr.mxu0 0.0
    %1012 = vmatpush1.msra.mxu0 0.0
    %1013 = vmatprep.subr.mxu0 0.0
    %1014 = vmatpush1.msra.mxu0 0.0
    %1015 = vmatprep.subr.mxu0 0.0
    %1016 = vmatpush1.msra.mxu0 0.0
    %1017 = vmatprep.subr.mxu0 0.0
    %1018 = vmatpush1.msra.mxu0 0.0
    %1019 = vmatprep.subr.mxu0 0.0
    %1020 = vmatpush1.msra.mxu0 0.0
    %1021 = vmatprep.subr.mxu0 0.0
    %1022 = vmatpush1.msra.mxu0 0.0
    %1023 = vmatprep.subr.mxu0 0.0
    %1024 = vmatpush1.msra.mxu0 0.0
    %1025 = vmatprep.subr.mxu0 0.0
    %1026 = vmatpush1.msra.mxu0 0.0
    %1027 = vmatprep.subr.mxu0 0.0
    %1028 = vmatpush1.msra.mxu0 %v995
    %1029 = vmatprep.subr.mxu0 0.0
    %1030 = vmatpush2.msra.mxu0 0.0
    %1031 = vmatprep.subr.mxu0 0.0
    %1032 = vmatpush2.msra.mxu0 0.0
    %1033 = vmatprep.subr.mxu0 0.0
    %1034 = vmatpush2.msra.mxu0 0.0
    %1035 = vmatprep.subr.mxu0 0.0
    %1036 = vmatpush2.msra.mxu0 0.0
    %1037 = vmatprep.subr.mxu0 0.0
    %1038 = vmatpush2.msra.mxu0 0.0
    %1039 = vmatprep.subr.mxu0 0.0
    %1040 = vmatpush2.msra.mxu0 0.0
    %1041 = vmatprep.subr.mxu0 0.0
    %1042 = vmatpush2.msra.mxu0 0.0
    %1043 = vmatprep.subr.mxu0 0.0
    %1044 = vmatpush2.msra.mxu0 0.0
    %1045 = vmatprep.subr.mxu0 0.0
    %1046 = vmatpush2.msra.mxu0 0.0
    %1047 = vmatprep.subr.mxu0 0.0
    %1048 = vmatpush2.msra.mxu0 0.0
    %1049 = vmatprep.subr.mxu0 0.0
    %1050 = vmatpush2.msra.mxu0 0.0
    %1051 = vmatprep.subr.mxu0 0.0
    %1052 = vmatpush2.msra.mxu0 0.0
    %1053 = vmatprep.subr.mxu0 0.0
    %1054 = vmatpush2.msra.mxu0 0.0
    %1055 = vmatprep.subr.mxu0 0.0
    %1056 = vmatpush2.msra.mxu0 0.0
    %1057 = vmatprep.subr.mxu0 0.0
    %1058 = vmatpush2.msra.mxu0 0.0
    %1059 = vmatprep.subr.mxu0 0.0
    %1060 = vmatpush2.msra.mxu0 0.0
    %1061 = vmatprep.mubr.f32.mxu0 0.0
    %1062 = vmatmul.mubr.f32.gmra.mxu0 %v947
    %v1063 = vpop.f32.mrf.mxu0
    %v1064 = vadd.f32 0.0, %v1063
    %v1065 = vpop.f32.mrf.mxu0
    %1066 = vmatprep.mubr.f32.mxu0 0.0
    %1067 = vmatmul.mubr.f32.gmra.mxu0 %v950
    %v1068 = vpop.f32.mrf.mxu0
    %v1069 = vadd.f32 0.0, %v1068
    %v1070 = vpop.f32.mrf.mxu0
    %1071 = vmatprep.mubr.f32.mxu0 0.0
    %1072 = vmatmul.mubr.f32.gmra.mxu0 %v953
    %v1073 = vpop.f32.mrf.mxu0
    %v1074 = vadd.f32 0.0, %v1073
    %v1075 = vpop.f32.mrf.mxu0
    %1076 = vmatprep.mubr.f32.mxu0 0.0
    %1077 = vmatmul.mubr.f32.gmra.mxu0 %v956
    %v1078 = vpop.f32.mrf.mxu0
    %v1079 = vadd.f32 0.0, %v1078
    %v1080 = vpop.f32.mrf.mxu0
    %1081 = vmatprep.mubr.f32.mxu0 0.0
    %1082 = vmatmul.mubr.f32.gmra.mxu0 %v959
    %v1083 = vpop.f32.mrf.mxu0
    %v1084 = vadd.f32 0.0, %v1083
    %v1085 = vpop.f32.mrf.mxu0
    %1086 = vmatprep.mubr.f32.mxu0 0.0
    %1087 = vmatmul.mubr.f32.gmra.mxu0 %v962
    %v1088 = vpop.f32.mrf.mxu0
    %v1089 = vadd.f32 0.0, %v1088
    %v1090 = vpop.f32.mrf.mxu0
    %1091 = vmatprep.mubr.f32.mxu0 0.0
    %1092 = vmatmul.mubr.f32.gmra.mxu0 %v965
    %v1093 = vpop.f32.mrf.mxu0
    %v1094 = vadd.f32 0.0, %v1093
    %v1095 = vpop.f32.mrf.mxu0
    %1096 = vmatprep.mubr.f32.mxu0 0.0
    %1097 = vmatmul.mubr.f32.gmra.mxu0 %v968
    %v1098 = vpop.f32.mrf.mxu0
    %v1099 = vadd.f32 0.0, %v1098
    %v1100 = vpop.f32.mrf.mxu0
    %1101 = vmatprep.mubr.f32.mxu0 0.0
    %1102 = vmatmul.mubr.f32.gmra.mxu0 %v971
    %v1103 = vpop.f32.mrf.mxu0
    %v1104 = vadd.f32 0.0, %v1103
    %v1105 = vpop.f32.mrf.mxu0
    %1106 = vmatprep.mubr.f32.mxu0 0.0
    %1107 = vmatmul.mubr.f32.gmra.mxu0 %v974
    %v1108 = vpop.f32.mrf.mxu0
    %v1109 = vadd.f32 0.0, %v1108
    %v1110 = vpop.f32.mrf.mxu0
    %1111 = vmatprep.mubr.f32.mxu0 0.0
    %1112 = vmatmul.mubr.f32.gmra.mxu0 %v977
    %v1113 = vpop.f32.mrf.mxu0
    %v1114 = vadd.f32 0.0, %v1113
    %v1115 = vpop.f32.mrf.mxu0
    %1116 = vmatprep.mubr.f32.mxu0 0.0
    %1117 = vmatmul.mubr.f32.gmra.mxu0 %v980
    %v1118 = vpop.f32.mrf.mxu0
    %v1119 = vadd.f32 0.0, %v1118
    %v1120 = vpop.f32.mrf.mxu0
    %1121 = vmatprep.mubr.f32.mxu0 0.0
    %1122 = vmatmul.mubr.f32.gmra.mxu0 %v983
    %v1123 = vpop.f32.mrf.mxu0
    %v1124 = vadd.f32 0.0, %v1123
    %v1125 = vpop.f32.mrf.mxu0
    %1126 = vmatprep.mubr.f32.mxu0 0.0
    %1127 = vmatmul.mubr.f32.gmra.mxu0 %v986
    %v1128 = vpop.f32.mrf.mxu0
    %v1129 = vadd.f32 0.0, %v1128
    %v1130 = vpop.f32.mrf.mxu0
    %1131 = vmatprep.mubr.f32.mxu0 0.0
    %1132 = vmatmul.mubr.f32.gmra.mxu0 %v989
    %v1133 = vpop.f32.mrf.mxu0
    %v1134 = vadd.f32 0.0, %v1133
    %v1135 = vpop.f32.mrf.mxu0
    %1136 = vmatprep.mubr.f32.mxu0 0.0
    %1137 = vmatmul.mubr.f32.gmra.mxu0 %v992
    %v1138 = vpop.f32.mrf.mxu0
    %v1139 = vadd.f32 0.0, %v1138
    %v1140 = vpop.f32.mrf.mxu0
    %1141 = vdwg.mxu0
    %v1142 = vadd.f32 %v911, %v1064
    %v1143 = vadd.f32 %v912, %v1069
    %v1144 = vadd.f32 %v913, %v1074
    %v1145 = vadd.f32 %v914, %v1079
    %v1146 = vadd.f32 %v915, %v1084
    %v1147 = vadd.f32 %v916, %v1089
    %v1148 = vadd.f32 %v917, %v1094
    %v1149 = vadd.f32 %v918, %v1099
    %v1150 = vadd.f32 %v919, %v1104
    %v1151 = vadd.f32 %v920, %v1109
    %v1152 = vadd.f32 %v921, %v1114
    %v1153 = vadd.f32 %v922, %v1119
    %v1154 = vadd.f32 %v923, %v1124
    %v1155 = vadd.f32 %v924, %v1129
    %v1156 = vadd.f32 %v925, %v1134
    %v1157 = vadd.f32 %v926, %v1139
    %v1158 = vld [vmem:[%s696 + $0x1] sm:$0xff]
    %v1159 = vld [vmem:[%s696 + $0x11] sm:$0xff]
    %v1160 = vld [vmem:[%s696 + $0x21] sm:$0xff]
    %v1161 = vld [vmem:[%s696 + $0x31] sm:$0xff]
    %v1162 = vld [vmem:[%s696 + $0x41] sm:$0xff]
    %v1163 = vld [vmem:[%s696 + $0x51] sm:$0xff]
    %v1164 = vld [vmem:[%s696 + $0x61] sm:$0xff]
    %v1165 = vld [vmem:[%s696 + $0x71] sm:$0xff]
    %v1166 = vld [vmem:[%s696 + $0x91] sm:$0xff]
    %v1167 = vld [vmem:[%s696 + $0xa1] sm:$0xff]
    %v1168 = vld [vmem:[%s696 + $0xb1] sm:$0xff]
    %v1169 = vld [vmem:[%s696 + $0xc1] sm:$0xff]
    %v1170 = vld [vmem:[%s696 + $0xd1] sm:$0xff]
    %v1171 = vld [vmem:[%s696 + $0xe1] sm:$0xff]
    %v1172 = vld [vmem:[%s696 + $0xf1] sm:$0xff]
    %v1173 = vld [vmem:[%s696 + $0x101] sm:$0xff]
    %s1174 = scalar_lea.vmem %s1, 20
    %v1175 = vld [vmem:[%s1174] sm:$0xf]
    %v1177 = vsel %vm72, %v1158, 0
    %v1180 = vsel %vm72, %v1159, 0
    %v1183 = vsel %vm72, %v1160, 0
    %v1186 = vsel %vm72, %v1161, 0
    %v1189 = vsel %vm72, %v1162, 0
    %v1192 = vsel %vm72, %v1163, 0
    %v1195 = vsel %vm72, %v1164, 0
    %v1198 = vsel %vm72, %v1165, 0
    %v1201 = vsel %vm72, %v1166, 0
    %v1204 = vsel %vm72, %v1167, 0
    %v1207 = vsel %vm72, %v1168, 0
    %v1210 = vsel %vm72, %v1169, 0
    %v1213 = vsel %vm72, %v1170, 0
    %v1216 = vsel %vm72, %v1171, 0
    %v1219 = vsel %vm72, %v1172, 0
    %v1222 = vsel %vm72, %v1173, 0
    %v1225 = vsel %vm121, %v1175, 0
    %1227 = vmatprep.subr.mxu0 0.0
    %1228 = vmatpush1.msra.mxu0 0.0
    %1229 = vmatprep.subr.mxu0 0.0
    %1230 = vmatpush1.msra.mxu0 0.0
    %1231 = vmatprep.subr.mxu0 0.0
    %1232 = vmatpush1.msra.mxu0 0.0
    %1233 = vmatprep.subr.mxu0 0.0
    %1234 = vmatpush1.msra.mxu0 0.0
    %1235 = vmatprep.subr.mxu0 0.0
    %1236 = vmatpush1.msra.mxu0 0.0
    %1237 = vmatprep.subr.mxu0 0.0
    %1238 = vmatpush1.msra.mxu0 0.0
    %1239 = vmatprep.subr.mxu0 0.0
    %1240 = vmatpush1.msra.mxu0 0.0
    %1241 = vmatprep.subr.mxu0 0.0
    %1242 = vmatpush1.msra.mxu0 0.0
    %1243 = vmatprep.subr.mxu0 0.0
    %1244 = vmatpush1.msra.mxu0 0.0
    %1245 = vmatprep.subr.mxu0 0.0
    %1246 = vmatpush1.msra.mxu0 0.0
    %1247 = vmatprep.subr.mxu0 0.0
    %1248 = vmatpush1.msra.mxu0 0.0
    %1249 = vmatprep.subr.mxu0 0.0
    %1250 = vmatpush1.msra.mxu0 0.0
    %1251 = vmatprep.subr.mxu0 0.0
    %1252 = vmatpush1.msra.mxu0 0.0
    %1253 = vmatprep.subr.mxu0 0.0
    %1254 = vmatpush1.msra.mxu0 0.0
    %1255 = vmatprep.subr.mxu0 0.0
    %1256 = vmatpush1.msra.mxu0 0.0
    %1257 = vmatprep.subr.mxu0 0.0
    %1258 = vmatpush1.msra.mxu0 %v1225
    %1259 = vmatprep.subr.mxu0 0.0
    %1260 = vmatpush2.msra.mxu0 0.0
    %1261 = vmatprep.subr.mxu0 0.0
    %1262 = vmatpush2.msra.mxu0 0.0
    %1263 = vmatprep.subr.mxu0 0.0
    %1264 = vmatpush2.msra.mxu0 0.0
    %1265 = vmatprep.subr.mxu0 0.0
    %1266 = vmatpush2.msra.mxu0 0.0
    %1267 = vmatprep.subr.mxu0 0.0
    %1268 = vmatpush2.msra.mxu0 0.0
    %1269 = vmatprep.subr.mxu0 0.0
    %1270 = vmatpush2.msra.mxu0 0.0
    %1271 = vmatprep.subr.mxu0 0.0
    %1272 = vmatpush2.msra.mxu0 0.0
    %1273 = vmatprep.subr.mxu0 0.0
    %1274 = vmatpush2.msra.mxu0 0.0
    %1275 = vmatprep.subr.mxu0 0.0
    %1276 = vmatpush2.msra.mxu0 0.0
    %1277 = vmatprep.subr.mxu0 0.0
    %1278 = vmatpush2.msra.mxu0 0.0
    %1279 = vmatprep.subr.mxu0 0.0
    %1280 = vmatpush2.msra.mxu0 0.0
    %1281 = vmatprep.subr.mxu0 0.0
    %1282 = vmatpush2.msra.mxu0 0.0
    %1283 = vmatprep.subr.mxu0 0.0
    %1284 = vmatpush2.msra.mxu0 0.0
    %1285 = vmatprep.subr.mxu0 0.0
    %1286 = vmatpush2.msra.mxu0 0.0
    %1287 = vmatprep.subr.mxu0 0.0
    %1288 = vmatpush2.msra.mxu0 0.0
    %1289 = vmatprep.subr.mxu0 0.0
    %1290 = vmatpush2.msra.mxu0 0.0
    %1291 = vmatprep.mubr.f32.mxu0 0.0
    %1292 = vmatmul.mubr.f32.gmra.mxu0 %v1177
    %v1293 = vpop.f32.mrf.mxu0
    %v1294 = vadd.f32 0.0, %v1293
    %v1295 = vpop.f32.mrf.mxu0
    %1296 = vmatprep.mubr.f32.mxu0 0.0
    %1297 = vmatmul.mubr.f32.gmra.mxu0 %v1180
    %v1298 = vpop.f32.mrf.mxu0
    %v1299 = vadd.f32 0.0, %v1298
    %v1300 = vpop.f32.mrf.mxu0
    %1301 = vmatprep.mubr.f32.mxu0 0.0
    %1302 = vmatmul.mubr.f32.gmra.mxu0 %v1183
    %v1303 = vpop.f32.mrf.mxu0
    %v1304 = vadd.f32 0.0, %v1303
    %v1305 = vpop.f32.mrf.mxu0
    %1306 = vmatprep.mubr.f32.mxu0 0.0
    %1307 = vmatmul.mubr.f32.gmra.mxu0 %v1186
    %v1308 = vpop.f32.mrf.mxu0
    %v1309 = vadd.f32 0.0, %v1308
    %v1310 = vpop.f32.mrf.mxu0
    %1311 = vmatprep.mubr.f32.mxu0 0.0
    %1312 = vmatmul.mubr.f32.gmra.mxu0 %v1189
    %v1313 = vpop.f32.mrf.mxu0
    %v1314 = vadd.f32 0.0, %v1313
    %v1315 = vpop.f32.mrf.mxu0
    %1316 = vmatprep.mubr.f32.mxu0 0.0
    %1317 = vmatmul.mubr.f32.gmra.mxu0 %v1192
    %v1318 = vpop.f32.mrf.mxu0
    %v1319 = vadd.f32 0.0, %v1318
    %v1320 = vpop.f32.mrf.mxu0
    %1321 = vmatprep.mubr.f32.mxu0 0.0
    %1322 = vmatmul.mubr.f32.gmra.mxu0 %v1195
    %v1323 = vpop.f32.mrf.mxu0
    %v1324 = vadd.f32 0.0, %v1323
    %v1325 = vpop.f32.mrf.mxu0
    %1326 = vmatprep.mubr.f32.mxu0 0.0
    %1327 = vmatmul.mubr.f32.gmra.mxu0 %v1198
    %v1328 = vpop.f32.mrf.mxu0
    %v1329 = vadd.f32 0.0, %v1328
    %v1330 = vpop.f32.mrf.mxu0
    %1331 = vmatprep.mubr.f32.mxu0 0.0
    %1332 = vmatmul.mubr.f32.gmra.mxu0 %v1201
    %v1333 = vpop.f32.mrf.mxu0
    %v1334 = vadd.f32 0.0, %v1333
    %v1335 = vpop.f32.mrf.mxu0
    %1336 = vmatprep.mubr.f32.mxu0 0.0
    %1337 = vmatmul.mubr.f32.gmra.mxu0 %v1204
    %v1338 = vpop.f32.mrf.mxu0
    %v1339 = vadd.f32 0.0, %v1338
    %v1340 = vpop.f32.mrf.mxu0
    %1341 = vmatprep.mubr.f32.mxu0 0.0
    %1342 = vmatmul.mubr.f32.gmra.mxu0 %v1207
    %v1343 = vpop.f32.mrf.mxu0
    %v1344 = vadd.f32 0.0, %v1343
    %v1345 = vpop.f32.mrf.mxu0
    %1346 = vmatprep.mubr.f32.mxu0 0.0
    %1347 = vmatmul.mubr.f32.gmra.mxu0 %v1210
    %v1348 = vpop.f32.mrf.mxu0
    %v1349 = vadd.f32 0.0, %v1348
    %v1350 = vpop.f32.mrf.mxu0
    %1351 = vmatprep.mubr.f32.mxu0 0.0
    %1352 = vmatmul.mubr.f32.gmra.mxu0 %v1213
    %v1353 = vpop.f32.mrf.mxu0
    %v1354 = vadd.f32 0.0, %v1353
    %v1355 = vpop.f32.mrf.mxu0
    %1356 = vmatprep.mubr.f32.mxu0 0.0
    %1357 = vmatmul.mubr.f32.gmra.mxu0 %v1216
    %v1358 = vpop.f32.mrf.mxu0
    %v1359 = vadd.f32 0.0, %v1358
    %v1360 = vpop.f32.mrf.mxu0
    %1361 = vmatprep.mubr.f32.mxu0 0.0
    %1362 = vmatmul.mubr.f32.gmra.mxu0 %v1219
    %v1363 = vpop.f32.mrf.mxu0
    %v1364 = vadd.f32 0.0, %v1363
    %v1365 = vpop.f32.mrf.mxu0
    %1366 = vmatprep.mubr.f32.mxu0 0.0
    %1367 = vmatmul.mubr.f32.gmra.mxu0 %v1222
    %v1368 = vpop.f32.mrf.mxu0
    %v1369 = vadd.f32 0.0, %v1368
    %v1370 = vpop.f32.mrf.mxu0
    %1371 = vdwg.mxu0
    %v1372 = vadd.f32 %v1142, %v1294
    %v1373 = vadd.f32 %v1143, %v1299
    %v1374 = vadd.f32 %v1144, %v1304
    %v1375 = vadd.f32 %v1145, %v1309
    %v1376 = vadd.f32 %v1146, %v1314
    %v1377 = vadd.f32 %v1147, %v1319
    %v1378 = vadd.f32 %v1148, %v1324
    %v1379 = vadd.f32 %v1149, %v1329
    %v1380 = vadd.f32 %v1150, %v1334
    %v1381 = vadd.f32 %v1151, %v1339
    %v1382 = vadd.f32 %v1152, %v1344
    %v1383 = vadd.f32 %v1153, %v1349
    %v1384 = vadd.f32 %v1154, %v1354
    %v1385 = vadd.f32 %v1155, %v1359
    %v1386 = vadd.f32 %v1156, %v1364
    %v1387 = vadd.f32 %v1157, %v1369
    %s1388 = scalar_lea.vmem %s0, 16
    %v1389 = vld [vmem:[%s1388] sm:$0xff]
    %v1390 = vld [vmem:[%s1388 + $0x10] sm:$0xff]
    %v1391 = vld [vmem:[%s1388 + $0x20] sm:$0xff]
    %v1392 = vld [vmem:[%s1388 + $0x30] sm:$0xff]
    %v1393 = vld [vmem:[%s1388 + $0x40] sm:$0xff]
    %v1394 = vld [vmem:[%s1388 + $0x50] sm:$0xff]
    %v1395 = vld [vmem:[%s1388 + $0x60] sm:$0xff]
    %v1396 = vld [vmem:[%s1388 + $0x70] sm:$0xff]
    %v1397 = vld [vmem:[%s1388 + $0x90] sm:$0xff]
    %v1398 = vld [vmem:[%s1388 + $0xa0] sm:$0xff]
    %v1399 = vld [vmem:[%s1388 + $0xb0] sm:$0xff]
    %v1400 = vld [vmem:[%s1388 + $0xc0] sm:$0xff]
    %v1401 = vld [vmem:[%s1388 + $0xd0] sm:$0xff]
    %v1402 = vld [vmem:[%s1388 + $0xe0] sm:$0xff]
    %v1403 = vld [vmem:[%s1388 + $0xf0] sm:$0xff]
    %v1404 = vld [vmem:[%s1388 + $0x100] sm:$0xff]
    %s1405 = scalar_lea.vmem %s1, 24
    %v1406 = vld [vmem:[%s1405] sm:$0xf]
    %v1408 = vsel %vm72, %v1389, 0
    %v1411 = vsel %vm72, %v1390, 0
    %v1414 = vsel %vm72, %v1391, 0
    %v1417 = vsel %vm72, %v1392, 0
    %v1420 = vsel %vm72, %v1393, 0
    %v1423 = vsel %vm72, %v1394, 0
    %v1426 = vsel %vm72, %v1395, 0
    %v1429 = vsel %vm72, %v1396, 0
    %v1432 = vsel %vm72, %v1397, 0
    %v1435 = vsel %vm72, %v1398, 0
    %v1438 = vsel %vm72, %v1399, 0
    %v1441 = vsel %vm72, %v1400, 0
    %v1444 = vsel %vm72, %v1401, 0
    %v1447 = vsel %vm72, %v1402, 0
    %v1450 = vsel %vm72, %v1403, 0
    %v1453 = vsel %vm72, %v1404, 0
    %v1456 = vsel %vm121, %v1406, 0
    %1458 = vmatprep.subr.mxu0 0.0
    %1459 = vmatpush1.msra.mxu0 0.0
    %1460 = vmatprep.subr.mxu0 0.0
    %1461 = vmatpush1.msra.mxu0 0.0
    %1462 = vmatprep.subr.mxu0 0.0
    %1463 = vmatpush1.msra.mxu0 0.0
    %1464 = vmatprep.subr.mxu0 0.0
    %1465 = vmatpush1.msra.mxu0 0.0
    %1466 = vmatprep.subr.mxu0 0.0
    %1467 = vmatpush1.msra.mxu0 0.0
    %1468 = vmatprep.subr.mxu0 0.0
    %1469 = vmatpush1.msra.mxu0 0.0
    %1470 = vmatprep.subr.mxu0 0.0
    %1471 = vmatpush1.msra.mxu0 0.0
    %1472 = vmatprep.subr.mxu0 0.0
    %1473 = vmatpush1.msra.mxu0 0.0
    %1474 = vmatprep.subr.mxu0 0.0
    %1475 = vmatpush1.msra.mxu0 0.0
    %1476 = vmatprep.subr.mxu0 0.0
    %1477 = vmatpush1.msra.mxu0 0.0
    %1478 = vmatprep.subr.mxu0 0.0
    %1479 = vmatpush1.msra.mxu0 0.0
    %1480 = vmatprep.subr.mxu0 0.0
    %1481 = vmatpush1.msra.mxu0 0.0
    %1482 = vmatprep.subr.mxu0 0.0
    %1483 = vmatpush1.msra.mxu0 0.0
    %1484 = vmatprep.subr.mxu0 0.0
    %1485 = vmatpush1.msra.mxu0 0.0
    %1486 = vmatprep.subr.mxu0 0.0
    %1487 = vmatpush1.msra.mxu0 0.0
    %1488 = vmatprep.subr.mxu0 0.0
    %1489 = vmatpush1.msra.mxu0 %v1456
    %1490 = vmatprep.subr.mxu0 0.0
    %1491 = vmatpush2.msra.mxu0 0.0
    %1492 = vmatprep.subr.mxu0 0.0
    %1493 = vmatpush2.msra.mxu0 0.0
    %1494 = vmatprep.subr.mxu0 0.0
    %1495 = vmatpush2.msra.mxu0 0.0
    %1496 = vmatprep.subr.mxu0 0.0
    %1497 = vmatpush2.msra.mxu0 0.0
    %1498 = vmatprep.subr.mxu0 0.0
    %1499 = vmatpush2.msra.mxu0 0.0
    %1500 = vmatprep.subr.mxu0 0.0
    %1501 = vmatpush2.msra.mxu0 0.0
    %1502 = vmatprep.subr.mxu0 0.0
    %1503 = vmatpush2.msra.mxu0 0.0
    %1504 = vmatprep.subr.mxu0 0.0
    %1505 = vmatpush2.msra.mxu0 0.0
    %1506 = vmatprep.subr.mxu0 0.0
    %1507 = vmatpush2.msra.mxu0 0.0
    %1508 = vmatprep.subr.mxu0 0.0
    %1509 = vmatpush2.msra.mxu0 0.0
    %1510 = vmatprep.subr.mxu0 0.0
    %1511 = vmatpush2.msra.mxu0 0.0
    %1512 = vmatprep.subr.mxu0 0.0
    %1513 = vmatpush2.msra.mxu0 0.0
    %1514 = vmatprep.subr.mxu0 0.0
    %1515 = vmatpush2.msra.mxu0 0.0
    %1516 = vmatprep.subr.mxu0 0.0
    %1517 = vmatpush2.msra.mxu0 0.0
    %1518 = vmatprep.subr.mxu0 0.0
    %1519 = vmatpush2.msra.mxu0 0.0
    %1520 = vmatprep.subr.mxu0 0.0
    %1521 = vmatpush2.msra.mxu0 0.0
    %1522 = vmatprep.mubr.f32.mxu0 0.0
    %1523 = vmatmul.mubr.f32.gmra.mxu0 %v1408
    %v1524 = vpop.f32.mrf.mxu0
    %v1525 = vadd.f32 0.0, %v1524
    %v1526 = vpop.f32.mrf.mxu0
    %1527 = vmatprep.mubr.f32.mxu0 0.0
    %1528 = vmatmul.mubr.f32.gmra.mxu0 %v1411
    %v1529 = vpop.f32.mrf.mxu0
    %v1530 = vadd.f32 0.0, %v1529
    %v1531 = vpop.f32.mrf.mxu0
    %1532 = vmatprep.mubr.f32.mxu0 0.0
    %1533 = vmatmul.mubr.f32.gmra.mxu0 %v1414
    %v1534 = vpop.f32.mrf.mxu0
    %v1535 = vadd.f32 0.0, %v1534
    %v1536 = vpop.f32.mrf.mxu0
    %1537 = vmatprep.mubr.f32.mxu0 0.0
    %1538 = vmatmul.mubr.f32.gmra.mxu0 %v1417
    %v1539 = vpop.f32.mrf.mxu0
    %v1540 = vadd.f32 0.0, %v1539
    %v1541 = vpop.f32.mrf.mxu0
    %1542 = vmatprep.mubr.f32.mxu0 0.0
    %1543 = vmatmul.mubr.f32.gmra.mxu0 %v1420
    %v1544 = vpop.f32.mrf.mxu0
    %v1545 = vadd.f32 0.0, %v1544
    %v1546 = vpop.f32.mrf.mxu0
    %1547 = vmatprep.mubr.f32.mxu0 0.0
    %1548 = vmatmul.mubr.f32.gmra.mxu0 %v1423
    %v1549 = vpop.f32.mrf.mxu0
    %v1550 = vadd.f32 0.0, %v1549
    %v1551 = vpop.f32.mrf.mxu0
    %1552 = vmatprep.mubr.f32.mxu0 0.0
    %1553 = vmatmul.mubr.f32.gmra.mxu0 %v1426
    %v1554 = vpop.f32.mrf.mxu0
    %v1555 = vadd.f32 0.0, %v1554
    %v1556 = vpop.f32.mrf.mxu0
    %1557 = vmatprep.mubr.f32.mxu0 0.0
    %1558 = vmatmul.mubr.f32.gmra.mxu0 %v1429
    %v1559 = vpop.f32.mrf.mxu0
    %v1560 = vadd.f32 0.0, %v1559
    %v1561 = vpop.f32.mrf.mxu0
    %1562 = vmatprep.mubr.f32.mxu0 0.0
    %1563 = vmatmul.mubr.f32.gmra.mxu0 %v1432
    %v1564 = vpop.f32.mrf.mxu0
    %v1565 = vadd.f32 0.0, %v1564
    %v1566 = vpop.f32.mrf.mxu0
    %1567 = vmatprep.mubr.f32.mxu0 0.0
    %1568 = vmatmul.mubr.f32.gmra.mxu0 %v1435
    %v1569 = vpop.f32.mrf.mxu0
    %v1570 = vadd.f32 0.0, %v1569
    %v1571 = vpop.f32.mrf.mxu0
    %1572 = vmatprep.mubr.f32.mxu0 0.0
    %1573 = vmatmul.mubr.f32.gmra.mxu0 %v1438
    %v1574 = vpop.f32.mrf.mxu0
    %v1575 = vadd.f32 0.0, %v1574
    %v1576 = vpop.f32.mrf.mxu0
    %1577 = vmatprep.mubr.f32.mxu0 0.0
    %1578 = vmatmul.mubr.f32.gmra.mxu0 %v1441
    %v1579 = vpop.f32.mrf.mxu0
    %v1580 = vadd.f32 0.0, %v1579
    %v1581 = vpop.f32.mrf.mxu0
    %1582 = vmatprep.mubr.f32.mxu0 0.0
    %1583 = vmatmul.mubr.f32.gmra.mxu0 %v1444
    %v1584 = vpop.f32.mrf.mxu0
    %v1585 = vadd.f32 0.0, %v1584
    %v1586 = vpop.f32.mrf.mxu0
    %1587 = vmatprep.mubr.f32.mxu0 0.0
    %1588 = vmatmul.mubr.f32.gmra.mxu0 %v1447
    %v1589 = vpop.f32.mrf.mxu0
    %v1590 = vadd.f32 0.0, %v1589
    %v1591 = vpop.f32.mrf.mxu0
    %1592 = vmatprep.mubr.f32.mxu0 0.0
    %1593 = vmatmul.mubr.f32.gmra.mxu0 %v1450
    %v1594 = vpop.f32.mrf.mxu0
    %v1595 = vadd.f32 0.0, %v1594
    %v1596 = vpop.f32.mrf.mxu0
    %1597 = vmatprep.mubr.f32.mxu0 0.0
    %1598 = vmatmul.mubr.f32.gmra.mxu0 %v1453
    %v1599 = vpop.f32.mrf.mxu0
    %v1600 = vadd.f32 0.0, %v1599
    %v1601 = vpop.f32.mrf.mxu0
    %1602 = vdwg.mxu0
    %v1603 = vadd.f32 %v1372, %v1525
    %v1604 = vadd.f32 %v1373, %v1530
    %v1605 = vadd.f32 %v1374, %v1535
    %v1606 = vadd.f32 %v1375, %v1540
    %v1607 = vadd.f32 %v1376, %v1545
    %v1608 = vadd.f32 %v1377, %v1550
    %v1609 = vadd.f32 %v1378, %v1555
    %v1610 = vadd.f32 %v1379, %v1560
    %v1611 = vadd.f32 %v1380, %v1565
    %v1612 = vadd.f32 %v1381, %v1570
    %v1613 = vadd.f32 %v1382, %v1575
    %v1614 = vadd.f32 %v1383, %v1580
    %v1615 = vadd.f32 %v1384, %v1585
    %v1616 = vadd.f32 %v1385, %v1590
    %v1617 = vadd.f32 %v1386, %v1595
    %v1618 = vadd.f32 %v1387, %v1600
    %s1619 = scalar_lea.vmem %s0, 304
    %v1620 = vld [vmem:[%s1619] sm:$0xff]
    %v1621 = vld [vmem:[%s1619 + $0x10] sm:$0xff]
    %v1622 = vld [vmem:[%s1619 + $0x20] sm:$0xff]
    %v1623 = vld [vmem:[%s1619 + $0x30] sm:$0xff]
    %v1624 = vld [vmem:[%s1619 + $0x40] sm:$0xff]
    %v1625 = vld [vmem:[%s1619 + $0x50] sm:$0xff]
    %v1626 = vld [vmem:[%s1619 + $0x60] sm:$0xff]
    %v1627 = vld [vmem:[%s1619 + $0x70] sm:$0xff]
    %v1628 = vld [vmem:[%s1619 + $0x90] sm:$0xff]
    %v1629 = vld [vmem:[%s1619 + $0xa0] sm:$0xff]
    %v1630 = vld [vmem:[%s1619 + $0xb0] sm:$0xff]
    %v1631 = vld [vmem:[%s1619 + $0xc0] sm:$0xff]
    %v1632 = vld [vmem:[%s1619 + $0xd0] sm:$0xff]
    %v1633 = vld [vmem:[%s1619 + $0xe0] sm:$0xff]
    %v1634 = vld [vmem:[%s1619 + $0xf0] sm:$0xff]
    %v1635 = vld [vmem:[%s1619 + $0x100] sm:$0xff]
    %s1636 = scalar_lea.vmem %s1, 28
    %v1637 = vld [vmem:[%s1636] sm:$0xf]
    %v1639 = vsel %vm72, %v1620, 0
    %v1642 = vsel %vm72, %v1621, 0
    %v1645 = vsel %vm72, %v1622, 0
    %v1648 = vsel %vm72, %v1623, 0
    %v1651 = vsel %vm72, %v1624, 0
    %v1654 = vsel %vm72, %v1625, 0
    %v1657 = vsel %vm72, %v1626, 0
    %v1660 = vsel %vm72, %v1627, 0
    %v1663 = vsel %vm72, %v1628, 0
    %v1666 = vsel %vm72, %v1629, 0
    %v1669 = vsel %vm72, %v1630, 0
    %v1672 = vsel %vm72, %v1631, 0
    %v1675 = vsel %vm72, %v1632, 0
    %v1678 = vsel %vm72, %v1633, 0
    %v1681 = vsel %vm72, %v1634, 0
    %v1684 = vsel %vm72, %v1635, 0
    %v1687 = vsel %vm121, %v1637, 0
    %1689 = vmatprep.subr.mxu0 0.0
    %1690 = vmatpush1.msra.mxu0 0.0
    %1691 = vmatprep.subr.mxu0 0.0
    %1692 = vmatpush1.msra.mxu0 0.0
    %1693 = vmatprep.subr.mxu0 0.0
    %1694 = vmatpush1.msra.mxu0 0.0
    %1695 = vmatprep.subr.mxu0 0.0
    %1696 = vmatpush1.msra.mxu0 0.0
    %1697 = vmatprep.subr.mxu0 0.0
    %1698 = vmatpush1.msra.mxu0 0.0
    %1699 = vmatprep.subr.mxu0 0.0
    %1700 = vmatpush1.msra.mxu0 0.0
    %1701 = vmatprep.subr.mxu0 0.0
    %1702 = vmatpush1.msra.mxu0 0.0
    %1703 = vmatprep.subr.mxu0 0.0
    %1704 = vmatpush1.msra.mxu0 0.0
    %1705 = vmatprep.subr.mxu0 0.0
    %1706 = vmatpush1.msra.mxu0 0.0
    %1707 = vmatprep.subr.mxu0 0.0
    %1708 = vmatpush1.msra.mxu0 0.0
    %1709 = vmatprep.subr.mxu0 0.0
    %1710 = vmatpush1.msra.mxu0 0.0
    %1711 = vmatprep.subr.mxu0 0.0
    %1712 = vmatpush1.msra.mxu0 0.0
    %1713 = vmatprep.subr.mxu0 0.0
    %1714 = vmatpush1.msra.mxu0 0.0
    %1715 = vmatprep.subr.mxu0 0.0
    %1716 = vmatpush1.msra.mxu0 0.0
    %1717 = vmatprep.subr.mxu0 0.0
    %1718 = vmatpush1.msra.mxu0 0.0
    %1719 = vmatprep.subr.mxu0 0.0
    %1720 = vmatpush1.msra.mxu0 %v1687
    %1721 = vmatprep.subr.mxu0 0.0
    %1722 = vmatpush2.msra.mxu0 0.0
    %1723 = vmatprep.subr.mxu0 0.0
    %1724 = vmatpush2.msra.mxu0 0.0
    %1725 = vmatprep.subr.mxu0 0.0
    %1726 = vmatpush2.msra.mxu0 0.0
    %1727 = vmatprep.subr.mxu0 0.0
    %1728 = vmatpush2.msra.mxu0 0.0
    %1729 = vmatprep.subr.mxu0 0.0
    %1730 = vmatpush2.msra.mxu0 0.0
    %1731 = vmatprep.subr.mxu0 0.0
    %1732 = vmatpush2.msra.mxu0 0.0
    %1733 = vmatprep.subr.mxu0 0.0
    %1734 = vmatpush2.msra.mxu0 0.0
    %1735 = vmatprep.subr.mxu0 0.0
    %1736 = vmatpush2.msra.mxu0 0.0
    %1737 = vmatprep.subr.mxu0 0.0
    %1738 = vmatpush2.msra.mxu0 0.0
    %1739 = vmatprep.subr.mxu0 0.0
    %1740 = vmatpush2.msra.mxu0 0.0
    %1741 = vmatprep.subr.mxu0 0.0
    %1742 = vmatpush2.msra.mxu0 0.0
    %1743 = vmatprep.subr.mxu0 0.0
    %1744 = vmatpush2.msra.mxu0 0.0
    %1745 = vmatprep.subr.mxu0 0.0
    %1746 = vmatpush2.msra.mxu0 0.0
    %1747 = vmatprep.subr.mxu0 0.0
    %1748 = vmatpush2.msra.mxu0 0.0
    %1749 = vmatprep.subr.mxu0 0.0
    %1750 = vmatpush2.msra.mxu0 0.0
    %1751 = vmatprep.subr.mxu0 0.0
    %1752 = vmatpush2.msra.mxu0 0.0
    %1753 = vmatprep.mubr.f32.mxu0 0.0
    %1754 = vmatmul.mubr.f32.gmra.mxu0 %v1639
    %v1755 = vpop.f32.mrf.mxu0
    %v1756 = vadd.f32 0.0, %v1755
    %v1757 = vpop.f32.mrf.mxu0
    %1758 = vmatprep.mubr.f32.mxu0 0.0
    %1759 = vmatmul.mubr.f32.gmra.mxu0 %v1642
    %v1760 = vpop.f32.mrf.mxu0
    %v1761 = vadd.f32 0.0, %v1760
    %v1762 = vpop.f32.mrf.mxu0
    %1763 = vmatprep.mubr.f32.mxu0 0.0
    %1764 = vmatmul.mubr.f32.gmra.mxu0 %v1645
    %v1765 = vpop.f32.mrf.mxu0
    %v1766 = vadd.f32 0.0, %v1765
    %v1767 = vpop.f32.mrf.mxu0
    %1768 = vmatprep.mubr.f32.mxu0 0.0
    %1769 = vmatmul.mubr.f32.gmra.mxu0 %v1648
    %v1770 = vpop.f32.mrf.mxu0
    %v1771 = vadd.f32 0.0, %v1770
    %v1772 = vpop.f32.mrf.mxu0
    %1773 = vmatprep.mubr.f32.mxu0 0.0
    %1774 = vmatmul.mubr.f32.gmra.mxu0 %v1651
    %v1775 = vpop.f32.mrf.mxu0
    %v1776 = vadd.f32 0.0, %v1775
    %v1777 = vpop.f32.mrf.mxu0
    %1778 = vmatprep.mubr.f32.mxu0 0.0
    %1779 = vmatmul.mubr.f32.gmra.mxu0 %v1654
    %v1780 = vpop.f32.mrf.mxu0
    %v1781 = vadd.f32 0.0, %v1780
    %v1782 = vpop.f32.mrf.mxu0
    %1783 = vmatprep.mubr.f32.mxu0 0.0
    %1784 = vmatmul.mubr.f32.gmra.mxu0 %v1657
    %v1785 = vpop.f32.mrf.mxu0
    %v1786 = vadd.f32 0.0, %v1785
    %v1787 = vpop.f32.mrf.mxu0
    %1788 = vmatprep.mubr.f32.mxu0 0.0
    %1789 = vmatmul.mubr.f32.gmra.mxu0 %v1660
    %v1790 = vpop.f32.mrf.mxu0
    %v1791 = vadd.f32 0.0, %v1790
    %v1792 = vpop.f32.mrf.mxu0
    %1793 = vmatprep.mubr.f32.mxu0 0.0
    %1794 = vmatmul.mubr.f32.gmra.mxu0 %v1663
    %v1795 = vpop.f32.mrf.mxu0
    %v1796 = vadd.f32 0.0, %v1795
    %v1797 = vpop.f32.mrf.mxu0
    %1798 = vmatprep.mubr.f32.mxu0 0.0
    %1799 = vmatmul.mubr.f32.gmra.mxu0 %v1666
    %v1800 = vpop.f32.mrf.mxu0
    %v1801 = vadd.f32 0.0, %v1800
    %v1802 = vpop.f32.mrf.mxu0
    %1803 = vmatprep.mubr.f32.mxu0 0.0
    %1804 = vmatmul.mubr.f32.gmra.mxu0 %v1669
    %v1805 = vpop.f32.mrf.mxu0
    %v1806 = vadd.f32 0.0, %v1805
    %v1807 = vpop.f32.mrf.mxu0
    %1808 = vmatprep.mubr.f32.mxu0 0.0
    %1809 = vmatmul.mubr.f32.gmra.mxu0 %v1672
    %v1810 = vpop.f32.mrf.mxu0
    %v1811 = vadd.f32 0.0, %v1810
    %v1812 = vpop.f32.mrf.mxu0
    %1813 = vmatprep.mubr.f32.mxu0 0.0
    %1814 = vmatmul.mubr.f32.gmra.mxu0 %v1675
    %v1815 = vpop.f32.mrf.mxu0
    %v1816 = vadd.f32 0.0, %v1815
    %v1817 = vpop.f32.mrf.mxu0
    %1818 = vmatprep.mubr.f32.mxu0 0.0
    %1819 = vmatmul.mubr.f32.gmra.mxu0 %v1678
    %v1820 = vpop.f32.mrf.mxu0
    %v1821 = vadd.f32 0.0, %v1820
    %v1822 = vpop.f32.mrf.mxu0
    %1823 = vmatprep.mubr.f32.mxu0 0.0
    %1824 = vmatmul.mubr.f32.gmra.mxu0 %v1681
    %v1825 = vpop.f32.mrf.mxu0
    %v1826 = vadd.f32 0.0, %v1825
    %v1827 = vpop.f32.mrf.mxu0
    %1828 = vmatprep.mubr.f32.mxu0 0.0
    %1829 = vmatmul.mubr.f32.gmra.mxu0 %v1684
    %v1830 = vpop.f32.mrf.mxu0
    %v1831 = vadd.f32 0.0, %v1830
    %v1832 = vpop.f32.mrf.mxu0
    %1833 = vdwg.mxu0
    %v1834 = vadd.f32 %v1603, %v1756
    %v1835 = vadd.f32 %v1604, %v1761
    %v1836 = vadd.f32 %v1605, %v1766
    %v1837 = vadd.f32 %v1606, %v1771
    %v1838 = vadd.f32 %v1607, %v1776
    %v1839 = vadd.f32 %v1608, %v1781
    %v1840 = vadd.f32 %v1609, %v1786
    %v1841 = vadd.f32 %v1610, %v1791
    %v1842 = vadd.f32 %v1611, %v1796
    %v1843 = vadd.f32 %v1612, %v1801
    %v1844 = vadd.f32 %v1613, %v1806
    %v1845 = vadd.f32 %v1614, %v1811
    %v1846 = vadd.f32 %v1615, %v1816
    %v1847 = vadd.f32 %v1616, %v1821
    %v1848 = vadd.f32 %v1617, %v1826
    %v1849 = vadd.f32 %v1618, %v1831
    %v1850 = vld [vmem:[%s1388 + $0x1] sm:$0xff]
    %v1851 = vld [vmem:[%s1388 + $0x11] sm:$0xff]
    %v1852 = vld [vmem:[%s1388 + $0x21] sm:$0xff]
    %v1853 = vld [vmem:[%s1388 + $0x31] sm:$0xff]
    %v1854 = vld [vmem:[%s1388 + $0x41] sm:$0xff]
    %v1855 = vld [vmem:[%s1388 + $0x51] sm:$0xff]
    %v1856 = vld [vmem:[%s1388 + $0x61] sm:$0xff]
    %v1857 = vld [vmem:[%s1388 + $0x71] sm:$0xff]
    %v1858 = vld [vmem:[%s1388 + $0x91] sm:$0xff]
    %v1859 = vld [vmem:[%s1388 + $0xa1] sm:$0xff]
    %v1860 = vld [vmem:[%s1388 + $0xb1] sm:$0xff]
    %v1861 = vld [vmem:[%s1388 + $0xc1] sm:$0xff]
    %v1862 = vld [vmem:[%s1388 + $0xd1] sm:$0xff]
    %v1863 = vld [vmem:[%s1388 + $0xe1] sm:$0xff]
    %v1864 = vld [vmem:[%s1388 + $0xf1] sm:$0xff]
    %v1865 = vld [vmem:[%s1388 + $0x101] sm:$0xff]
    %s1866 = scalar_lea.vmem %s1, 32
    %v1867 = vld [vmem:[%s1866] sm:$0xf]
    %v1869 = vsel %vm72, %v1850, 0
    %v1872 = vsel %vm72, %v1851, 0
    %v1875 = vsel %vm72, %v1852, 0
    %v1878 = vsel %vm72, %v1853, 0
    %v1881 = vsel %vm72, %v1854, 0
    %v1884 = vsel %vm72, %v1855, 0
    %v1887 = vsel %vm72, %v1856, 0
    %v1890 = vsel %vm72, %v1857, 0
    %v1893 = vsel %vm72, %v1858, 0
    %v1896 = vsel %vm72, %v1859, 0
    %v1899 = vsel %vm72, %v1860, 0
    %v1902 = vsel %vm72, %v1861, 0
    %v1905 = vsel %vm72, %v1862, 0
    %v1908 = vsel %vm72, %v1863, 0
    %v1911 = vsel %vm72, %v1864, 0
    %v1914 = vsel %vm72, %v1865, 0
    %v1917 = vsel %vm121, %v1867, 0
    %1919 = vmatprep.subr.mxu0 0.0
    %1920 = vmatpush1.msra.mxu0 0.0
    %1921 = vmatprep.subr.mxu0 0.0
    %1922 = vmatpush1.msra.mxu0 0.0
    %1923 = vmatprep.subr.mxu0 0.0
    %1924 = vmatpush1.msra.mxu0 0.0
    %1925 = vmatprep.subr.mxu0 0.0
    %1926 = vmatpush1.msra.mxu0 0.0
    %1927 = vmatprep.subr.mxu0 0.0
    %1928 = vmatpush1.msra.mxu0 0.0
    %1929 = vmatprep.subr.mxu0 0.0
    %1930 = vmatpush1.msra.mxu0 0.0
    %1931 = vmatprep.subr.mxu0 0.0
    %1932 = vmatpush1.msra.mxu0 0.0
    %1933 = vmatprep.subr.mxu0 0.0
    %1934 = vmatpush1.msra.mxu0 0.0
    %1935 = vmatprep.subr.mxu0 0.0
    %1936 = vmatpush1.msra.mxu0 0.0
    %1937 = vmatprep.subr.mxu0 0.0
    %1938 = vmatpush1.msra.mxu0 0.0
    %1939 = vmatprep.subr.mxu0 0.0
    %1940 = vmatpush1.msra.mxu0 0.0
    %1941 = vmatprep.subr.mxu0 0.0
    %1942 = vmatpush1.msra.mxu0 0.0
    %1943 = vmatprep.subr.mxu0 0.0
    %1944 = vmatpush1.msra.mxu0 0.0
    %1945 = vmatprep.subr.mxu0 0.0
    %1946 = vmatpush1.msra.mxu0 0.0
    %1947 = vmatprep.subr.mxu0 0.0
    %1948 = vmatpush1.msra.mxu0 0.0
    %1949 = vmatprep.subr.mxu0 0.0
    %1950 = vmatpush1.msra.mxu0 %v1917
    %1951 = vmatprep.subr.mxu0 0.0
    %1952 = vmatpush2.msra.mxu0 0.0
    %1953 = vmatprep.subr.mxu0 0.0
    %1954 = vmatpush2.msra.mxu0 0.0
    %1955 = vmatprep.subr.mxu0 0.0
    %1956 = vmatpush2.msra.mxu0 0.0
    %1957 = vmatprep.subr.mxu0 0.0
    %1958 = vmatpush2.msra.mxu0 0.0
    %1959 = vmatprep.subr.mxu0 0.0
    %1960 = vmatpush2.msra.mxu0 0.0
    %1961 = vmatprep.subr.mxu0 0.0
    %1962 = vmatpush2.msra.mxu0 0.0
    %1963 = vmatprep.subr.mxu0 0.0
    %1964 = vmatpush2.msra.mxu0 0.0
    %1965 = vmatprep.subr.mxu0 0.0
    %1966 = vmatpush2.msra.mxu0 0.0
    %1967 = vmatprep.subr.mxu0 0.0
    %1968 = vmatpush2.msra.mxu0 0.0
    %1969 = vmatprep.subr.mxu0 0.0
    %1970 = vmatpush2.msra.mxu0 0.0
    %1971 = vmatprep.subr.mxu0 0.0
    %1972 = vmatpush2.msra.mxu0 0.0
    %1973 = vmatprep.subr.mxu0 0.0
    %1974 = vmatpush2.msra.mxu0 0.0
    %1975 = vmatprep.subr.mxu0 0.0
    %1976 = vmatpush2.msra.mxu0 0.0
    %1977 = vmatprep.subr.mxu0 0.0
    %1978 = vmatpush2.msra.mxu0 0.0
    %1979 = vmatprep.subr.mxu0 0.0
    %1980 = vmatpush2.msra.mxu0 0.0
    %1981 = vmatprep.subr.mxu0 0.0
    %1982 = vmatpush2.msra.mxu0 0.0
    %1983 = vmatprep.mubr.f32.mxu0 0.0
    %1984 = vmatmul.mubr.f32.gmra.mxu0 %v1869
    %v1985 = vpop.f32.mrf.mxu0
    %v1986 = vadd.f32 0.0, %v1985
    %v1987 = vpop.f32.mrf.mxu0
    %1988 = vmatprep.mubr.f32.mxu0 0.0
    %1989 = vmatmul.mubr.f32.gmra.mxu0 %v1872
    %v1990 = vpop.f32.mrf.mxu0
    %v1991 = vadd.f32 0.0, %v1990
    %v1992 = vpop.f32.mrf.mxu0
    %1993 = vmatprep.mubr.f32.mxu0 0.0
    %1994 = vmatmul.mubr.f32.gmra.mxu0 %v1875
    %v1995 = vpop.f32.mrf.mxu0
    %v1996 = vadd.f32 0.0, %v1995
    %v1997 = vpop.f32.mrf.mxu0
    %1998 = vmatprep.mubr.f32.mxu0 0.0
    %1999 = vmatmul.mubr.f32.gmra.mxu0 %v1878
    %v2000 = vpop.f32.mrf.mxu0
    %v2001 = vadd.f32 0.0, %v2000
    %v2002 = vpop.f32.mrf.mxu0
    %2003 = vmatprep.mubr.f32.mxu0 0.0
    %2004 = vmatmul.mubr.f32.gmra.mxu0 %v1881
    %v2005 = vpop.f32.mrf.mxu0
    %v2006 = vadd.f32 0.0, %v2005
    %v2007 = vpop.f32.mrf.mxu0
    %2008 = vmatprep.mubr.f32.mxu0 0.0
    %2009 = vmatmul.mubr.f32.gmra.mxu0 %v1884
    %v2010 = vpop.f32.mrf.mxu0
    %v2011 = vadd.f32 0.0, %v2010
    %v2012 = vpop.f32.mrf.mxu0
    %2013 = vmatprep.mubr.f32.mxu0 0.0
    %2014 = vmatmul.mubr.f32.gmra.mxu0 %v1887
    %v2015 = vpop.f32.mrf.mxu0
    %v2016 = vadd.f32 0.0, %v2015
    %v2017 = vpop.f32.mrf.mxu0
    %2018 = vmatprep.mubr.f32.mxu0 0.0
    %2019 = vmatmul.mubr.f32.gmra.mxu0 %v1890
    %v2020 = vpop.f32.mrf.mxu0
    %v2021 = vadd.f32 0.0, %v2020
    %v2022 = vpop.f32.mrf.mxu0
    %2023 = vmatprep.mubr.f32.mxu0 0.0
    %2024 = vmatmul.mubr.f32.gmra.mxu0 %v1893
    %v2025 = vpop.f32.mrf.mxu0
    %v2026 = vadd.f32 0.0, %v2025
    %v2027 = vpop.f32.mrf.mxu0
    %2028 = vmatprep.mubr.f32.mxu0 0.0
    %2029 = vmatmul.mubr.f32.gmra.mxu0 %v1896
    %v2030 = vpop.f32.mrf.mxu0
    %v2031 = vadd.f32 0.0, %v2030
    %v2032 = vpop.f32.mrf.mxu0
    %2033 = vmatprep.mubr.f32.mxu0 0.0
    %2034 = vmatmul.mubr.f32.gmra.mxu0 %v1899
    %v2035 = vpop.f32.mrf.mxu0
    %v2036 = vadd.f32 0.0, %v2035
    %v2037 = vpop.f32.mrf.mxu0
    %2038 = vmatprep.mubr.f32.mxu0 0.0
    %2039 = vmatmul.mubr.f32.gmra.mxu0 %v1902
    %v2040 = vpop.f32.mrf.mxu0
    %v2041 = vadd.f32 0.0, %v2040
    %v2042 = vpop.f32.mrf.mxu0
    %2043 = vmatprep.mubr.f32.mxu0 0.0
    %2044 = vmatmul.mubr.f32.gmra.mxu0 %v1905
    %v2045 = vpop.f32.mrf.mxu0
    %v2046 = vadd.f32 0.0, %v2045
    %v2047 = vpop.f32.mrf.mxu0
    %2048 = vmatprep.mubr.f32.mxu0 0.0
    %2049 = vmatmul.mubr.f32.gmra.mxu0 %v1908
    %v2050 = vpop.f32.mrf.mxu0
    %v2051 = vadd.f32 0.0, %v2050
    %v2052 = vpop.f32.mrf.mxu0
    %2053 = vmatprep.mubr.f32.mxu0 0.0
    %2054 = vmatmul.mubr.f32.gmra.mxu0 %v1911
    %v2055 = vpop.f32.mrf.mxu0
    %v2056 = vadd.f32 0.0, %v2055
    %v2057 = vpop.f32.mrf.mxu0
    %2058 = vmatprep.mubr.f32.mxu0 0.0
    %2059 = vmatmul.mubr.f32.gmra.mxu0 %v1914
    %v2060 = vpop.f32.mrf.mxu0
    %v2061 = vadd.f32 0.0, %v2060
    %v2062 = vpop.f32.mrf.mxu0
    %2063 = vdwg.mxu0
    %v2064 = vadd.f32 %v1834, %v1986
    %v2065 = vadd.f32 %v1835, %v1991
    %v2066 = vadd.f32 %v1836, %v1996
    %v2067 = vadd.f32 %v1837, %v2001
    %v2068 = vadd.f32 %v1838, %v2006
    %v2069 = vadd.f32 %v1839, %v2011
    %v2070 = vadd.f32 %v1840, %v2016
    %v2071 = vadd.f32 %v1841, %v2021
    %v2072 = vadd.f32 %v1842, %v2026
    %v2073 = vadd.f32 %v1843, %v2031
    %v2074 = vadd.f32 %v1844, %v2036
    %v2075 = vadd.f32 %v1845, %v2041
    %v2076 = vadd.f32 %v1846, %v2046
    %v2077 = vadd.f32 %v1847, %v2051
    %v2078 = vadd.f32 %v1848, %v2056
    %v2079 = vadd.f32 %v1849, %v2061
    %v2080 = vld [vmem:[%s2] sm:$0x1]
    %v2082 = vlaneseq
    %v2083 = vshrl.u32 %v2082, 7
    %v2084 = vsub.s32 0, %v2083
    %v2085 = vrot.slane %v2080, %v2084
    %v2087 = vadd.f32 %v2064, %v2085
    %v2088 = vadd.f32 %v2065, %v2085
    %v2089 = vadd.f32 %v2066, %v2085
    %v2090 = vadd.f32 %v2067, %v2085
    %v2091 = vadd.f32 %v2068, %v2085
    %v2092 = vadd.f32 %v2069, %v2085
    %v2093 = vadd.f32 %v2070, %v2085
    %v2094 = vadd.f32 %v2071, %v2085
    %v2095 = vadd.f32 %v2072, %v2085
    %v2096 = vadd.f32 %v2073, %v2085
    %v2097 = vadd.f32 %v2074, %v2085
    %v2098 = vadd.f32 %v2075, %v2085
    %v2099 = vadd.f32 %v2076, %v2085
    %v2100 = vadd.f32 %v2077, %v2085
    %v2101 = vadd.f32 %v2078, %v2085
    %v2102 = vadd.f32 %v2079, %v2085
    %v2103 = vmax.f32 %v2087, 0.0
    %v2104 = vmax.f32 %v2088, 0.0
    %v2105 = vmax.f32 %v2089, 0.0
    %v2106 = vmax.f32 %v2090, 0.0
    %v2107 = vmax.f32 %v2091, 0.0
    %v2108 = vmax.f32 %v2092, 0.0
    %v2109 = vmax.f32 %v2093, 0.0
    %v2110 = vmax.f32 %v2094, 0.0
    %v2111 = vmax.f32 %v2095, 0.0
    %v2112 = vmax.f32 %v2096, 0.0
    %v2113 = vmax.f32 %v2097, 0.0
    %v2114 = vmax.f32 %v2098, 0.0
    %v2115 = vmax.f32 %v2099, 0.0
    %v2116 = vmax.f32 %v2100, 0.0
    %v2117 = vmax.f32 %v2101, 0.0
    %v2118 = vmax.f32 %v2102, 0.0
    %v2119 = vld [vmem:[%s3] sm:$0xff]
    %v2120 = vld [vmem:[%s3 + $0x8] sm:$0xff]
    %v2121 = vld [vmem:[%s3 + $0x10] sm:$0xff]
    %v2122 = vld [vmem:[%s3 + $0x18] sm:$0xff]
    %v2123 = vld [vmem:[%s3 + $0x20] sm:$0xff]
    %v2124 = vld [vmem:[%s3 + $0x28] sm:$0xff]
    %v2125 = vld [vmem:[%s3 + $0x30] sm:$0xff]
    %v2126 = vld [vmem:[%s3 + $0x38] sm:$0xff]
    %v2127 = vld [vmem:[%s3 + $0x40] sm:$0xff]
    %v2128 = vld [vmem:[%s3 + $0x48] sm:$0xff]
    %v2129 = vld [vmem:[%s3 + $0x50] sm:$0xff]
    %v2130 = vld [vmem:[%s3 + $0x58] sm:$0xff]
    %v2131 = vld [vmem:[%s3 + $0x60] sm:$0xff]
    %v2132 = vld [vmem:[%s3 + $0x68] sm:$0xff]
    %v2133 = vld [vmem:[%s3 + $0x70] sm:$0xff]
    %v2134 = vld [vmem:[%s3 + $0x78] sm:$0xff]
    %v2135 = vld [vmem:[%s3 + $0x80] sm:$0xff]
    %v2136 = vld [vmem:[%s3 + $0x88] sm:$0xff]
    %v2137 = vld [vmem:[%s3 + $0x90] sm:$0xff]
    %v2138 = vld [vmem:[%s3 + $0x98] sm:$0xff]
    %v2139 = vld [vmem:[%s3 + $0xa0] sm:$0xff]
    %v2140 = vld [vmem:[%s3 + $0xa8] sm:$0xff]
    %v2141 = vld [vmem:[%s3 + $0xb0] sm:$0xff]
    %v2142 = vld [vmem:[%s3 + $0xb8] sm:$0xff]
    %v2143 = vld [vmem:[%s3 + $0xc0] sm:$0xff]
    %v2144 = vld [vmem:[%s3 + $0xc8] sm:$0xff]
    %v2145 = vld [vmem:[%s3 + $0xd0] sm:$0xff]
    %v2146 = vld [vmem:[%s3 + $0xd8] sm:$0xff]
    %v2147 = vld [vmem:[%s3 + $0xe0] sm:$0xff]
    %v2148 = vld [vmem:[%s3 + $0xe8] sm:$0xff]
    %v2149 = vld [vmem:[%s3 + $0xf0] sm:$0xff]
    %v2150 = vld [vmem:[%s3 + $0xf8] sm:$0xff]
    %v2151 = vld [vmem:[%s3 + $0x100] sm:$0xff]
    %v2152 = vld [vmem:[%s3 + $0x108] sm:$0xff]
    %v2153 = vld [vmem:[%s3 + $0x110] sm:$0xff]
    %v2154 = vld [vmem:[%s3 + $0x118] sm:$0xff]
    %2155 = vmatprep.subr.mxu0 0.0
    %2156 = vmatpush1.msra.mxu0 %v2118
    %2157 = vmatprep.subr.mxu0 0.0
    %2158 = vmatpush1.msra.mxu0 %v2117
    %2159 = vmatprep.subr.mxu0 0.0
    %2160 = vmatpush1.msra.mxu0 %v2116
    %2161 = vmatprep.subr.mxu0 0.0
    %2162 = vmatpush1.msra.mxu0 %v2115
    %2163 = vmatprep.subr.mxu0 0.0
    %2164 = vmatpush1.msra.mxu0 %v2114
    %2165 = vmatprep.subr.mxu0 0.0
    %2166 = vmatpush1.msra.mxu0 %v2113
    %2167 = vmatprep.subr.mxu0 0.0
    %2168 = vmatpush1.msra.mxu0 %v2112
    %2169 = vmatprep.subr.mxu0 0.0
    %2170 = vmatpush1.msra.mxu0 %v2111
    %2171 = vmatprep.subr.mxu0 0.0
    %2172 = vmatpush1.msra.mxu0 %v2110
    %2173 = vmatprep.subr.mxu0 0.0
    %2174 = vmatpush1.msra.mxu0 %v2109
    %2175 = vmatprep.subr.mxu0 0.0
    %2176 = vmatpush1.msra.mxu0 %v2108
    %2177 = vmatprep.subr.mxu0 0.0
    %2178 = vmatpush1.msra.mxu0 %v2107
    %2179 = vmatprep.subr.mxu0 0.0
    %2180 = vmatpush1.msra.mxu0 %v2106
    %2181 = vmatprep.subr.mxu0 0.0
    %2182 = vmatpush1.msra.mxu0 %v2105
    %2183 = vmatprep.subr.mxu0 0.0
    %2184 = vmatpush1.msra.mxu0 %v2104
    %2185 = vmatprep.subr.mxu0 0.0
    %2186 = vmatpush1.msra.mxu0 %v2103
    %2187 = vmatprep.subr.mxu0 0.0
    %2188 = vmatpush2.msra.mxu0 0.0
    %2189 = vmatprep.subr.mxu0 0.0
    %2190 = vmatpush2.msra.mxu0 0.0
    %2191 = vmatprep.subr.mxu0 0.0
    %2192 = vmatpush2.msra.mxu0 0.0
    %2193 = vmatprep.subr.mxu0 0.0
    %2194 = vmatpush2.msra.mxu0 0.0
    %2195 = vmatprep.subr.mxu0 0.0
    %2196 = vmatpush2.msra.mxu0 0.0
    %2197 = vmatprep.subr.mxu0 0.0
    %2198 = vmatpush2.msra.mxu0 0.0
    %2199 = vmatprep.subr.mxu0 0.0
    %2200 = vmatpush2.msra.mxu0 0.0
    %2201 = vmatprep.subr.mxu0 0.0
    %2202 = vmatpush2.msra.mxu0 0.0
    %2203 = vmatprep.subr.mxu0 0.0
    %2204 = vmatpush2.msra.mxu0 0.0
    %2205 = vmatprep.subr.mxu0 0.0
    %2206 = vmatpush2.msra.mxu0 0.0
    %2207 = vmatprep.subr.mxu0 0.0
    %2208 = vmatpush2.msra.mxu0 0.0
    %2209 = vmatprep.subr.mxu0 0.0
    %2210 = vmatpush2.msra.mxu0 0.0
    %2211 = vmatprep.subr.mxu0 0.0
    %2212 = vmatpush2.msra.mxu0 0.0
    %2213 = vmatprep.subr.mxu0 0.0
    %2214 = vmatpush2.msra.mxu0 0.0
    %2215 = vmatprep.subr.mxu0 0.0
    %2216 = vmatpush2.msra.mxu0 0.0
    %2217 = vmatprep.subr.mxu0 0.0
    %2218 = vmatpush2.msra.mxu0 0.0
    %2219 = vmatprep.mubr.f32.mxu0 0.0
    %2220 = vmatmul.mubr.f32.gmra.mxu0 %v2119
    %v2221 = vpop.f32.mrf.mxu0
    %v2222 = vadd.f32 0.0, %v2221
    %v2223 = vpop.f32.mrf.mxu0
    %2224 = vmatprep.mubr.f32.mxu0 0.0
    %2225 = vmatmul.mubr.f32.gmra.mxu0 %v2120
    %v2226 = vpop.f32.mrf.mxu0
    %v2227 = vadd.f32 0.0, %v2226
    %v2228 = vpop.f32.mrf.mxu0
    %2229 = vmatprep.mubr.f32.mxu0 0.0
    %2230 = vmatmul.mubr.f32.gmra.mxu0 %v2121
    %v2231 = vpop.f32.mrf.mxu0
    %v2232 = vadd.f32 0.0, %v2231
    %v2233 = vpop.f32.mrf.mxu0
    %2234 = vmatprep.mubr.f32.mxu0 0.0
    %2235 = vmatmul.mubr.f32.gmra.mxu0 %v2122
    %v2236 = vpop.f32.mrf.mxu0
    %v2237 = vadd.f32 0.0, %v2236
    %v2238 = vpop.f32.mrf.mxu0
    %2239 = vmatprep.mubr.f32.mxu0 0.0
    %2240 = vmatmul.mubr.f32.gmra.mxu0 %v2123
    %v2241 = vpop.f32.mrf.mxu0
    %v2242 = vadd.f32 0.0, %v2241
    %v2243 = vpop.f32.mrf.mxu0
    %2244 = vmatprep.mubr.f32.mxu0 0.0
    %2245 = vmatmul.mubr.f32.gmra.mxu0 %v2124
    %v2246 = vpop.f32.mrf.mxu0
    %v2247 = vadd.f32 0.0, %v2246
    %v2248 = vpop.f32.mrf.mxu0
    %2249 = vmatprep.mubr.f32.mxu0 0.0
    %2250 = vmatmul.mubr.f32.gmra.mxu0 %v2125
    %v2251 = vpop.f32.mrf.mxu0
    %v2252 = vadd.f32 0.0, %v2251
    %v2253 = vpop.f32.mrf.mxu0
    %2254 = vmatprep.mubr.f32.mxu0 0.0
    %2255 = vmatmul.mubr.f32.gmra.mxu0 %v2126
    %v2256 = vpop.f32.mrf.mxu0
    %v2257 = vadd.f32 0.0, %v2256
    %v2258 = vpop.f32.mrf.mxu0
    %2259 = vmatprep.mubr.f32.mxu0 0.0
    %2260 = vmatmul.mubr.f32.gmra.mxu0 %v2127
    %v2261 = vpop.f32.mrf.mxu0
    %v2262 = vadd.f32 0.0, %v2261
    %v2263 = vpop.f32.mrf.mxu0
    %2264 = vmatprep.mubr.f32.mxu0 0.0
    %2265 = vmatmul.mubr.f32.gmra.mxu0 %v2128
    %v2266 = vpop.f32.mrf.mxu0
    %v2267 = vadd.f32 0.0, %v2266
    %v2268 = vpop.f32.mrf.mxu0
    %2269 = vmatprep.mubr.f32.mxu0 0.0
    %2270 = vmatmul.mubr.f32.gmra.mxu0 %v2129
    %v2271 = vpop.f32.mrf.mxu0
    %v2272 = vadd.f32 0.0, %v2271
    %v2273 = vpop.f32.mrf.mxu0
    %2274 = vmatprep.mubr.f32.mxu0 0.0
    %2275 = vmatmul.mubr.f32.gmra.mxu0 %v2130
    %v2276 = vpop.f32.mrf.mxu0
    %v2277 = vadd.f32 0.0, %v2276
    %v2278 = vpop.f32.mrf.mxu0
    %2279 = vmatprep.mubr.f32.mxu0 0.0
    %2280 = vmatmul.mubr.f32.gmra.mxu0 %v2131
    %v2281 = vpop.f32.mrf.mxu0
    %v2282 = vadd.f32 0.0, %v2281
    %v2283 = vpop.f32.mrf.mxu0
    %2284 = vmatprep.mubr.f32.mxu0 0.0
    %2285 = vmatmul.mubr.f32.gmra.mxu0 %v2132
    %v2286 = vpop.f32.mrf.mxu0
    %v2287 = vadd.f32 0.0, %v2286
    %v2288 = vpop.f32.mrf.mxu0
    %2289 = vmatprep.mubr.f32.mxu0 0.0
    %2290 = vmatmul.mubr.f32.gmra.mxu0 %v2133
    %v2291 = vpop.f32.mrf.mxu0
    %v2292 = vadd.f32 0.0, %v2291
    %v2293 = vpop.f32.mrf.mxu0
    %2294 = vmatprep.mubr.f32.mxu0 0.0
    %2295 = vmatmul.mubr.f32.gmra.mxu0 %v2134
    %v2296 = vpop.f32.mrf.mxu0
    %v2297 = vadd.f32 0.0, %v2296
    %v2298 = vpop.f32.mrf.mxu0
    %2299 = vmatprep.mubr.f32.mxu0 0.0
    %2300 = vmatmul.mubr.f32.gmra.mxu0 %v2135
    %v2301 = vpop.f32.mrf.mxu0
    %v2302 = vadd.f32 0.0, %v2301
    %v2303 = vpop.f32.mrf.mxu0
    %2304 = vmatprep.mubr.f32.mxu0 0.0
    %2305 = vmatmul.mubr.f32.gmra.mxu0 %v2136
    %v2306 = vpop.f32.mrf.mxu0
    %v2307 = vadd.f32 0.0, %v2306
    %v2308 = vpop.f32.mrf.mxu0
    %2309 = vmatprep.mubr.f32.mxu0 0.0
    %2310 = vmatmul.mubr.f32.gmra.mxu0 %v2137
    %v2311 = vpop.f32.mrf.mxu0
    %v2312 = vadd.f32 0.0, %v2311
    %v2313 = vpop.f32.mrf.mxu0
    %2314 = vmatprep.mubr.f32.mxu0 0.0
    %2315 = vmatmul.mubr.f32.gmra.mxu0 %v2138
    %v2316 = vpop.f32.mrf.mxu0
    %v2317 = vadd.f32 0.0, %v2316
    %v2318 = vpop.f32.mrf.mxu0
    %2319 = vmatprep.mubr.f32.mxu0 0.0
    %2320 = vmatmul.mubr.f32.gmra.mxu0 %v2139
    %v2321 = vpop.f32.mrf.mxu0
    %v2322 = vadd.f32 0.0, %v2321
    %v2323 = vpop.f32.mrf.mxu0
    %2324 = vmatprep.mubr.f32.mxu0 0.0
    %2325 = vmatmul.mubr.f32.gmra.mxu0 %v2140
    %v2326 = vpop.f32.mrf.mxu0
    %v2327 = vadd.f32 0.0, %v2326
    %v2328 = vpop.f32.mrf.mxu0
    %2329 = vmatprep.mubr.f32.mxu0 0.0
    %2330 = vmatmul.mubr.f32.gmra.mxu0 %v2141
    %v2331 = vpop.f32.mrf.mxu0
    %v2332 = vadd.f32 0.0, %v2331
    %v2333 = vpop.f32.mrf.mxu0
    %2334 = vmatprep.mubr.f32.mxu0 0.0
    %2335 = vmatmul.mubr.f32.gmra.mxu0 %v2142
    %v2336 = vpop.f32.mrf.mxu0
    %v2337 = vadd.f32 0.0, %v2336
    %v2338 = vpop.f32.mrf.mxu0
    %2339 = vmatprep.mubr.f32.mxu0 0.0
    %2340 = vmatmul.mubr.f32.gmra.mxu0 %v2143
    %v2341 = vpop.f32.mrf.mxu0
    %v2342 = vadd.f32 0.0, %v2341
    %v2343 = vpop.f32.mrf.mxu0
    %2344 = vmatprep.mubr.f32.mxu0 0.0
    %2345 = vmatmul.mubr.f32.gmra.mxu0 %v2144
    %v2346 = vpop.f32.mrf.mxu0
    %v2347 = vadd.f32 0.0, %v2346
    %v2348 = vpop.f32.mrf.mxu0
    %2349 = vmatprep.mubr.f32.mxu0 0.0
    %2350 = vmatmul.mubr.f32.gmra.mxu0 %v2145
    %v2351 = vpop.f32.mrf.mxu0
    %v2352 = vadd.f32 0.0, %v2351
    %v2353 = vpop.f32.mrf.mxu0
    %2354 = vmatprep.mubr.f32.mxu0 0.0
    %2355 = vmatmul.mubr.f32.gmra.mxu0 %v2146
    %v2356 = vpop.f32.mrf.mxu0
    %v2357 = vadd.f32 0.0, %v2356
    %v2358 = vpop.f32.mrf.mxu0
    %2359 = vmatprep.mubr.f32.mxu0 0.0
    %2360 = vmatmul.mubr.f32.gmra.mxu0 %v2147
    %v2361 = vpop.f32.mrf.mxu0
    %v2362 = vadd.f32 0.0, %v2361
    %v2363 = vpop.f32.mrf.mxu0
    %2364 = vmatprep.mubr.f32.mxu0 0.0
    %2365 = vmatmul.mubr.f32.gmra.mxu0 %v2148
    %v2366 = vpop.f32.mrf.mxu0
    %v2367 = vadd.f32 0.0, %v2366
    %v2368 = vpop.f32.mrf.mxu0
    %2369 = vmatprep.mubr.f32.mxu0 0.0
    %2370 = vmatmul.mubr.f32.gmra.mxu0 %v2149
    %v2371 = vpop.f32.mrf.mxu0
    %v2372 = vadd.f32 0.0, %v2371
    %v2373 = vpop.f32.mrf.mxu0
    %2374 = vmatprep.mubr.f32.mxu0 0.0
    %2375 = vmatmul.mubr.f32.gmra.mxu0 %v2150
    %v2376 = vpop.f32.mrf.mxu0
    %v2377 = vadd.f32 0.0, %v2376
    %v2378 = vpop.f32.mrf.mxu0
    %2379 = vmatprep.mubr.f32.mxu0 0.0
    %2380 = vmatmul.mubr.f32.gmra.mxu0 %v2151
    %v2381 = vpop.f32.mrf.mxu0
    %v2382 = vadd.f32 0.0, %v2381
    %v2383 = vpop.f32.mrf.mxu0
    %2384 = vmatprep.mubr.f32.mxu0 0.0
    %2385 = vmatmul.mubr.f32.gmra.mxu0 %v2152
    %v2386 = vpop.f32.mrf.mxu0
    %v2387 = vadd.f32 0.0, %v2386
    %v2388 = vpop.f32.mrf.mxu0
    %2389 = vmatprep.mubr.f32.mxu0 0.0
    %2390 = vmatmul.mubr.f32.gmra.mxu0 %v2153
    %v2391 = vpop.f32.mrf.mxu0
    %v2392 = vadd.f32 0.0, %v2391
    %v2393 = vpop.f32.mrf.mxu0
    %2394 = vmatprep.mubr.f32.mxu0 0.0
    %2395 = vmatmul.mubr.f32.gmra.mxu0 %v2154
    %v2396 = vpop.f32.mrf.mxu0
    %v2397 = vadd.f32 0.0, %v2396
    %v2398 = vpop.f32.mrf.mxu0
    %2399 = vdwg.mxu0
    %v2400 = vld [vmem:[%s4] sm:$0xff]
    %v2401 = vld [vmem:[%s4 + $0x8] sm:$0xff]
    %v2402 = vld [vmem:[%s4 + $0x10] sm:$0xff]
    %v2403 = vld [vmem:[%s4 + $0x18] sm:$0xff]
    %s2404 = scalar_lea.vmem %s4, 32
    %v2405 = vld [vmem:[%s2404] sm:$0xff]
    %v2406 = vld [vmem:[%s2404 + $0x8] sm:$0xff]
    %v2407 = vld [vmem:[%s2404 + $0x10] sm:$0xff]
    %v2408 = vld [vmem:[%s2404 + $0x18] sm:$0xff]
    %vm2409 = vcmask 261120
    %v2411 = vsel %vm2409, %v2242, 0
    %v2414 = vsel %vm2409, %v2247, 0
    %v2417 = vsel %vm2409, %v2252, 0
    %v2420 = vsel %vm2409, %v2257, 0
    %2422 = vmatprep.subr.mxu0 0.0
    %2423 = vmatpush1.msra.mxu0 0.0
    %2424 = vmatprep.subr.mxu0 0.0
    %2425 = vmatpush1.msra.mxu0 0.0
    %2426 = vmatprep.subr.mxu0 0.0
    %2427 = vmatpush1.msra.mxu0 0.0
    %2428 = vmatprep.subr.mxu0 0.0
    %2429 = vmatpush1.msra.mxu0 0.0
    %2430 = vmatprep.subr.mxu0 0.0
    %2431 = vmatpush1.msra.mxu0 0.0
    %2432 = vmatprep.subr.mxu0 0.0
    %2433 = vmatpush1.msra.mxu0 0.0
    %2434 = vmatprep.subr.mxu0 0.0
    %2435 = vmatpush1.msra.mxu0 0.0
    %2436 = vmatprep.subr.mxu0 0.0
    %2437 = vmatpush1.msra.mxu0 0.0
    %2438 = vmatprep.subr.mxu0 0.0
    %2439 = vmatpush1.msra.mxu0 0.0
    %2440 = vmatprep.subr.mxu0 0.0
    %2441 = vmatpush1.msra.mxu0 0.0
    %2442 = vmatprep.subr.mxu0 0.0
    %2443 = vmatpush1.msra.mxu0 0.0
    %2444 = vmatprep.subr.mxu0 0.0
    %2445 = vmatpush1.msra.mxu0 0.0
    %2446 = vmatprep.subr.mxu0 0.0
    %2447 = vmatpush1.msra.mxu0 %v2408
    %2448 = vmatprep.subr.mxu0 0.0
    %2449 = vmatpush1.msra.mxu0 %v2407
    %2450 = vmatprep.subr.mxu0 0.0
    %2451 = vmatpush1.msra.mxu0 %v2406
    %2452 = vmatprep.subr.mxu0 0.0
    %2453 = vmatpush1.msra.mxu0 %v2405
    %2454 = vmatprep.subr.mxu0 0.0
    %2455 = vmatpush2.msra.mxu0 0.0
    %2456 = vmatprep.subr.mxu0 0.0
    %2457 = vmatpush2.msra.mxu0 0.0
    %2458 = vmatprep.subr.mxu0 0.0
    %2459 = vmatpush2.msra.mxu0 0.0
    %2460 = vmatprep.subr.mxu0 0.0
    %2461 = vmatpush2.msra.mxu0 0.0
    %2462 = vmatprep.subr.mxu0 0.0
    %2463 = vmatpush2.msra.mxu0 0.0
    %2464 = vmatprep.subr.mxu0 0.0
    %2465 = vmatpush2.msra.mxu0 0.0
    %2466 = vmatprep.subr.mxu0 0.0
    %2467 = vmatpush2.msra.mxu0 0.0
    %2468 = vmatprep.subr.mxu0 0.0
    %2469 = vmatpush2.msra.mxu0 0.0
    %2470 = vmatprep.subr.mxu0 0.0
    %2471 = vmatpush2.msra.mxu0 0.0
    %2472 = vmatprep.subr.mxu0 0.0
    %2473 = vmatpush2.msra.mxu0 0.0
    %2474 = vmatprep.subr.mxu0 0.0
    %2475 = vmatpush2.msra.mxu0 0.0
    %2476 = vmatprep.subr.mxu0 0.0
    %2477 = vmatpush2.msra.mxu0 0.0
    %2478 = vmatprep.subr.mxu0 0.0
    %2479 = vmatpush2.msra.mxu0 0.0
    %2480 = vmatprep.subr.mxu0 0.0
    %2481 = vmatpush2.msra.mxu0 0.0
    %2482 = vmatprep.subr.mxu0 0.0
    %2483 = vmatpush2.msra.mxu0 0.0
    %2484 = vmatprep.subr.mxu0 0.0
    %2485 = vmatpush2.msra.mxu0 0.0
    %2486 = vmatprep.mubr.f32.mxu0 0.0
    %2487 = vmatmul.mubr.f32.gmra.mxu0 %v2411
    %v2488 = vpop.f32.mrf.mxu0
    %v2489 = vadd.f32 0.0, %v2488
    %v2490 = vpop.f32.mrf.mxu0
    %2491 = vmatprep.mubr.f32.mxu0 0.0
    %2492 = vmatmul.mubr.f32.gmra.mxu0 %v2414
    %v2493 = vpop.f32.mrf.mxu0
    %v2494 = vadd.f32 0.0, %v2493
    %v2495 = vpop.f32.mrf.mxu0
    %2496 = vmatprep.mubr.f32.mxu0 0.0
    %2497 = vmatmul.mubr.f32.gmra.mxu0 %v2417
    %v2498 = vpop.f32.mrf.mxu0
    %v2499 = vadd.f32 0.0, %v2498
    %v2500 = vpop.f32.mrf.mxu0
    %2501 = vmatprep.mubr.f32.mxu0 0.0
    %2502 = vmatmul.mubr.f32.gmra.mxu0 %v2420
    %v2503 = vpop.f32.mrf.mxu0
    %v2504 = vpop.f32.mrf.mxu0
    %2505 = vdwg.mxu0
    %v2507 = vsel %vm2409, %v2222, 0
    %v2510 = vsel %vm2409, %v2227, 0
    %v2513 = vsel %vm2409, %v2232, 0
    %v2516 = vsel %vm2409, %v2237, 0
    %2518 = vmatprep.subr.mxu0 0.0
    %2519 = vmatpush1.msra.mxu0 0.0
    %2520 = vmatprep.subr.mxu0 0.0
    %2521 = vmatpush1.msra.mxu0 0.0
    %2522 = vmatprep.subr.mxu0 0.0
    %2523 = vmatpush1.msra.mxu0 0.0
    %2524 = vmatprep.subr.mxu0 0.0
    %2525 = vmatpush1.msra.mxu0 0.0
    %2526 = vmatprep.subr.mxu0 0.0
    %2527 = vmatpush1.msra.mxu0 0.0
    %2528 = vmatprep.subr.mxu0 0.0
    %2529 = vmatpush1.msra.mxu0 0.0
    %2530 = vmatprep.subr.mxu0 0.0
    %2531 = vmatpush1.msra.mxu0 0.0
    %2532 = vmatprep.subr.mxu0 0.0
    %2533 = vmatpush1.msra.mxu0 0.0
    %2534 = vmatprep.subr.mxu0 0.0
    %2535 = vmatpush1.msra.mxu0 0.0
    %2536 = vmatprep.subr.mxu0 0.0
    %2537 = vmatpush1.msra.mxu0 0.0
    %2538 = vmatprep.subr.mxu0 0.0
    %2539 = vmatpush1.msra.mxu0 0.0
    %2540 = vmatprep.subr.mxu0 0.0
    %2541 = vmatpush1.msra.mxu0 0.0
    %2542 = vmatprep.subr.mxu0 0.0
    %2543 = vmatpush1.msra.mxu0 %v2403
    %2544 = vmatprep.subr.mxu0 0.0
    %2545 = vmatpush1.msra.mxu0 %v2402
    %2546 = vmatprep.subr.mxu0 0.0
    %2547 = vmatpush1.msra.mxu0 %v2401
    %2548 = vmatprep.subr.mxu0 0.0
    %2549 = vmatpush1.msra.mxu0 %v2400
    %2550 = vmatprep.subr.mxu0 0.0
    %2551 = vmatpush2.msra.mxu0 0.0
    %2552 = vmatprep.subr.mxu0 0.0
    %2553 = vmatpush2.msra.mxu0 0.0
    %2554 = vmatprep.subr.mxu0 0.0
    %2555 = vmatpush2.msra.mxu0 0.0
    %2556 = vmatprep.subr.mxu0 0.0
    %2557 = vmatpush2.msra.mxu0 0.0
    %2558 = vmatprep.subr.mxu0 0.0
    %2559 = vmatpush2.msra.mxu0 0.0
    %2560 = vmatprep.subr.mxu0 0.0
    %2561 = vmatpush2.msra.mxu0 0.0
    %2562 = vmatprep.subr.mxu0 0.0
    %2563 = vmatpush2.msra.mxu0 0.0
    %2564 = vmatprep.subr.mxu0 0.0
    %2565 = vmatpush2.msra.mxu0 0.0
    %2566 = vmatprep.subr.mxu0 0.0
    %2567 = vmatpush2.msra.mxu0 0.0
    %2568 = vmatprep.subr.mxu0 0.0
    %2569 = vmatpush2.msra.mxu0 0.0
    %2570 = vmatprep.subr.mxu0 0.0
    %2571 = vmatpush2.msra.mxu0 0.0
    %2572 = vmatprep.subr.mxu0 0.0
    %2573 = vmatpush2.msra.mxu0 0.0
    %2574 = vmatprep.subr.mxu0 0.0
    %2575 = vmatpush2.msra.mxu0 0.0
    %2576 = vmatprep.subr.mxu0 0.0
    %2577 = vmatpush2.msra.mxu0 0.0
    %2578 = vmatprep.subr.mxu0 0.0
    %2579 = vmatpush2.msra.mxu0 0.0
    %2580 = vmatprep.subr.mxu0 0.0
    %2581 = vmatpush2.msra.mxu0 0.0
    %2582 = vmatprep.mubr.f32.mxu0 0.0
    %2583 = vmatmul.mubr.f32.gmra.mxu0 %v2507
    %v2584 = vpop.f32.mrf.mxu0
    %v2585 = vadd.f32 %v2489, %v2584
    %v2586 = vpop.f32.mrf.mxu0
    %2587 = vmatprep.mubr.f32.mxu0 0.0
    %2588 = vmatmul.mubr.f32.gmra.mxu0 %v2510
    %v2589 = vpop.f32.mrf.mxu0
    %v2590 = vadd.f32 %v2494, %v2589
    %v2591 = vpop.f32.mrf.mxu0
    %2592 = vmatprep.mubr.f32.mxu0 0.0
    %2593 = vmatmul.mubr.f32.gmra.mxu0 %v2513
    %v2594 = vpop.f32.mrf.mxu0
    %v2595 = vadd.f32 %v2499, %v2594
    %v2596 = vpop.f32.mrf.mxu0
    %2597 = vmatprep.mubr.f32.mxu0 0.0
    %2598 = vmatmul.mubr.f32.gmra.mxu0 %v2516
    %v2599 = vpop.f32.mrf.mxu0
    %v2600 = vpop.f32.mrf.mxu0
    %2601 = vdwg.mxu0
    %s2602 = scalar_lea.vmem %s4, 64
    %v2603 = vld [vmem:[%s2602] sm:$0xff]
    %v2604 = vld [vmem:[%s2602 + $0x8] sm:$0xff]
    %v2605 = vld [vmem:[%s2602 + $0x10] sm:$0xff]
    %v2606 = vld [vmem:[%s2602 + $0x18] sm:$0xff]
    %v2608 = vsel %vm2409, %v2262, 0
    %v2611 = vsel %vm2409, %v2267, 0
    %v2614 = vsel %vm2409, %v2272, 0
    %v2617 = vsel %vm2409, %v2277, 0
    %2619 = vmatprep.subr.mxu0 0.0
    %2620 = vmatpush1.msra.mxu0 0.0
    %2621 = vmatprep.subr.mxu0 0.0
    %2622 = vmatpush1.msra.mxu0 0.0
    %2623 = vmatprep.subr.mxu0 0.0
    %2624 = vmatpush1.msra.mxu0 0.0
    %2625 = vmatprep.subr.mxu0 0.0
    %2626 = vmatpush1.msra.mxu0 0.0
    %2627 = vmatprep.subr.mxu0 0.0
    %2628 = vmatpush1.msra.mxu0 0.0
    %2629 = vmatprep.subr.mxu0 0.0
    %2630 = vmatpush1.msra.mxu0 0.0
    %2631 = vmatprep.subr.mxu0 0.0
    %2632 = vmatpush1.msra.mxu0 0.0
    %2633 = vmatprep.subr.mxu0 0.0
    %2634 = vmatpush1.msra.mxu0 0.0
    %2635 = vmatprep.subr.mxu0 0.0
    %2636 = vmatpush1.msra.mxu0 0.0
    %2637 = vmatprep.subr.mxu0 0.0
    %2638 = vmatpush1.msra.mxu0 0.0
    %2639 = vmatprep.subr.mxu0 0.0
    %2640 = vmatpush1.msra.mxu0 0.0
    %2641 = vmatprep.subr.mxu0 0.0
    %2642 = vmatpush1.msra.mxu0 0.0
    %2643 = vmatprep.subr.mxu0 0.0
    %2644 = vmatpush1.msra.mxu0 %v2606
    %2645 = vmatprep.subr.mxu0 0.0
    %2646 = vmatpush1.msra.mxu0 %v2605
    %2647 = vmatprep.subr.mxu0 0.0
    %2648 = vmatpush1.msra.mxu0 %v2604
    %2649 = vmatprep.subr.mxu0 0.0
    %2650 = vmatpush1.msra.mxu0 %v2603
    %2651 = vmatprep.subr.mxu0 0.0
    %2652 = vmatpush2.msra.mxu0 0.0
    %2653 = vmatprep.subr.mxu0 0.0
    %2654 = vmatpush2.msra.mxu0 0.0
    %2655 = vmatprep.subr.mxu0 0.0
    %2656 = vmatpush2.msra.mxu0 0.0
    %2657 = vmatprep.subr.mxu0 0.0
    %2658 = vmatpush2.msra.mxu0 0.0
    %2659 = vmatprep.subr.mxu0 0.0
    %2660 = vmatpush2.msra.mxu0 0.0
    %2661 = vmatprep.subr.mxu0 0.0
    %2662 = vmatpush2.msra.mxu0 0.0
    %2663 = vmatprep.subr.mxu0 0.0
    %2664 = vmatpush2.msra.mxu0 0.0
    %2665 = vmatprep.subr.mxu0 0.0
    %2666 = vmatpush2.msra.mxu0 0.0
    %2667 = vmatprep.subr.mxu0 0.0
    %2668 = vmatpush2.msra.mxu0 0.0
    %2669 = vmatprep.subr.mxu0 0.0
    %2670 = vmatpush2.msra.mxu0 0.0
    %2671 = vmatprep.subr.mxu0 0.0
    %2672 = vmatpush2.msra.mxu0 0.0
    %2673 = vmatprep.subr.mxu0 0.0
    %2674 = vmatpush2.msra.mxu0 0.0
    %2675 = vmatprep.subr.mxu0 0.0
    %2676 = vmatpush2.msra.mxu0 0.0
    %2677 = vmatprep.subr.mxu0 0.0
    %2678 = vmatpush2.msra.mxu0 0.0
    %2679 = vmatprep.subr.mxu0 0.0
    %2680 = vmatpush2.msra.mxu0 0.0
    %2681 = vmatprep.subr.mxu0 0.0
    %2682 = vmatpush2.msra.mxu0 0.0
    %2683 = vmatprep.mubr.f32.mxu0 0.0
    %2684 = vmatmul.mubr.f32.gmra.mxu0 %v2608
    %v2685 = vpop.f32.mrf.mxu0
    %v2686 = vadd.f32 0.0, %v2685
    %v2687 = vpop.f32.mrf.mxu0
    %2688 = vmatprep.mubr.f32.mxu0 0.0
    %2689 = vmatmul.mubr.f32.gmra.mxu0 %v2611
    %v2690 = vpop.f32.mrf.mxu0
    %v2691 = vadd.f32 0.0, %v2690
    %v2692 = vpop.f32.mrf.mxu0
    %2693 = vmatprep.mubr.f32.mxu0 0.0
    %2694 = vmatmul.mubr.f32.gmra.mxu0 %v2614
    %v2695 = vpop.f32.mrf.mxu0
    %v2696 = vadd.f32 0.0, %v2695
    %v2697 = vpop.f32.mrf.mxu0
    %2698 = vmatprep.mubr.f32.mxu0 0.0
    %2699 = vmatmul.mubr.f32.gmra.mxu0 %v2617
    %v2700 = vpop.f32.mrf.mxu0
    %v2701 = vpop.f32.mrf.mxu0
    %2702 = vdwg.mxu0
    %v2703 = vadd.f32 %v2585, %v2686
    %v2704 = vadd.f32 %v2590, %v2691
    %v2705 = vadd.f32 %v2595, %v2696
    %s2706 = scalar_lea.vmem %s4, 96
    %v2707 = vld [vmem:[%s2706] sm:$0xff]
    %v2708 = vld [vmem:[%s2706 + $0x8] sm:$0xff]
    %v2709 = vld [vmem:[%s2706 + $0x10] sm:$0xff]
    %v2710 = vld [vmem:[%s2706 + $0x18] sm:$0xff]
    %v2712 = vsel %vm2409, %v2282, 0
    %v2715 = vsel %vm2409, %v2287, 0
    %v2718 = vsel %vm2409, %v2292, 0
    %v2721 = vsel %vm2409, %v2297, 0
    %2723 = vmatprep.subr.mxu0 0.0
    %2724 = vmatpush1.msra.mxu0 0.0
    %2725 = vmatprep.subr.mxu0 0.0
    %2726 = vmatpush1.msra.mxu0 0.0
    %2727 = vmatprep.subr.mxu0 0.0
    %2728 = vmatpush1.msra.mxu0 0.0
    %2729 = vmatprep.subr.mxu0 0.0
    %2730 = vmatpush1.msra.mxu0 0.0
    %2731 = vmatprep.subr.mxu0 0.0
    %2732 = vmatpush1.msra.mxu0 0.0
    %2733 = vmatprep.subr.mxu0 0.0
    %2734 = vmatpush1.msra.mxu0 0.0
    %2735 = vmatprep.subr.mxu0 0.0
    %2736 = vmatpush1.msra.mxu0 0.0
    %2737 = vmatprep.subr.mxu0 0.0
    %2738 = vmatpush1.msra.mxu0 0.0
    %2739 = vmatprep.subr.mxu0 0.0
    %2740 = vmatpush1.msra.mxu0 0.0
    %2741 = vmatprep.subr.mxu0 0.0
    %2742 = vmatpush1.msra.mxu0 0.0
    %2743 = vmatprep.subr.mxu0 0.0
    %2744 = vmatpush1.msra.mxu0 0.0
    %2745 = vmatprep.subr.mxu0 0.0
    %2746 = vmatpush1.msra.mxu0 0.0
    %2747 = vmatprep.subr.mxu0 0.0
    %2748 = vmatpush1.msra.mxu0 %v2710
    %2749 = vmatprep.subr.mxu0 0.0
    %2750 = vmatpush1.msra.mxu0 %v2709
    %2751 = vmatprep.subr.mxu0 0.0
    %2752 = vmatpush1.msra.mxu0 %v2708
    %2753 = vmatprep.subr.mxu0 0.0
    %2754 = vmatpush1.msra.mxu0 %v2707
    %2755 = vmatprep.subr.mxu0 0.0
    %2756 = vmatpush2.msra.mxu0 0.0
    %2757 = vmatprep.subr.mxu0 0.0
    %2758 = vmatpush2.msra.mxu0 0.0
    %2759 = vmatprep.subr.mxu0 0.0
    %2760 = vmatpush2.msra.mxu0 0.0
    %2761 = vmatprep.subr.mxu0 0.0
    %2762 = vmatpush2.msra.mxu0 0.0
    %2763 = vmatprep.subr.mxu0 0.0
    %2764 = vmatpush2.msra.mxu0 0.0
    %2765 = vmatprep.subr.mxu0 0.0
    %2766 = vmatpush2.msra.mxu0 0.0
    %2767 = vmatprep.subr.mxu0 0.0
    %2768 = vmatpush2.msra.mxu0 0.0
    %2769 = vmatprep.subr.mxu0 0.0
    %2770 = vmatpush2.msra.mxu0 0.0
    %2771 = vmatprep.subr.mxu0 0.0
    %2772 = vmatpush2.msra.mxu0 0.0
    %2773 = vmatprep.subr.mxu0 0.0
    %2774 = vmatpush2.msra.mxu0 0.0
    %2775 = vmatprep.subr.mxu0 0.0
    %2776 = vmatpush2.msra.mxu0 0.0
    %2777 = vmatprep.subr.mxu0 0.0
    %2778 = vmatpush2.msra.mxu0 0.0
    %2779 = vmatprep.subr.mxu0 0.0
    %2780 = vmatpush2.msra.mxu0 0.0
    %2781 = vmatprep.subr.mxu0 0.0
    %2782 = vmatpush2.msra.mxu0 0.0
    %2783 = vmatprep.subr.mxu0 0.0
    %2784 = vmatpush2.msra.mxu0 0.0
    %2785 = vmatprep.subr.mxu0 0.0
    %2786 = vmatpush2.msra.mxu0 0.0
    %2787 = vmatprep.mubr.f32.mxu0 0.0
    %2788 = vmatmul.mubr.f32.gmra.mxu0 %v2712
    %v2789 = vpop.f32.mrf.mxu0
    %v2790 = vadd.f32 0.0, %v2789
    %v2791 = vpop.f32.mrf.mxu0
    %2792 = vmatprep.mubr.f32.mxu0 0.0
    %2793 = vmatmul.mubr.f32.gmra.mxu0 %v2715
    %v2794 = vpop.f32.mrf.mxu0
    %v2795 = vadd.f32 0.0, %v2794
    %v2796 = vpop.f32.mrf.mxu0
    %2797 = vmatprep.mubr.f32.mxu0 0.0
    %2798 = vmatmul.mubr.f32.gmra.mxu0 %v2718
    %v2799 = vpop.f32.mrf.mxu0
    %v2800 = vadd.f32 0.0, %v2799
    %v2801 = vpop.f32.mrf.mxu0
    %2802 = vmatprep.mubr.f32.mxu0 0.0
    %2803 = vmatmul.mubr.f32.gmra.mxu0 %v2721
    %v2804 = vpop.f32.mrf.mxu0
    %v2805 = vpop.f32.mrf.mxu0
    %2806 = vdwg.mxu0
    %v2807 = vadd.f32 %v2703, %v2790
    %v2808 = vadd.f32 %v2704, %v2795
    %v2809 = vadd.f32 %v2705, %v2800
    %s2810 = scalar_lea.vmem %s4, 128
    %v2811 = vld [vmem:[%s2810] sm:$0xff]
    %v2812 = vld [vmem:[%s2810 + $0x8] sm:$0xff]
    %v2813 = vld [vmem:[%s2810 + $0x10] sm:$0xff]
    %v2814 = vld [vmem:[%s2810 + $0x18] sm:$0xff]
    %v2816 = vsel %vm2409, %v2302, 0
    %v2819 = vsel %vm2409, %v2307, 0
    %v2822 = vsel %vm2409, %v2312, 0
    %v2825 = vsel %vm2409, %v2317, 0
    %2827 = vmatprep.subr.mxu0 0.0
    %2828 = vmatpush1.msra.mxu0 0.0
    %2829 = vmatprep.subr.mxu0 0.0
    %2830 = vmatpush1.msra.mxu0 0.0
    %2831 = vmatprep.subr.mxu0 0.0
    %2832 = vmatpush1.msra.mxu0 0.0
    %2833 = vmatprep.subr.mxu0 0.0
    %2834 = vmatpush1.msra.mxu0 0.0
    %2835 = vmatprep.subr.mxu0 0.0
    %2836 = vmatpush1.msra.mxu0 0.0
    %2837 = vmatprep.subr.mxu0 0.0
    %2838 = vmatpush1.msra.mxu0 0.0
    %2839 = vmatprep.subr.mxu0 0.0
    %2840 = vmatpush1.msra.mxu0 0.0
    %2841 = vmatprep.subr.mxu0 0.0
    %2842 = vmatpush1.msra.mxu0 0.0
    %2843 = vmatprep.subr.mxu0 0.0
    %2844 = vmatpush1.msra.mxu0 0.0
    %2845 = vmatprep.subr.mxu0 0.0
    %2846 = vmatpush1.msra.mxu0 0.0
    %2847 = vmatprep.subr.mxu0 0.0
    %2848 = vmatpush1.msra.mxu0 0.0
    %2849 = vmatprep.subr.mxu0 0.0
    %2850 = vmatpush1.msra.mxu0 0.0
    %2851 = vmatprep.subr.mxu0 0.0
    %2852 = vmatpush1.msra.mxu0 %v2814
    %2853 = vmatprep.subr.mxu0 0.0
    %2854 = vmatpush1.msra.mxu0 %v2813
    %2855 = vmatprep.subr.mxu0 0.0
    %2856 = vmatpush1.msra.mxu0 %v2812
    %2857 = vmatprep.subr.mxu0 0.0
    %2858 = vmatpush1.msra.mxu0 %v2811
    %2859 = vmatprep.subr.mxu0 0.0
    %2860 = vmatpush2.msra.mxu0 0.0
    %2861 = vmatprep.subr.mxu0 0.0
    %2862 = vmatpush2.msra.mxu0 0.0
    %2863 = vmatprep.subr.mxu0 0.0
    %2864 = vmatpush2.msra.mxu0 0.0
    %2865 = vmatprep.subr.mxu0 0.0
    %2866 = vmatpush2.msra.mxu0 0.0
    %2867 = vmatprep.subr.mxu0 0.0
    %2868 = vmatpush2.msra.mxu0 0.0
    %2869 = vmatprep.subr.mxu0 0.0
    %2870 = vmatpush2.msra.mxu0 0.0
    %2871 = vmatprep.subr.mxu0 0.0
    %2872 = vmatpush2.msra.mxu0 0.0
    %2873 = vmatprep.subr.mxu0 0.0
    %2874 = vmatpush2.msra.mxu0 0.0
    %2875 = vmatprep.subr.mxu0 0.0
    %2876 = vmatpush2.msra.mxu0 0.0
    %2877 = vmatprep.subr.mxu0 0.0
    %2878 = vmatpush2.msra.mxu0 0.0
    %2879 = vmatprep.subr.mxu0 0.0
    %2880 = vmatpush2.msra.mxu0 0.0
    %2881 = vmatprep.subr.mxu0 0.0
    %2882 = vmatpush2.msra.mxu0 0.0
    %2883 = vmatprep.subr.mxu0 0.0
    %2884 = vmatpush2.msra.mxu0 0.0
    %2885 = vmatprep.subr.mxu0 0.0
    %2886 = vmatpush2.msra.mxu0 0.0
    %2887 = vmatprep.subr.mxu0 0.0
    %2888 = vmatpush2.msra.mxu0 0.0
    %2889 = vmatprep.subr.mxu0 0.0
    %2890 = vmatpush2.msra.mxu0 0.0
    %2891 = vmatprep.mubr.f32.mxu0 0.0
    %2892 = vmatmul.mubr.f32.gmra.mxu0 %v2816
    %v2893 = vpop.f32.mrf.mxu0
    %v2894 = vadd.f32 0.0, %v2893
    %v2895 = vpop.f32.mrf.mxu0
    %2896 = vmatprep.mubr.f32.mxu0 0.0
    %2897 = vmatmul.mubr.f32.gmra.mxu0 %v2819
    %v2898 = vpop.f32.mrf.mxu0
    %v2899 = vadd.f32 0.0, %v2898
    %v2900 = vpop.f32.mrf.mxu0
    %2901 = vmatprep.mubr.f32.mxu0 0.0
    %2902 = vmatmul.mubr.f32.gmra.mxu0 %v2822
    %v2903 = vpop.f32.mrf.mxu0
    %v2904 = vadd.f32 0.0, %v2903
    %v2905 = vpop.f32.mrf.mxu0
    %2906 = vmatprep.mubr.f32.mxu0 0.0
    %2907 = vmatmul.mubr.f32.gmra.mxu0 %v2825
    %v2908 = vpop.f32.mrf.mxu0
    %v2909 = vpop.f32.mrf.mxu0
    %2910 = vdwg.mxu0
    %v2911 = vadd.f32 %v2807, %v2894
    %v2912 = vadd.f32 %v2808, %v2899
    %v2913 = vadd.f32 %v2809, %v2904
    %s2914 = scalar_lea.vmem %s4, 160
    %v2915 = vld [vmem:[%s2914] sm:$0xff]
    %v2916 = vld [vmem:[%s2914 + $0x8] sm:$0xff]
    %v2917 = vld [vmem:[%s2914 + $0x10] sm:$0xff]
    %v2918 = vld [vmem:[%s2914 + $0x18] sm:$0xff]
    %v2920 = vsel %vm2409, %v2322, 0
    %v2923 = vsel %vm2409, %v2327, 0
    %v2926 = vsel %vm2409, %v2332, 0
    %v2929 = vsel %vm2409, %v2337, 0
    %2931 = vmatprep.subr.mxu0 0.0
    %2932 = vmatpush1.msra.mxu0 0.0
    %2933 = vmatprep.subr.mxu0 0.0
    %2934 = vmatpush1.msra.mxu0 0.0
    %2935 = vmatprep.subr.mxu0 0.0
    %2936 = vmatpush1.msra.mxu0 0.0
    %2937 = vmatprep.subr.mxu0 0.0
    %2938 = vmatpush1.msra.mxu0 0.0
    %2939 = vmatprep.subr.mxu0 0.0
    %2940 = vmatpush1.msra.mxu0 0.0
    %2941 = vmatprep.subr.mxu0 0.0
    %2942 = vmatpush1.msra.mxu0 0.0
    %2943 = vmatprep.subr.mxu0 0.0
    %2944 = vmatpush1.msra.mxu0 0.0
    %2945 = vmatprep.subr.mxu0 0.0
    %2946 = vmatpush1.msra.mxu0 0.0
    %2947 = vmatprep.subr.mxu0 0.0
    %2948 = vmatpush1.msra.mxu0 0.0
    %2949 = vmatprep.subr.mxu0 0.0
    %2950 = vmatpush1.msra.mxu0 0.0
    %2951 = vmatprep.subr.mxu0 0.0
    %2952 = vmatpush1.msra.mxu0 0.0
    %2953 = vmatprep.subr.mxu0 0.0
    %2954 = vmatpush1.msra.mxu0 0.0
    %2955 = vmatprep.subr.mxu0 0.0
    %2956 = vmatpush1.msra.mxu0 %v2918
    %2957 = vmatprep.subr.mxu0 0.0
    %2958 = vmatpush1.msra.mxu0 %v2917
    %2959 = vmatprep.subr.mxu0 0.0
    %2960 = vmatpush1.msra.mxu0 %v2916
    %2961 = vmatprep.subr.mxu0 0.0
    %2962 = vmatpush1.msra.mxu0 %v2915
    %2963 = vmatprep.subr.mxu0 0.0
    %2964 = vmatpush2.msra.mxu0 0.0
    %2965 = vmatprep.subr.mxu0 0.0
    %2966 = vmatpush2.msra.mxu0 0.0
    %2967 = vmatprep.subr.mxu0 0.0
    %2968 = vmatpush2.msra.mxu0 0.0
    %2969 = vmatprep.subr.mxu0 0.0
    %2970 = vmatpush2.msra.mxu0 0.0
    %2971 = vmatprep.subr.mxu0 0.0
    %2972 = vmatpush2.msra.mxu0 0.0
    %2973 = vmatprep.subr.mxu0 0.0
    %2974 = vmatpush2.msra.mxu0 0.0
    %2975 = vmatprep.subr.mxu0 0.0
    %2976 = vmatpush2.msra.mxu0 0.0
    %2977 = vmatprep.subr.mxu0 0.0
    %2978 = vmatpush2.msra.mxu0 0.0
    %2979 = vmatprep.subr.mxu0 0.0
    %2980 = vmatpush2.msra.mxu0 0.0
    %2981 = vmatprep.subr.mxu0 0.0
    %2982 = vmatpush2.msra.mxu0 0.0
    %2983 = vmatprep.subr.mxu0 0.0
    %2984 = vmatpush2.msra.mxu0 0.0
    %2985 = vmatprep.subr.mxu0 0.0
    %2986 = vmatpush2.msra.mxu0 0.0
    %2987 = vmatprep.subr.mxu0 0.0
    %2988 = vmatpush2.msra.mxu0 0.0
    %2989 = vmatprep.subr.mxu0 0.0
    %2990 = vmatpush2.msra.mxu0 0.0
    %2991 = vmatprep.subr.mxu0 0.0
    %2992 = vmatpush2.msra.mxu0 0.0
    %2993 = vmatprep.subr.mxu0 0.0
    %2994 = vmatpush2.msra.mxu0 0.0
    %2995 = vmatprep.mubr.f32.mxu0 0.0
    %2996 = vmatmul.mubr.f32.gmra.mxu0 %v2920
    %v2997 = vpop.f32.mrf.mxu0
    %v2998 = vadd.f32 0.0, %v2997
    %v2999 = vpop.f32.mrf.mxu0
    %3000 = vmatprep.mubr.f32.mxu0 0.0
    %3001 = vmatmul.mubr.f32.gmra.mxu0 %v2923
    %v3002 = vpop.f32.mrf.mxu0
    %v3003 = vadd.f32 0.0, %v3002
    %v3004 = vpop.f32.mrf.mxu0
    %3005 = vmatprep.mubr.f32.mxu0 0.0
    %3006 = vmatmul.mubr.f32.gmra.mxu0 %v2926
    %v3007 = vpop.f32.mrf.mxu0
    %v3008 = vadd.f32 0.0, %v3007
    %v3009 = vpop.f32.mrf.mxu0
    %3010 = vmatprep.mubr.f32.mxu0 0.0
    %3011 = vmatmul.mubr.f32.gmra.mxu0 %v2929
    %v3012 = vpop.f32.mrf.mxu0
    %v3013 = vpop.f32.mrf.mxu0
    %3014 = vdwg.mxu0
    %v3015 = vadd.f32 %v2911, %v2998
    %v3016 = vadd.f32 %v2912, %v3003
    %v3017 = vadd.f32 %v2913, %v3008
    %s3018 = scalar_lea.vmem %s4, 192
    %v3019 = vld [vmem:[%s3018] sm:$0xff]
    %v3020 = vld [vmem:[%s3018 + $0x8] sm:$0xff]
    %v3021 = vld [vmem:[%s3018 + $0x10] sm:$0xff]
    %v3022 = vld [vmem:[%s3018 + $0x18] sm:$0xff]
    %v3024 = vsel %vm2409, %v2342, 0
    %v3027 = vsel %vm2409, %v2347, 0
    %v3030 = vsel %vm2409, %v2352, 0
    %v3033 = vsel %vm2409, %v2357, 0
    %3035 = vmatprep.subr.mxu0 0.0
    %3036 = vmatpush1.msra.mxu0 0.0
    %3037 = vmatprep.subr.mxu0 0.0
    %3038 = vmatpush1.msra.mxu0 0.0
    %3039 = vmatprep.subr.mxu0 0.0
    %3040 = vmatpush1.msra.mxu0 0.0
    %3041 = vmatprep.subr.mxu0 0.0
    %3042 = vmatpush1.msra.mxu0 0.0
    %3043 = vmatprep.subr.mxu0 0.0
    %3044 = vmatpush1.msra.mxu0 0.0
    %3045 = vmatprep.subr.mxu0 0.0
    %3046 = vmatpush1.msra.mxu0 0.0
    %3047 = vmatprep.subr.mxu0 0.0
    %3048 = vmatpush1.msra.mxu0 0.0
    %3049 = vmatprep.subr.mxu0 0.0
    %3050 = vmatpush1.msra.mxu0 0.0
    %3051 = vmatprep.subr.mxu0 0.0
    %3052 = vmatpush1.msra.mxu0 0.0
    %3053 = vmatprep.subr.mxu0 0.0
    %3054 = vmatpush1.msra.mxu0 0.0
    %3055 = vmatprep.subr.mxu0 0.0
    %3056 = vmatpush1.msra.mxu0 0.0
    %3057 = vmatprep.subr.mxu0 0.0
    %3058 = vmatpush1.msra.mxu0 0.0
    %3059 = vmatprep.subr.mxu0 0.0
    %3060 = vmatpush1.msra.mxu0 %v3022
    %3061 = vmatprep.subr.mxu0 0.0
    %3062 = vmatpush1.msra.mxu0 %v3021
    %3063 = vmatprep.subr.mxu0 0.0
    %3064 = vmatpush1.msra.mxu0 %v3020
    %3065 = vmatprep.subr.mxu0 0.0
    %3066 = vmatpush1.msra.mxu0 %v3019
    %3067 = vmatprep.subr.mxu0 0.0
    %3068 = vmatpush2.msra.mxu0 0.0
    %3069 = vmatprep.subr.mxu0 0.0
    %3070 = vmatpush2.msra.mxu0 0.0
    %3071 = vmatprep.subr.mxu0 0.0
    %3072 = vmatpush2.msra.mxu0 0.0
    %3073 = vmatprep.subr.mxu0 0.0
    %3074 = vmatpush2.msra.mxu0 0.0
    %3075 = vmatprep.subr.mxu0 0.0
    %3076 = vmatpush2.msra.mxu0 0.0
    %3077 = vmatprep.subr.mxu0 0.0
    %3078 = vmatpush2.msra.mxu0 0.0
    %3079 = vmatprep.subr.mxu0 0.0
    %3080 = vmatpush2.msra.mxu0 0.0
    %3081 = vmatprep.subr.mxu0 0.0
    %3082 = vmatpush2.msra.mxu0 0.0
    %3083 = vmatprep.subr.mxu0 0.0
    %3084 = vmatpush2.msra.mxu0 0.0
    %3085 = vmatprep.subr.mxu0 0.0
    %3086 = vmatpush2.msra.mxu0 0.0
    %3087 = vmatprep.subr.mxu0 0.0
    %3088 = vmatpush2.msra.mxu0 0.0
    %3089 = vmatprep.subr.mxu0 0.0
    %3090 = vmatpush2.msra.mxu0 0.0
    %3091 = vmatprep.subr.mxu0 0.0
    %3092 = vmatpush2.msra.mxu0 0.0
    %3093 = vmatprep.subr.mxu0 0.0
    %3094 = vmatpush2.msra.mxu0 0.0
    %3095 = vmatprep.subr.mxu0 0.0
    %3096 = vmatpush2.msra.mxu0 0.0
    %3097 = vmatprep.subr.mxu0 0.0
    %3098 = vmatpush2.msra.mxu0 0.0
    %3099 = vmatprep.mubr.f32.mxu0 0.0
    %3100 = vmatmul.mubr.f32.gmra.mxu0 %v3024
    %v3101 = vpop.f32.mrf.mxu0
    %v3102 = vadd.f32 0.0, %v3101
    %v3103 = vpop.f32.mrf.mxu0
    %3104 = vmatprep.mubr.f32.mxu0 0.0
    %3105 = vmatmul.mubr.f32.gmra.mxu0 %v3027
    %v3106 = vpop.f32.mrf.mxu0
    %v3107 = vadd.f32 0.0, %v3106
    %v3108 = vpop.f32.mrf.mxu0
    %3109 = vmatprep.mubr.f32.mxu0 0.0
    %3110 = vmatmul.mubr.f32.gmra.mxu0 %v3030
    %v3111 = vpop.f32.mrf.mxu0
    %v3112 = vadd.f32 0.0, %v3111
    %v3113 = vpop.f32.mrf.mxu0
    %3114 = vmatprep.mubr.f32.mxu0 0.0
    %3115 = vmatmul.mubr.f32.gmra.mxu0 %v3033
    %v3116 = vpop.f32.mrf.mxu0
    %v3117 = vpop.f32.mrf.mxu0
    %3118 = vdwg.mxu0
    %v3119 = vadd.f32 %v3015, %v3102
    %v3120 = vadd.f32 %v3016, %v3107
    %v3121 = vadd.f32 %v3017, %v3112
    %s3122 = scalar_lea.vmem %s4, 224
    %v3123 = vld [vmem:[%s3122] sm:$0xff]
    %v3124 = vld [vmem:[%s3122 + $0x8] sm:$0xff]
    %v3125 = vld [vmem:[%s3122 + $0x10] sm:$0xff]
    %v3126 = vld [vmem:[%s3122 + $0x18] sm:$0xff]
    %v3128 = vsel %vm2409, %v2362, 0
    %v3131 = vsel %vm2409, %v2367, 0
    %v3134 = vsel %vm2409, %v2372, 0
    %v3137 = vsel %vm2409, %v2377, 0
    %3139 = vmatprep.subr.mxu0 0.0
    %3140 = vmatpush1.msra.mxu0 0.0
    %3141 = vmatprep.subr.mxu0 0.0
    %3142 = vmatpush1.msra.mxu0 0.0
    %3143 = vmatprep.subr.mxu0 0.0
    %3144 = vmatpush1.msra.mxu0 0.0
    %3145 = vmatprep.subr.mxu0 0.0
    %3146 = vmatpush1.msra.mxu0 0.0
    %3147 = vmatprep.subr.mxu0 0.0
    %3148 = vmatpush1.msra.mxu0 0.0
    %3149 = vmatprep.subr.mxu0 0.0
    %3150 = vmatpush1.msra.mxu0 0.0
    %3151 = vmatprep.subr.mxu0 0.0
    %3152 = vmatpush1.msra.mxu0 0.0
    %3153 = vmatprep.subr.mxu0 0.0
    %3154 = vmatpush1.msra.mxu0 0.0
    %3155 = vmatprep.subr.mxu0 0.0
    %3156 = vmatpush1.msra.mxu0 0.0
    %3157 = vmatprep.subr.mxu0 0.0
    %3158 = vmatpush1.msra.mxu0 0.0
    %3159 = vmatprep.subr.mxu0 0.0
    %3160 = vmatpush1.msra.mxu0 0.0
    %3161 = vmatprep.subr.mxu0 0.0
    %3162 = vmatpush1.msra.mxu0 0.0
    %3163 = vmatprep.subr.mxu0 0.0
    %3164 = vmatpush1.msra.mxu0 %v3126
    %3165 = vmatprep.subr.mxu0 0.0
    %3166 = vmatpush1.msra.mxu0 %v3125
    %3167 = vmatprep.subr.mxu0 0.0
    %3168 = vmatpush1.msra.mxu0 %v3124
    %3169 = vmatprep.subr.mxu0 0.0
    %3170 = vmatpush1.msra.mxu0 %v3123
    %3171 = vmatprep.subr.mxu0 0.0
    %3172 = vmatpush2.msra.mxu0 0.0
    %3173 = vmatprep.subr.mxu0 0.0
    %3174 = vmatpush2.msra.mxu0 0.0
    %3175 = vmatprep.subr.mxu0 0.0
    %3176 = vmatpush2.msra.mxu0 0.0
    %3177 = vmatprep.subr.mxu0 0.0
    %3178 = vmatpush2.msra.mxu0 0.0
    %3179 = vmatprep.subr.mxu0 0.0
    %3180 = vmatpush2.msra.mxu0 0.0
    %3181 = vmatprep.subr.mxu0 0.0
    %3182 = vmatpush2.msra.mxu0 0.0
    %3183 = vmatprep.subr.mxu0 0.0
    %3184 = vmatpush2.msra.mxu0 0.0
    %3185 = vmatprep.subr.mxu0 0.0
    %3186 = vmatpush2.msra.mxu0 0.0
    %3187 = vmatprep.subr.mxu0 0.0
    %3188 = vmatpush2.msra.mxu0 0.0
    %3189 = vmatprep.subr.mxu0 0.0
    %3190 = vmatpush2.msra.mxu0 0.0
    %3191 = vmatprep.subr.mxu0 0.0
    %3192 = vmatpush2.msra.mxu0 0.0
    %3193 = vmatprep.subr.mxu0 0.0
    %3194 = vmatpush2.msra.mxu0 0.0
    %3195 = vmatprep.subr.mxu0 0.0
    %3196 = vmatpush2.msra.mxu0 0.0
    %3197 = vmatprep.subr.mxu0 0.0
    %3198 = vmatpush2.msra.mxu0 0.0
    %3199 = vmatprep.subr.mxu0 0.0
    %3200 = vmatpush2.msra.mxu0 0.0
    %3201 = vmatprep.subr.mxu0 0.0
    %3202 = vmatpush2.msra.mxu0 0.0
    %3203 = vmatprep.mubr.f32.mxu0 0.0
    %3204 = vmatmul.mubr.f32.gmra.mxu0 %v3128
    %v3205 = vpop.f32.mrf.mxu0
    %v3206 = vadd.f32 0.0, %v3205
    %v3207 = vpop.f32.mrf.mxu0
    %3208 = vmatprep.mubr.f32.mxu0 0.0
    %3209 = vmatmul.mubr.f32.gmra.mxu0 %v3131
    %v3210 = vpop.f32.mrf.mxu0
    %v3211 = vadd.f32 0.0, %v3210
    %v3212 = vpop.f32.mrf.mxu0
    %3213 = vmatprep.mubr.f32.mxu0 0.0
    %3214 = vmatmul.mubr.f32.gmra.mxu0 %v3134
    %v3215 = vpop.f32.mrf.mxu0
    %v3216 = vadd.f32 0.0, %v3215
    %v3217 = vpop.f32.mrf.mxu0
    %3218 = vmatprep.mubr.f32.mxu0 0.0
    %3219 = vmatmul.mubr.f32.gmra.mxu0 %v3137
    %v3220 = vpop.f32.mrf.mxu0
    %v3221 = vpop.f32.mrf.mxu0
    %3222 = vdwg.mxu0
    %v3223 = vadd.f32 %v3119, %v3206
    %v3224 = vadd.f32 %v3120, %v3211
    %v3225 = vadd.f32 %v3121, %v3216
    %s3226 = scalar_lea.vmem %s4, 256
    %v3227 = vld [vmem:[%s3226] sm:$0xff]
    %v3228 = vld [vmem:[%s3226 + $0x8] sm:$0xff]
    %v3229 = vld [vmem:[%s3226 + $0x10] sm:$0xff]
    %v3230 = vld [vmem:[%s3226 + $0x18] sm:$0xff]
    %v3232 = vsel %vm2409, %v2382, 0
    %v3235 = vsel %vm2409, %v2387, 0
    %v3238 = vsel %vm2409, %v2392, 0
    %v3241 = vsel %vm2409, %v2397, 0
    %3243 = vmatprep.subr.mxu0 0.0
    %3244 = vmatpush1.msra.mxu0 0.0
    %3245 = vmatprep.subr.mxu0 0.0
    %3246 = vmatpush1.msra.mxu0 0.0
    %3247 = vmatprep.subr.mxu0 0.0
    %3248 = vmatpush1.msra.mxu0 0.0
    %3249 = vmatprep.subr.mxu0 0.0
    %3250 = vmatpush1.msra.mxu0 0.0
    %3251 = vmatprep.subr.mxu0 0.0
    %3252 = vmatpush1.msra.mxu0 0.0
    %3253 = vmatprep.subr.mxu0 0.0
    %3254 = vmatpush1.msra.mxu0 0.0
    %3255 = vmatprep.subr.mxu0 0.0
    %3256 = vmatpush1.msra.mxu0 0.0
    %3257 = vmatprep.subr.mxu0 0.0
    %3258 = vmatpush1.msra.mxu0 0.0
    %3259 = vmatprep.subr.mxu0 0.0
    %3260 = vmatpush1.msra.mxu0 0.0
    %3261 = vmatprep.subr.mxu0 0.0
    %3262 = vmatpush1.msra.mxu0 0.0
    %3263 = vmatprep.subr.mxu0 0.0
    %3264 = vmatpush1.msra.mxu0 0.0
    %3265 = vmatprep.subr.mxu0 0.0
    %3266 = vmatpush1.msra.mxu0 0.0
    %3267 = vmatprep.subr.mxu0 0.0
    %3268 = vmatpush1.msra.mxu0 %v3230
    %3269 = vmatprep.subr.mxu0 0.0
    %3270 = vmatpush1.msra.mxu0 %v3229
    %3271 = vmatprep.subr.mxu0 0.0
    %3272 = vmatpush1.msra.mxu0 %v3228
    %3273 = vmatprep.subr.mxu0 0.0
    %3274 = vmatpush1.msra.mxu0 %v3227
    %3275 = vmatprep.subr.mxu0 0.0
    %3276 = vmatpush2.msra.mxu0 0.0
    %3277 = vmatprep.subr.mxu0 0.0
    %3278 = vmatpush2.msra.mxu0 0.0
    %3279 = vmatprep.subr.mxu0 0.0
    %3280 = vmatpush2.msra.mxu0 0.0
    %3281 = vmatprep.subr.mxu0 0.0
    %3282 = vmatpush2.msra.mxu0 0.0
    %3283 = vmatprep.subr.mxu0 0.0
    %3284 = vmatpush2.msra.mxu0 0.0
    %3285 = vmatprep.subr.mxu0 0.0
    %3286 = vmatpush2.msra.mxu0 0.0
    %3287 = vmatprep.subr.mxu0 0.0
    %3288 = vmatpush2.msra.mxu0 0.0
    %3289 = vmatprep.subr.mxu0 0.0
    %3290 = vmatpush2.msra.mxu0 0.0
    %3291 = vmatprep.subr.mxu0 0.0
    %3292 = vmatpush2.msra.mxu0 0.0
    %3293 = vmatprep.subr.mxu0 0.0
    %3294 = vmatpush2.msra.mxu0 0.0
    %3295 = vmatprep.subr.mxu0 0.0
    %3296 = vmatpush2.msra.mxu0 0.0
    %3297 = vmatprep.subr.mxu0 0.0
    %3298 = vmatpush2.msra.mxu0 0.0
    %3299 = vmatprep.subr.mxu0 0.0
    %3300 = vmatpush2.msra.mxu0 0.0
    %3301 = vmatprep.subr.mxu0 0.0
    %3302 = vmatpush2.msra.mxu0 0.0
    %3303 = vmatprep.subr.mxu0 0.0
    %3304 = vmatpush2.msra.mxu0 0.0
    %3305 = vmatprep.subr.mxu0 0.0
    %3306 = vmatpush2.msra.mxu0 0.0
    %3307 = vmatprep.mubr.f32.mxu0 0.0
    %3308 = vmatmul.mubr.f32.gmra.mxu0 %v3232
    %v3309 = vpop.f32.mrf.mxu0
    %v3310 = vadd.f32 0.0, %v3309
    %v3311 = vpop.f32.mrf.mxu0
    %3312 = vmatprep.mubr.f32.mxu0 0.0
    %3313 = vmatmul.mubr.f32.gmra.mxu0 %v3235
    %v3314 = vpop.f32.mrf.mxu0
    %v3315 = vadd.f32 0.0, %v3314
    %v3316 = vpop.f32.mrf.mxu0
    %3317 = vmatprep.mubr.f32.mxu0 0.0
    %3318 = vmatmul.mubr.f32.gmra.mxu0 %v3238
    %v3319 = vpop.f32.mrf.mxu0
    %v3320 = vadd.f32 0.0, %v3319
    %v3321 = vpop.f32.mrf.mxu0
    %3322 = vmatprep.mubr.f32.mxu0 0.0
    %3323 = vmatmul.mubr.f32.gmra.mxu0 %v3241
    %v3324 = vpop.f32.mrf.mxu0
    %v3325 = vpop.f32.mrf.mxu0
    %3326 = vdwg.mxu0
    %v3327 = vadd.f32 %v3223, %v3310
    %v3328 = vadd.f32 %v3224, %v3315
    %v3329 = vadd.f32 %v3225, %v3320
    %v3330 = vld [vmem:[%s5] sm:$0x1]
    %v3332 = vlaneseq
    %v3333 = vshrl.u32 %v3332, 7
    %v3334 = vsub.s32 0, %v3333
    %v3335 = vrot.slane %v3330, %v3334
    %v3337 = vadd.f32 %v3327, %v3335
    %v3338 = vadd.f32 %v3328, %v3335
    %v3339 = vadd.f32 %v3329, %v3335
    %v3340 = vmax.f32 %v3337, 0.0
    %v3341 = vmax.f32 %v3338, 0.0
    %v3342 = vmax.f32 %v3339, 0.0
    %v3343 = vld [vmem:[%s6] sm:$0xff]
    %v3344 = vld [vmem:[%s6 + $0x8] sm:$0xff]
    %v3345 = vld [vmem:[%s6 + $0x10] sm:$0xff]
    %v3346 = vld [vmem:[%s6 + $0x18] sm:$0xff]
    %s3347 = scalar_lea.vmem %s6, 32
    %v3348 = vld [vmem:[%s3347] sm:$0xff]
    %v3349 = vld [vmem:[%s3347 + $0x8] sm:$0xff]
    %v3350 = vld [vmem:[%s3347 + $0x10] sm:$0xff]
    %v3351 = vld [vmem:[%s3347 + $0x18] sm:$0xff]
    %v3353 = vrot.slane %v3340, 2
    %v3354 = vsel %vm2409, %v3353, 0
    %3356 = vmatprep.subr.mxu0 0.0
    %3357 = vmatpush1.msra.mxu0 0.0
    %3358 = vmatprep.subr.mxu0 0.0
    %3359 = vmatpush1.msra.mxu0 0.0
    %3360 = vmatprep.subr.mxu0 0.0
    %3361 = vmatpush1.msra.mxu0 0.0
    %3362 = vmatprep.subr.mxu0 0.0
    %3363 = vmatpush1.msra.mxu0 0.0
    %3364 = vmatprep.subr.mxu0 0.0
    %3365 = vmatpush1.msra.mxu0 0.0
    %3366 = vmatprep.subr.mxu0 0.0
    %3367 = vmatpush1.msra.mxu0 0.0
    %3368 = vmatprep.subr.mxu0 0.0
    %3369 = vmatpush1.msra.mxu0 0.0
    %3370 = vmatprep.subr.mxu0 0.0
    %3371 = vmatpush1.msra.mxu0 0.0
    %3372 = vmatprep.subr.mxu0 0.0
    %3373 = vmatpush1.msra.mxu0 0.0
    %3374 = vmatprep.subr.mxu0 0.0
    %3375 = vmatpush1.msra.mxu0 0.0
    %3376 = vmatprep.subr.mxu0 0.0
    %3377 = vmatpush1.msra.mxu0 0.0
    %3378 = vmatprep.subr.mxu0 0.0
    %3379 = vmatpush1.msra.mxu0 0.0
    %3380 = vmatprep.subr.mxu0 0.0
    %3381 = vmatpush1.msra.mxu0 %v3351
    %3382 = vmatprep.subr.mxu0 0.0
    %3383 = vmatpush1.msra.mxu0 %v3350
    %3384 = vmatprep.subr.mxu0 0.0
    %3385 = vmatpush1.msra.mxu0 %v3349
    %3386 = vmatprep.subr.mxu0 0.0
    %3387 = vmatpush1.msra.mxu0 %v3348
    %3388 = vmatprep.subr.mxu0 0.0
    %3389 = vmatpush2.msra.mxu0 0.0
    %3390 = vmatprep.subr.mxu0 0.0
    %3391 = vmatpush2.msra.mxu0 0.0
    %3392 = vmatprep.subr.mxu0 0.0
    %3393 = vmatpush2.msra.mxu0 0.0
    %3394 = vmatprep.subr.mxu0 0.0
    %3395 = vmatpush2.msra.mxu0 0.0
    %3396 = vmatprep.subr.mxu0 0.0
    %3397 = vmatpush2.msra.mxu0 0.0
    %3398 = vmatprep.subr.mxu0 0.0
    %3399 = vmatpush2.msra.mxu0 0.0
    %3400 = vmatprep.subr.mxu0 0.0
    %3401 = vmatpush2.msra.mxu0 0.0
    %3402 = vmatprep.subr.mxu0 0.0
    %3403 = vmatpush2.msra.mxu0 0.0
    %3404 = vmatprep.subr.mxu0 0.0
    %3405 = vmatpush2.msra.mxu0 0.0
    %3406 = vmatprep.subr.mxu0 0.0
    %3407 = vmatpush2.msra.mxu0 0.0
    %3408 = vmatprep.subr.mxu0 0.0
    %3409 = vmatpush2.msra.mxu0 0.0
    %3410 = vmatprep.subr.mxu0 0.0
    %3411 = vmatpush2.msra.mxu0 0.0
    %3412 = vmatprep.subr.mxu0 0.0
    %3413 = vmatpush2.msra.mxu0 0.0
    %3414 = vmatprep.subr.mxu0 0.0
    %3415 = vmatpush2.msra.mxu0 0.0
    %3416 = vmatprep.subr.mxu0 0.0
    %3417 = vmatpush2.msra.mxu0 0.0
    %3418 = vmatprep.subr.mxu0 0.0
    %3419 = vmatpush2.msra.mxu0 0.0
    %3420 = vmatprep.mubr.f32.mxu0 0.0
    %3421 = vmatmul.mubr.f32.gmra.mxu0 %v3354
    %v3422 = vpop.f32.mrf.mxu0
    %v3423 = vadd.f32 0.0, %v3422
    %v3424 = vpop.f32.mrf.mxu0
    %3425 = vdwg.mxu0
    %v3426 = vsel %vm2409, %v3340, 0
    %3428 = vmatprep.subr.mxu0 0.0
    %3429 = vmatpush1.msra.mxu0 0.0
    %3430 = vmatprep.subr.mxu0 0.0
    %3431 = vmatpush1.msra.mxu0 0.0
    %3432 = vmatprep.subr.mxu0 0.0
    %3433 = vmatpush1.msra.mxu0 0.0
    %3434 = vmatprep.subr.mxu0 0.0
    %3435 = vmatpush1.msra.mxu0 0.0
    %3436 = vmatprep.subr.mxu0 0.0
    %3437 = vmatpush1.msra.mxu0 0.0
    %3438 = vmatprep.subr.mxu0 0.0
    %3439 = vmatpush1.msra.mxu0 0.0
    %3440 = vmatprep.subr.mxu0 0.0
    %3441 = vmatpush1.msra.mxu0 0.0
    %3442 = vmatprep.subr.mxu0 0.0
    %3443 = vmatpush1.msra.mxu0 0.0
    %3444 = vmatprep.subr.mxu0 0.0
    %3445 = vmatpush1.msra.mxu0 0.0
    %3446 = vmatprep.subr.mxu0 0.0
    %3447 = vmatpush1.msra.mxu0 0.0
    %3448 = vmatprep.subr.mxu0 0.0
    %3449 = vmatpush1.msra.mxu0 0.0
    %3450 = vmatprep.subr.mxu0 0.0
    %3451 = vmatpush1.msra.mxu0 0.0
    %3452 = vmatprep.subr.mxu0 0.0
    %3453 = vmatpush1.msra.mxu0 %v3346
    %3454 = vmatprep.subr.mxu0 0.0
    %3455 = vmatpush1.msra.mxu0 %v3345
    %3456 = vmatprep.subr.mxu0 0.0
    %3457 = vmatpush1.msra.mxu0 %v3344
    %3458 = vmatprep.subr.mxu0 0.0
    %3459 = vmatpush1.msra.mxu0 %v3343
    %3460 = vmatprep.subr.mxu0 0.0
    %3461 = vmatpush2.msra.mxu0 0.0
    %3462 = vmatprep.subr.mxu0 0.0
    %3463 = vmatpush2.msra.mxu0 0.0
    %3464 = vmatprep.subr.mxu0 0.0
    %3465 = vmatpush2.msra.mxu0 0.0
    %3466 = vmatprep.subr.mxu0 0.0
    %3467 = vmatpush2.msra.mxu0 0.0
    %3468 = vmatprep.subr.mxu0 0.0
    %3469 = vmatpush2.msra.mxu0 0.0
    %3470 = vmatprep.subr.mxu0 0.0
    %3471 = vmatpush2.msra.mxu0 0.0
    %3472 = vmatprep.subr.mxu0 0.0
    %3473 = vmatpush2.msra.mxu0 0.0
    %3474 = vmatprep.subr.mxu0 0.0
    %3475 = vmatpush2.msra.mxu0 0.0
    %3476 = vmatprep.subr.mxu0 0.0
    %3477 = vmatpush2.msra.mxu0 0.0
    %3478 = vmatprep.subr.mxu0 0.0
    %3479 = vmatpush2.msra.mxu0 0.0
    %3480 = vmatprep.subr.mxu0 0.0
    %3481 = vmatpush2.msra.mxu0 0.0
    %3482 = vmatprep.subr.mxu0 0.0
    %3483 = vmatpush2.msra.mxu0 0.0
    %3484 = vmatprep.subr.mxu0 0.0
    %3485 = vmatpush2.msra.mxu0 0.0
    %3486 = vmatprep.subr.mxu0 0.0
    %3487 = vmatpush2.msra.mxu0 0.0
    %3488 = vmatprep.subr.mxu0 0.0
    %3489 = vmatpush2.msra.mxu0 0.0
    %3490 = vmatprep.subr.mxu0 0.0
    %3491 = vmatpush2.msra.mxu0 0.0
    %3492 = vmatprep.mubr.f32.mxu0 0.0
    %3493 = vmatmul.mubr.f32.gmra.mxu0 %v3426
    %v3494 = vpop.f32.mrf.mxu0
    %v3495 = vadd.f32 %v3423, %v3494
    %v3496 = vpop.f32.mrf.mxu0
    %3497 = vdwg.mxu0
    %s3498 = scalar_lea.vmem %s6, 64
    %v3499 = vld [vmem:[%s3498] sm:$0xff]
    %v3500 = vld [vmem:[%s3498 + $0x8] sm:$0xff]
    %v3501 = vld [vmem:[%s3498 + $0x10] sm:$0xff]
    %v3502 = vld [vmem:[%s3498 + $0x18] sm:$0xff]
    %v3503 = vrot.slane %v3340, 4
    %v3504 = vsel %vm2409, %v3503, 0
    %3506 = vmatprep.subr.mxu0 0.0
    %3507 = vmatpush1.msra.mxu0 0.0
    %3508 = vmatprep.subr.mxu0 0.0
    %3509 = vmatpush1.msra.mxu0 0.0
    %3510 = vmatprep.subr.mxu0 0.0
    %3511 = vmatpush1.msra.mxu0 0.0
    %3512 = vmatprep.subr.mxu0 0.0
    %3513 = vmatpush1.msra.mxu0 0.0
    %3514 = vmatprep.subr.mxu0 0.0
    %3515 = vmatpush1.msra.mxu0 0.0
    %3516 = vmatprep.subr.mxu0 0.0
    %3517 = vmatpush1.msra.mxu0 0.0
    %3518 = vmatprep.subr.mxu0 0.0
    %3519 = vmatpush1.msra.mxu0 0.0
    %3520 = vmatprep.subr.mxu0 0.0
    %3521 = vmatpush1.msra.mxu0 0.0
    %3522 = vmatprep.subr.mxu0 0.0
    %3523 = vmatpush1.msra.mxu0 0.0
    %3524 = vmatprep.subr.mxu0 0.0
    %3525 = vmatpush1.msra.mxu0 0.0
    %3526 = vmatprep.subr.mxu0 0.0
    %3527 = vmatpush1.msra.mxu0 0.0
    %3528 = vmatprep.subr.mxu0 0.0
    %3529 = vmatpush1.msra.mxu0 0.0
    %3530 = vmatprep.subr.mxu0 0.0
    %3531 = vmatpush1.msra.mxu0 %v3502
    %3532 = vmatprep.subr.mxu0 0.0
    %3533 = vmatpush1.msra.mxu0 %v3501
    %3534 = vmatprep.subr.mxu0 0.0
    %3535 = vmatpush1.msra.mxu0 %v3500
    %3536 = vmatprep.subr.mxu0 0.0
    %3537 = vmatpush1.msra.mxu0 %v3499
    %3538 = vmatprep.subr.mxu0 0.0
    %3539 = vmatpush2.msra.mxu0 0.0
    %3540 = vmatprep.subr.mxu0 0.0
    %3541 = vmatpush2.msra.mxu0 0.0
    %3542 = vmatprep.subr.mxu0 0.0
    %3543 = vmatpush2.msra.mxu0 0.0
    %3544 = vmatprep.subr.mxu0 0.0
    %3545 = vmatpush2.msra.mxu0 0.0
    %3546 = vmatprep.subr.mxu0 0.0
    %3547 = vmatpush2.msra.mxu0 0.0
    %3548 = vmatprep.subr.mxu0 0.0
    %3549 = vmatpush2.msra.mxu0 0.0
    %3550 = vmatprep.subr.mxu0 0.0
    %3551 = vmatpush2.msra.mxu0 0.0
    %3552 = vmatprep.subr.mxu0 0.0
    %3553 = vmatpush2.msra.mxu0 0.0
    %3554 = vmatprep.subr.mxu0 0.0
    %3555 = vmatpush2.msra.mxu0 0.0
    %3556 = vmatprep.subr.mxu0 0.0
    %3557 = vmatpush2.msra.mxu0 0.0
    %3558 = vmatprep.subr.mxu0 0.0
    %3559 = vmatpush2.msra.mxu0 0.0
    %3560 = vmatprep.subr.mxu0 0.0
    %3561 = vmatpush2.msra.mxu0 0.0
    %3562 = vmatprep.subr.mxu0 0.0
    %3563 = vmatpush2.msra.mxu0 0.0
    %3564 = vmatprep.subr.mxu0 0.0
    %3565 = vmatpush2.msra.mxu0 0.0
    %3566 = vmatprep.subr.mxu0 0.0
    %3567 = vmatpush2.msra.mxu0 0.0
    %3568 = vmatprep.subr.mxu0 0.0
    %3569 = vmatpush2.msra.mxu0 0.0
    %3570 = vmatprep.mubr.f32.mxu0 0.0
    %3571 = vmatmul.mubr.f32.gmra.mxu0 %v3504
    %v3572 = vpop.f32.mrf.mxu0
    %v3573 = vadd.f32 0.0, %v3572
    %v3574 = vpop.f32.mrf.mxu0
    %3575 = vdwg.mxu0
    %v3576 = vadd.f32 %v3495, %v3573
    %s3577 = scalar_lea.vmem %s6, 96
    %v3578 = vld [vmem:[%s3577] sm:$0xff]
    %v3579 = vld [vmem:[%s3577 + $0x8] sm:$0xff]
    %v3580 = vld [vmem:[%s3577 + $0x10] sm:$0xff]
    %v3581 = vld [vmem:[%s3577 + $0x18] sm:$0xff]
    %v3582 = vrot.slane %v3340, 6
    %v3583 = vsel %vm2409, %v3582, 0
    %3585 = vmatprep.subr.mxu0 0.0
    %3586 = vmatpush1.msra.mxu0 0.0
    %3587 = vmatprep.subr.mxu0 0.0
    %3588 = vmatpush1.msra.mxu0 0.0
    %3589 = vmatprep.subr.mxu0 0.0
    %3590 = vmatpush1.msra.mxu0 0.0
    %3591 = vmatprep.subr.mxu0 0.0
    %3592 = vmatpush1.msra.mxu0 0.0
    %3593 = vmatprep.subr.mxu0 0.0
    %3594 = vmatpush1.msra.mxu0 0.0
    %3595 = vmatprep.subr.mxu0 0.0
    %3596 = vmatpush1.msra.mxu0 0.0
    %3597 = vmatprep.subr.mxu0 0.0
    %3598 = vmatpush1.msra.mxu0 0.0
    %3599 = vmatprep.subr.mxu0 0.0
    %3600 = vmatpush1.msra.mxu0 0.0
    %3601 = vmatprep.subr.mxu0 0.0
    %3602 = vmatpush1.msra.mxu0 0.0
    %3603 = vmatprep.subr.mxu0 0.0
    %3604 = vmatpush1.msra.mxu0 0.0
    %3605 = vmatprep.subr.mxu0 0.0
    %3606 = vmatpush1.msra.mxu0 0.0
    %3607 = vmatprep.subr.mxu0 0.0
    %3608 = vmatpush1.msra.mxu0 0.0
    %3609 = vmatprep.subr.mxu0 0.0
    %3610 = vmatpush1.msra.mxu0 %v3581
    %3611 = vmatprep.subr.mxu0 0.0
    %3612 = vmatpush1.msra.mxu0 %v3580
    %3613 = vmatprep.subr.mxu0 0.0
    %3614 = vmatpush1.msra.mxu0 %v3579
    %3615 = vmatprep.subr.mxu0 0.0
    %3616 = vmatpush1.msra.mxu0 %v3578
    %3617 = vmatprep.subr.mxu0 0.0
    %3618 = vmatpush2.msra.mxu0 0.0
    %3619 = vmatprep.subr.mxu0 0.0
    %3620 = vmatpush2.msra.mxu0 0.0
    %3621 = vmatprep.subr.mxu0 0.0
    %3622 = vmatpush2.msra.mxu0 0.0
    %3623 = vmatprep.subr.mxu0 0.0
    %3624 = vmatpush2.msra.mxu0 0.0
    %3625 = vmatprep.subr.mxu0 0.0
    %3626 = vmatpush2.msra.mxu0 0.0
    %3627 = vmatprep.subr.mxu0 0.0
    %3628 = vmatpush2.msra.mxu0 0.0
    %3629 = vmatprep.subr.mxu0 0.0
    %3630 = vmatpush2.msra.mxu0 0.0
    %3631 = vmatprep.subr.mxu0 0.0
    %3632 = vmatpush2.msra.mxu0 0.0
    %3633 = vmatprep.subr.mxu0 0.0
    %3634 = vmatpush2.msra.mxu0 0.0
    %3635 = vmatprep.subr.mxu0 0.0
    %3636 = vmatpush2.msra.mxu0 0.0
    %3637 = vmatprep.subr.mxu0 0.0
    %3638 = vmatpush2.msra.mxu0 0.0
    %3639 = vmatprep.subr.mxu0 0.0
    %3640 = vmatpush2.msra.mxu0 0.0
    %3641 = vmatprep.subr.mxu0 0.0
    %3642 = vmatpush2.msra.mxu0 0.0
    %3643 = vmatprep.subr.mxu0 0.0
    %3644 = vmatpush2.msra.mxu0 0.0
    %3645 = vmatprep.subr.mxu0 0.0
    %3646 = vmatpush2.msra.mxu0 0.0
    %3647 = vmatprep.subr.mxu0 0.0
    %3648 = vmatpush2.msra.mxu0 0.0
    %3649 = vmatprep.mubr.f32.mxu0 0.0
    %3650 = vmatmul.mubr.f32.gmra.mxu0 %v3583
    %v3651 = vpop.f32.mrf.mxu0
    %v3652 = vadd.f32 0.0, %v3651
    %v3653 = vpop.f32.mrf.mxu0
    %3654 = vdwg.mxu0
    %v3655 = vadd.f32 %v3576, %v3652
    %s3656 = scalar_lea.vmem %s6, 128
    %v3657 = vld [vmem:[%s3656] sm:$0xff]
    %v3658 = vld [vmem:[%s3656 + $0x8] sm:$0xff]
    %v3659 = vld [vmem:[%s3656 + $0x10] sm:$0xff]
    %v3660 = vld [vmem:[%s3656 + $0x18] sm:$0xff]
    %v3662 = vsel %vm2409, %v3341, 0
    %3664 = vmatprep.subr.mxu0 0.0
    %3665 = vmatpush1.msra.mxu0 0.0
    %3666 = vmatprep.subr.mxu0 0.0
    %3667 = vmatpush1.msra.mxu0 0.0
    %3668 = vmatprep.subr.mxu0 0.0
    %3669 = vmatpush1.msra.mxu0 0.0
    %3670 = vmatprep.subr.mxu0 0.0
    %3671 = vmatpush1.msra.mxu0 0.0
    %3672 = vmatprep.subr.mxu0 0.0
    %3673 = vmatpush1.msra.mxu0 0.0
    %3674 = vmatprep.subr.mxu0 0.0
    %3675 = vmatpush1.msra.mxu0 0.0
    %3676 = vmatprep.subr.mxu0 0.0
    %3677 = vmatpush1.msra.mxu0 0.0
    %3678 = vmatprep.subr.mxu0 0.0
    %3679 = vmatpush1.msra.mxu0 0.0
    %3680 = vmatprep.subr.mxu0 0.0
    %3681 = vmatpush1.msra.mxu0 0.0
    %3682 = vmatprep.subr.mxu0 0.0
    %3683 = vmatpush1.msra.mxu0 0.0
    %3684 = vmatprep.subr.mxu0 0.0
    %3685 = vmatpush1.msra.mxu0 0.0
    %3686 = vmatprep.subr.mxu0 0.0
    %3687 = vmatpush1.msra.mxu0 0.0
    %3688 = vmatprep.subr.mxu0 0.0
    %3689 = vmatpush1.msra.mxu0 %v3660
    %3690 = vmatprep.subr.mxu0 0.0
    %3691 = vmatpush1.msra.mxu0 %v3659
    %3692 = vmatprep.subr.mxu0 0.0
    %3693 = vmatpush1.msra.mxu0 %v3658
    %3694 = vmatprep.subr.mxu0 0.0
    %3695 = vmatpush1.msra.mxu0 %v3657
    %3696 = vmatprep.subr.mxu0 0.0
    %3697 = vmatpush2.msra.mxu0 0.0
    %3698 = vmatprep.subr.mxu0 0.0
    %3699 = vmatpush2.msra.mxu0 0.0
    %3700 = vmatprep.subr.mxu0 0.0
    %3701 = vmatpush2.msra.mxu0 0.0
    %3702 = vmatprep.subr.mxu0 0.0
    %3703 = vmatpush2.msra.mxu0 0.0
    %3704 = vmatprep.subr.mxu0 0.0
    %3705 = vmatpush2.msra.mxu0 0.0
    %3706 = vmatprep.subr.mxu0 0.0
    %3707 = vmatpush2.msra.mxu0 0.0
    %3708 = vmatprep.subr.mxu0 0.0
    %3709 = vmatpush2.msra.mxu0 0.0
    %3710 = vmatprep.subr.mxu0 0.0
    %3711 = vmatpush2.msra.mxu0 0.0
    %3712 = vmatprep.subr.mxu0 0.0
    %3713 = vmatpush2.msra.mxu0 0.0
    %3714 = vmatprep.subr.mxu0 0.0
    %3715 = vmatpush2.msra.mxu0 0.0
    %3716 = vmatprep.subr.mxu0 0.0
    %3717 = vmatpush2.msra.mxu0 0.0
    %3718 = vmatprep.subr.mxu0 0.0
    %3719 = vmatpush2.msra.mxu0 0.0
    %3720 = vmatprep.subr.mxu0 0.0
    %3721 = vmatpush2.msra.mxu0 0.0
    %3722 = vmatprep.subr.mxu0 0.0
    %3723 = vmatpush2.msra.mxu0 0.0
    %3724 = vmatprep.subr.mxu0 0.0
    %3725 = vmatpush2.msra.mxu0 0.0
    %3726 = vmatprep.subr.mxu0 0.0
    %3727 = vmatpush2.msra.mxu0 0.0
    %3728 = vmatprep.mubr.f32.mxu0 0.0
    %3729 = vmatmul.mubr.f32.gmra.mxu0 %v3662
    %v3730 = vpop.f32.mrf.mxu0
    %v3731 = vadd.f32 0.0, %v3730
    %v3732 = vpop.f32.mrf.mxu0
    %3733 = vdwg.mxu0
    %v3734 = vadd.f32 %v3655, %v3731
    %s3735 = scalar_lea.vmem %s6, 160
    %v3736 = vld [vmem:[%s3735] sm:$0xff]
    %v3737 = vld [vmem:[%s3735 + $0x8] sm:$0xff]
    %v3738 = vld [vmem:[%s3735 + $0x10] sm:$0xff]
    %v3739 = vld [vmem:[%s3735 + $0x18] sm:$0xff]
    %v3740 = vrot.slane %v3341, 2
    %v3741 = vsel %vm2409, %v3740, 0
    %3743 = vmatprep.subr.mxu0 0.0
    %3744 = vmatpush1.msra.mxu0 0.0
    %3745 = vmatprep.subr.mxu0 0.0
    %3746 = vmatpush1.msra.mxu0 0.0
    %3747 = vmatprep.subr.mxu0 0.0
    %3748 = vmatpush1.msra.mxu0 0.0
    %3749 = vmatprep.subr.mxu0 0.0
    %3750 = vmatpush1.msra.mxu0 0.0
    %3751 = vmatprep.subr.mxu0 0.0
    %3752 = vmatpush1.msra.mxu0 0.0
    %3753 = vmatprep.subr.mxu0 0.0
    %3754 = vmatpush1.msra.mxu0 0.0
    %3755 = vmatprep.subr.mxu0 0.0
    %3756 = vmatpush1.msra.mxu0 0.0
    %3757 = vmatprep.subr.mxu0 0.0
    %3758 = vmatpush1.msra.mxu0 0.0
    %3759 = vmatprep.subr.mxu0 0.0
    %3760 = vmatpush1.msra.mxu0 0.0
    %3761 = vmatprep.subr.mxu0 0.0
    %3762 = vmatpush1.msra.mxu0 0.0
    %3763 = vmatprep.subr.mxu0 0.0
    %3764 = vmatpush1.msra.mxu0 0.0
    %3765 = vmatprep.subr.mxu0 0.0
    %3766 = vmatpush1.msra.mxu0 0.0
    %3767 = vmatprep.subr.mxu0 0.0
    %3768 = vmatpush1.msra.mxu0 %v3739
    %3769 = vmatprep.subr.mxu0 0.0
    %3770 = vmatpush1.msra.mxu0 %v3738
    %3771 = vmatprep.subr.mxu0 0.0
    %3772 = vmatpush1.msra.mxu0 %v3737
    %3773 = vmatprep.subr.mxu0 0.0
    %3774 = vmatpush1.msra.mxu0 %v3736
    %3775 = vmatprep.subr.mxu0 0.0
    %3776 = vmatpush2.msra.mxu0 0.0
    %3777 = vmatprep.subr.mxu0 0.0
    %3778 = vmatpush2.msra.mxu0 0.0
    %3779 = vmatprep.subr.mxu0 0.0
    %3780 = vmatpush2.msra.mxu0 0.0
    %3781 = vmatprep.subr.mxu0 0.0
    %3782 = vmatpush2.msra.mxu0 0.0
    %3783 = vmatprep.subr.mxu0 0.0
    %3784 = vmatpush2.msra.mxu0 0.0
    %3785 = vmatprep.subr.mxu0 0.0
    %3786 = vmatpush2.msra.mxu0 0.0
    %3787 = vmatprep.subr.mxu0 0.0
    %3788 = vmatpush2.msra.mxu0 0.0
    %3789 = vmatprep.subr.mxu0 0.0
    %3790 = vmatpush2.msra.mxu0 0.0
    %3791 = vmatprep.subr.mxu0 0.0
    %3792 = vmatpush2.msra.mxu0 0.0
    %3793 = vmatprep.subr.mxu0 0.0
    %3794 = vmatpush2.msra.mxu0 0.0
    %3795 = vmatprep.subr.mxu0 0.0
    %3796 = vmatpush2.msra.mxu0 0.0
    %3797 = vmatprep.subr.mxu0 0.0
    %3798 = vmatpush2.msra.mxu0 0.0
    %3799 = vmatprep.subr.mxu0 0.0
    %3800 = vmatpush2.msra.mxu0 0.0
    %3801 = vmatprep.subr.mxu0 0.0
    %3802 = vmatpush2.msra.mxu0 0.0
    %3803 = vmatprep.subr.mxu0 0.0
    %3804 = vmatpush2.msra.mxu0 0.0
    %3805 = vmatprep.subr.mxu0 0.0
    %3806 = vmatpush2.msra.mxu0 0.0
    %3807 = vmatprep.mubr.f32.mxu0 0.0
    %3808 = vmatmul.mubr.f32.gmra.mxu0 %v3741
    %v3809 = vpop.f32.mrf.mxu0
    %v3810 = vadd.f32 0.0, %v3809
    %v3811 = vpop.f32.mrf.mxu0
    %3812 = vdwg.mxu0
    %v3813 = vadd.f32 %v3734, %v3810
    %s3814 = scalar_lea.vmem %s6, 192
    %v3815 = vld [vmem:[%s3814] sm:$0xff]
    %v3816 = vld [vmem:[%s3814 + $0x8] sm:$0xff]
    %v3817 = vld [vmem:[%s3814 + $0x10] sm:$0xff]
    %v3818 = vld [vmem:[%s3814 + $0x18] sm:$0xff]
    %v3819 = vrot.slane %v3341, 4
    %v3820 = vsel %vm2409, %v3819, 0
    %3822 = vmatprep.subr.mxu0 0.0
    %3823 = vmatpush1.msra.mxu0 0.0
    %3824 = vmatprep.subr.mxu0 0.0
    %3825 = vmatpush1.msra.mxu0 0.0
    %3826 = vmatprep.subr.mxu0 0.0
    %3827 = vmatpush1.msra.mxu0 0.0
    %3828 = vmatprep.subr.mxu0 0.0
    %3829 = vmatpush1.msra.mxu0 0.0
    %3830 = vmatprep.subr.mxu0 0.0
    %3831 = vmatpush1.msra.mxu0 0.0
    %3832 = vmatprep.subr.mxu0 0.0
    %3833 = vmatpush1.msra.mxu0 0.0
    %3834 = vmatprep.subr.mxu0 0.0
    %3835 = vmatpush1.msra.mxu0 0.0
    %3836 = vmatprep.subr.mxu0 0.0
    %3837 = vmatpush1.msra.mxu0 0.0
    %3838 = vmatprep.subr.mxu0 0.0
    %3839 = vmatpush1.msra.mxu0 0.0
    %3840 = vmatprep.subr.mxu0 0.0
    %3841 = vmatpush1.msra.mxu0 0.0
    %3842 = vmatprep.subr.mxu0 0.0
    %3843 = vmatpush1.msra.mxu0 0.0
    %3844 = vmatprep.subr.mxu0 0.0
    %3845 = vmatpush1.msra.mxu0 0.0
    %3846 = vmatprep.subr.mxu0 0.0
    %3847 = vmatpush1.msra.mxu0 %v3818
    %3848 = vmatprep.subr.mxu0 0.0
    %3849 = vmatpush1.msra.mxu0 %v3817
    %3850 = vmatprep.subr.mxu0 0.0
    %3851 = vmatpush1.msra.mxu0 %v3816
    %3852 = vmatprep.subr.mxu0 0.0
    %3853 = vmatpush1.msra.mxu0 %v3815
    %3854 = vmatprep.subr.mxu0 0.0
    %3855 = vmatpush2.msra.mxu0 0.0
    %3856 = vmatprep.subr.mxu0 0.0
    %3857 = vmatpush2.msra.mxu0 0.0
    %3858 = vmatprep.subr.mxu0 0.0
    %3859 = vmatpush2.msra.mxu0 0.0
    %3860 = vmatprep.subr.mxu0 0.0
    %3861 = vmatpush2.msra.mxu0 0.0
    %3862 = vmatprep.subr.mxu0 0.0
    %3863 = vmatpush2.msra.mxu0 0.0
    %3864 = vmatprep.subr.mxu0 0.0
    %3865 = vmatpush2.msra.mxu0 0.0
    %3866 = vmatprep.subr.mxu0 0.0
    %3867 = vmatpush2.msra.mxu0 0.0
    %3868 = vmatprep.subr.mxu0 0.0
    %3869 = vmatpush2.msra.mxu0 0.0
    %3870 = vmatprep.subr.mxu0 0.0
    %3871 = vmatpush2.msra.mxu0 0.0
    %3872 = vmatprep.subr.mxu0 0.0
    %3873 = vmatpush2.msra.mxu0 0.0
    %3874 = vmatprep.subr.mxu0 0.0
    %3875 = vmatpush2.msra.mxu0 0.0
    %3876 = vmatprep.subr.mxu0 0.0
    %3877 = vmatpush2.msra.mxu0 0.0
    %3878 = vmatprep.subr.mxu0 0.0
    %3879 = vmatpush2.msra.mxu0 0.0
    %3880 = vmatprep.subr.mxu0 0.0
    %3881 = vmatpush2.msra.mxu0 0.0
    %3882 = vmatprep.subr.mxu0 0.0
    %3883 = vmatpush2.msra.mxu0 0.0
    %3884 = vmatprep.subr.mxu0 0.0
    %3885 = vmatpush2.msra.mxu0 0.0
    %3886 = vmatprep.mubr.f32.mxu0 0.0
    %3887 = vmatmul.mubr.f32.gmra.mxu0 %v3820
    %v3888 = vpop.f32.mrf.mxu0
    %v3889 = vadd.f32 0.0, %v3888
    %v3890 = vpop.f32.mrf.mxu0
    %3891 = vdwg.mxu0
    %v3892 = vadd.f32 %v3813, %v3889
    %s3893 = scalar_lea.vmem %s6, 224
    %v3894 = vld [vmem:[%s3893] sm:$0xff]
    %v3895 = vld [vmem:[%s3893 + $0x8] sm:$0xff]
    %v3896 = vld [vmem:[%s3893 + $0x10] sm:$0xff]
    %v3897 = vld [vmem:[%s3893 + $0x18] sm:$0xff]
    %v3898 = vrot.slane %v3341, 6
    %v3899 = vsel %vm2409, %v3898, 0
    %3901 = vmatprep.subr.mxu0 0.0
    %3902 = vmatpush1.msra.mxu0 0.0
    %3903 = vmatprep.subr.mxu0 0.0
    %3904 = vmatpush1.msra.mxu0 0.0
    %3905 = vmatprep.subr.mxu0 0.0
    %3906 = vmatpush1.msra.mxu0 0.0
    %3907 = vmatprep.subr.mxu0 0.0
    %3908 = vmatpush1.msra.mxu0 0.0
    %3909 = vmatprep.subr.mxu0 0.0
    %3910 = vmatpush1.msra.mxu0 0.0
    %3911 = vmatprep.subr.mxu0 0.0
    %3912 = vmatpush1.msra.mxu0 0.0
    %3913 = vmatprep.subr.mxu0 0.0
    %3914 = vmatpush1.msra.mxu0 0.0
    %3915 = vmatprep.subr.mxu0 0.0
    %3916 = vmatpush1.msra.mxu0 0.0
    %3917 = vmatprep.subr.mxu0 0.0
    %3918 = vmatpush1.msra.mxu0 0.0
    %3919 = vmatprep.subr.mxu0 0.0
    %3920 = vmatpush1.msra.mxu0 0.0
    %3921 = vmatprep.subr.mxu0 0.0
    %3922 = vmatpush1.msra.mxu0 0.0
    %3923 = vmatprep.subr.mxu0 0.0
    %3924 = vmatpush1.msra.mxu0 0.0
    %3925 = vmatprep.subr.mxu0 0.0
    %3926 = vmatpush1.msra.mxu0 %v3897
    %3927 = vmatprep.subr.mxu0 0.0
    %3928 = vmatpush1.msra.mxu0 %v3896
    %3929 = vmatprep.subr.mxu0 0.0
    %3930 = vmatpush1.msra.mxu0 %v3895
    %3931 = vmatprep.subr.mxu0 0.0
    %3932 = vmatpush1.msra.mxu0 %v3894
    %3933 = vmatprep.subr.mxu0 0.0
    %3934 = vmatpush2.msra.mxu0 0.0
    %3935 = vmatprep.subr.mxu0 0.0
    %3936 = vmatpush2.msra.mxu0 0.0
    %3937 = vmatprep.subr.mxu0 0.0
    %3938 = vmatpush2.msra.mxu0 0.0
    %3939 = vmatprep.subr.mxu0 0.0
    %3940 = vmatpush2.msra.mxu0 0.0
    %3941 = vmatprep.subr.mxu0 0.0
    %3942 = vmatpush2.msra.mxu0 0.0
    %3943 = vmatprep.subr.mxu0 0.0
    %3944 = vmatpush2.msra.mxu0 0.0
    %3945 = vmatprep.subr.mxu0 0.0
    %3946 = vmatpush2.msra.mxu0 0.0
    %3947 = vmatprep.subr.mxu0 0.0
    %3948 = vmatpush2.msra.mxu0 0.0
    %3949 = vmatprep.subr.mxu0 0.0
    %3950 = vmatpush2.msra.mxu0 0.0
    %3951 = vmatprep.subr.mxu0 0.0
    %3952 = vmatpush2.msra.mxu0 0.0
    %3953 = vmatprep.subr.mxu0 0.0
    %3954 = vmatpush2.msra.mxu0 0.0
    %3955 = vmatprep.subr.mxu0 0.0
    %3956 = vmatpush2.msra.mxu0 0.0
    %3957 = vmatprep.subr.mxu0 0.0
    %3958 = vmatpush2.msra.mxu0 0.0
    %3959 = vmatprep.subr.mxu0 0.0
    %3960 = vmatpush2.msra.mxu0 0.0
    %3961 = vmatprep.subr.mxu0 0.0
    %3962 = vmatpush2.msra.mxu0 0.0
    %3963 = vmatprep.subr.mxu0 0.0
    %3964 = vmatpush2.msra.mxu0 0.0
    %3965 = vmatprep.mubr.f32.mxu0 0.0
    %3966 = vmatmul.mubr.f32.gmra.mxu0 %v3899
    %v3967 = vpop.f32.mrf.mxu0
    %v3968 = vadd.f32 0.0, %v3967
    %v3969 = vpop.f32.mrf.mxu0
    %3970 = vdwg.mxu0
    %v3971 = vadd.f32 %v3892, %v3968
    %s3972 = scalar_lea.vmem %s6, 256
    %v3973 = vld [vmem:[%s3972] sm:$0xff]
    %v3974 = vld [vmem:[%s3972 + $0x8] sm:$0xff]
    %v3975 = vld [vmem:[%s3972 + $0x10] sm:$0xff]
    %v3976 = vld [vmem:[%s3972 + $0x18] sm:$0xff]
    %v3978 = vsel %vm2409, %v3342, 0
    %3980 = vmatprep.subr.mxu0 0.0
    %3981 = vmatpush1.msra.mxu0 0.0
    %3982 = vmatprep.subr.mxu0 0.0
    %3983 = vmatpush1.msra.mxu0 0.0
    %3984 = vmatprep.subr.mxu0 0.0
    %3985 = vmatpush1.msra.mxu0 0.0
    %3986 = vmatprep.subr.mxu0 0.0
    %3987 = vmatpush1.msra.mxu0 0.0
    %3988 = vmatprep.subr.mxu0 0.0
    %3989 = vmatpush1.msra.mxu0 0.0
    %3990 = vmatprep.subr.mxu0 0.0
    %3991 = vmatpush1.msra.mxu0 0.0
    %3992 = vmatprep.subr.mxu0 0.0
    %3993 = vmatpush1.msra.mxu0 0.0
    %3994 = vmatprep.subr.mxu0 0.0
    %3995 = vmatpush1.msra.mxu0 0.0
    %3996 = vmatprep.subr.mxu0 0.0
    %3997 = vmatpush1.msra.mxu0 0.0
    %3998 = vmatprep.subr.mxu0 0.0
    %3999 = vmatpush1.msra.mxu0 0.0
    %4000 = vmatprep.subr.mxu0 0.0
    %4001 = vmatpush1.msra.mxu0 0.0
    %4002 = vmatprep.subr.mxu0 0.0
    %4003 = vmatpush1.msra.mxu0 0.0
    %4004 = vmatprep.subr.mxu0 0.0
    %4005 = vmatpush1.msra.mxu0 %v3976
    %4006 = vmatprep.subr.mxu0 0.0
    %4007 = vmatpush1.msra.mxu0 %v3975
    %4008 = vmatprep.subr.mxu0 0.0
    %4009 = vmatpush1.msra.mxu0 %v3974
    %4010 = vmatprep.subr.mxu0 0.0
    %4011 = vmatpush1.msra.mxu0 %v3973
    %4012 = vmatprep.subr.mxu0 0.0
    %4013 = vmatpush2.msra.mxu0 0.0
    %4014 = vmatprep.subr.mxu0 0.0
    %4015 = vmatpush2.msra.mxu0 0.0
    %4016 = vmatprep.subr.mxu0 0.0
    %4017 = vmatpush2.msra.mxu0 0.0
    %4018 = vmatprep.subr.mxu0 0.0
    %4019 = vmatpush2.msra.mxu0 0.0
    %4020 = vmatprep.subr.mxu0 0.0
    %4021 = vmatpush2.msra.mxu0 0.0
    %4022 = vmatprep.subr.mxu0 0.0
    %4023 = vmatpush2.msra.mxu0 0.0
    %4024 = vmatprep.subr.mxu0 0.0
    %4025 = vmatpush2.msra.mxu0 0.0
    %4026 = vmatprep.subr.mxu0 0.0
    %4027 = vmatpush2.msra.mxu0 0.0
    %4028 = vmatprep.subr.mxu0 0.0
    %4029 = vmatpush2.msra.mxu0 0.0
    %4030 = vmatprep.subr.mxu0 0.0
    %4031 = vmatpush2.msra.mxu0 0.0
    %4032 = vmatprep.subr.mxu0 0.0
    %4033 = vmatpush2.msra.mxu0 0.0
    %4034 = vmatprep.subr.mxu0 0.0
    %4035 = vmatpush2.msra.mxu0 0.0
    %4036 = vmatprep.subr.mxu0 0.0
    %4037 = vmatpush2.msra.mxu0 0.0
    %4038 = vmatprep.subr.mxu0 0.0
    %4039 = vmatpush2.msra.mxu0 0.0
    %4040 = vmatprep.subr.mxu0 0.0
    %4041 = vmatpush2.msra.mxu0 0.0
    %4042 = vmatprep.subr.mxu0 0.0
    %4043 = vmatpush2.msra.mxu0 0.0
    %4044 = vmatprep.mubr.f32.mxu0 0.0
    %4045 = vmatmul.mubr.f32.gmra.mxu0 %v3978
    %v4046 = vpop.f32.mrf.mxu0
    %v4047 = vadd.f32 0.0, %v4046
    %v4048 = vpop.f32.mrf.mxu0
    %4049 = vdwg.mxu0
    %v4050 = vadd.f32 %v3971, %v4047
    %v4051 = vld [vmem:[%s7] sm:$0x1]
    %v4053 = vlaneseq
    %v4054 = vshrl.u32 %v4053, 7
    %v4055 = vsub.s32 0, %v4054
    %v4056 = vrot.slane %v4051, %v4055
    %v4058 = vadd.f32 %v4050, %v4056
    %vm4059 = vcmask 254976
    %v4060 = vsel %vm4059, %v4058, 0.0
    %4061 = vadd.xlane.f32.xlu0 %v4060
    %v4062 = vpop.xlane.xlu0 %4061
    %v4063 = vrcp.pop 32.0
    %v4064 = vmul.f32 %v4062, %v4063
    %v4065 = vsub.f32 %v4058, %v4064
    %v4066 = vmul.f32 %v4065, %v4065
    %v4067 = vsel %vm4059, %v4066, 0.0
    %4068 = vadd.xlane.f32.xlu0 %v4067
    %v4069 = vpop.xlane.xlu0 %4068
    %v4070 = vmul.f32 %v4069, %v4063
    %v4071 = vadd.f32 %v4070, 1e-05
    %v4072 = vrsqrt.pop %v4071
    %v4073 = vmul.f32 %v4065, %v4072
    %v4074 = vld [vmem:[%s8] sm:$0x1]
    %v4076 = vlaneseq
    %v4077 = vshrl.u32 %v4076, 7
    %v4078 = vsub.s32 0, %v4077
    %v4079 = vrot.slane %v4074, %v4078
    %v4081 = vmul.f32 %v4073, %v4079
    %v4082 = vld [vmem:[%s9] sm:$0x1]
    %v4084 = vlaneseq
    %v4085 = vshrl.u32 %v4084, 7
    %v4086 = vsub.s32 0, %v4085
    %v4087 = vrot.slane %v4082, %v4086
    %v4089 = vadd.f32 %v4081, %v4087
    %v4090 = vtanh.pop %v4089
    %4091 = vst.msk [vmem:[#allocation2] sm:$0x3] %vm4059, %v4090
    // Predicated region
    $region42: #{encoder_forward.1} parent=1 // pred_check
      _
    $region43: #{encoder_forward.1} parent=1 // pred_check_branch
      %4093 = sbr.rel (0) target = $region45
    $region44: #{encoder_forward.1} parent=1 // pred_region
      %s4095 = ssub.s32 32, 32
      %4096 = vsyncadd [#allocation3], %s4095
      %s4098 = sshll.u32 [#allocation2], 4
      %s4099 = int_to_ptr.vmem [resolvable:$true] %s4098
      %4101 = dma.vmem_to_hbm [thread:$0]  %s4099, 32, %s10, [#allocation3]
    $region45: #{encoder_forward.1} parent=1 // pred_fallthru
      _
    // Predicated region
    $region46: #{encoder_forward.1} parent=1 // pred_check
      _
    $region47: #{encoder_forward.1} parent=1 // pred_check_branch
      %4103 = sbr.rel (0) target = $region49
    $region48: #{encoder_forward.1} parent=1 // pred_region
      %4104 = dma.done [#allocation3], 32
    $region49: #{encoder_forward.1} parent=1 // pred_fallthru
      _
    %4105 = vsyncpa [#allocation3], 1

</llo_original>
